<compile_context>
chip_gen: v7x
topology: tpu7x:2x2x1
jax: 0.10.0
libtpu: 0.0.40
codegen_flags: <defaults>
</compile_context>

<pallas_src>
import jax
import jax.numpy as jnp
from jax.experimental import pallas as pl
from jax.experimental.pallas import tpu as pltpu


# ------------------------------- helpers -------------------------------------
def _round_up(x, m):
    return ((x + m - 1) // m) * m


def _pack_weight(w_hwio, kp, np_):
    # (3, 3, Cin, Cout) -> (9, kp, np_) bf16, zero-padded, tap-major (t = dh*3+dw).
    ci, co = w_hwio.shape[2], w_hwio.shape[3]
    wp = jnp.zeros((9, kp, np_), jnp.float32)
    wp = wp.at[:, :ci, :co].set(w_hwio.reshape(9, ci, co).astype(jnp.float32))
    return wp.astype(jnp.bfloat16)


def _pack_vec(v, cp):
    # (C,) -> (1, cp) f32, zero padded (padded output channels stay exactly 0).
    return jnp.zeros((1, cp), jnp.float32).at[0, : v.shape[0]].set(
        v.astype(jnp.float32))


def _estimate_vmem_bytes(TH, W2, C_in, Cin_p, Cmid_p, Cout_p):
    """Rough per-grid-step VMEM footprint (double-buffered blocks + scratch + temps)."""
    Wp = W2 + 2
    bf16 = 2
    x_blk = 2 * 4 * (TH + 4) * W2 * C_in * bf16                  # main + halo inputs
    w_blk = 2 * 9 * (Cin_p * Cmid_p + Cmid_p * Cout_p) * bf16    # both conv weights
    s_blk = 2 * 4 * 2 * (Cmid_p + Cout_p)                        # scales / shifts (f32)
    o_blk = 2 * TH * W2 * Cout_p * bf16                          # bf16 output block
    scratch = ((TH + 4) * Wp * Cin_p + (TH + 2) * Wp * Cmid_p) * bf16
    temps = 8 * ((TH + 2) * W2 * Cmid_p + TH * W2 * Cout_p) \
        + bf16 * (TH + 2) * W2 * (Cin_p + Cmid_p)                # f32 acc/epilogue + tap copies
    return x_blk + w_blk + s_blk + o_blk + scratch + temps


def _pick_tile_h(H2, W2, C_in, Cin_p, Cmid_p, Cout_p, budget_bytes=12 << 20):
    """Largest even row tile dividing H2 whose footprint fits a modest VMEM budget."""
    cands = sorted({d for d in range(2, H2 + 1, 2) if H2 % d == 0} | {H2})
    for th in reversed(cands):
        if _estimate_vmem_bytes(th, W2, C_in, Cin_p, Cmid_p, Cout_p) <= budget_bytes:
            return th
    return cands[0]


# ------------------------------ fused kernel ---------------------------------
def _conv3x3(src_ref, w_ref, out_rows, out_cols, k_ch):
    """3x3 conv as 9 accumulating (out_rows*out_cols, k_ch) @ (k_ch, n) bf16 MXU
    matmuls over a zero-halo VMEM buffer src_ref of shape (out_rows+2, out_cols+2, k_ch)."""
    acc = None
    for t in range(9):
        dh, dw = divmod(t, 3)
        patch = src_ref[pl.ds(dh, out_rows), pl.ds(dw, out_cols), :]
        patch = patch.reshape(out_rows * out_cols, k_ch)
        part = jnp.dot(patch, w_ref[t], preferred_element_type=jnp.float32)
        acc = part if acc is None else acc + part
    return acc  # f32


def _down_fused_kernel(xm_ref, xa_ref, xb_ref, w1_ref, s1_ref, b1_ref,
                       w2_ref, s2_ref, b2_ref, o_ref, p1_ref, p2_ref):
    # xm_ref : (1, 4, TH, W2, Cin)  bf16  2x2-window-decomposed rows of this tile
    # xa_ref : (1, 4, 2,  W2, Cin)  bf16  2 pooled rows above the tile (clamped at t=0)
    # xb_ref : (1, 4, 2,  W2, Cin)  bf16  2 pooled rows below the tile (clamped at last)
    # w*_ref : (9, K, N)            bf16  conv weights, tap-major (dh*3+dw)
    # s*/b*  : (1, N)               f32   folded eval-mode BatchNorm scale/shift
    # o_ref  : (1, TH, W2, Cout_p)  bf16  output rows of this tile
    # p1_ref : (TH+4, W2+2, Cin_p)  bf16  pooled rows + halo (conv1 source)
    # p2_ref : (TH+2, W2+2, Cmid_p) bf16  conv1 activation + halo (conv2 source)
    t = pl.program_id(1)
    n_tiles = pl.num_programs(1)
    _, _, TH, W2, Cin = xm_ref.shape
    Cin_p = p1_ref.shape[-1]
    Cmid_p = p2_ref.shape[-1]
    Cout_p = o_ref.shape[-1]

    # ---- MaxPool2d(2): elementwise max over the four window taps (VPU) ----
    def pool(x4):  # (4, R, W2, Cin) -> (R, W2, Cin)
        return jnp.maximum(jnp.maximum(x4[0], x4[1]), jnp.maximum(x4[2], x4[3]))

    pooled_mid = pool(xm_ref[0])                              # (TH, W2, Cin)
    # Halo rows: real data for interior tiles, zeros at the image top/bottom
    # (these zeros double as conv1's spatial padding).  Multiplicative mask so
    # no per-core init state is needed (megacore-safe).
    above_keep = (t > 0).astype(pooled_mid.dtype)
    below_keep = (t < n_tiles - 1).astype(pooled_mid.dtype)
    pooled_top = pool(xa_ref[0]) * above_keep                 # (2, W2, Cin)
    pooled_bot = pool(xb_ref[0]) * below_keep                 # (2, W2, Cin)

    pooled = jnp.concatenate([pooled_top, pooled_mid, pooled_bot], axis=0)
    if Cin_p > Cin:                                           # lane pad done in VMEM, not HBM
        pooled = jnp.concatenate(
            [pooled, jnp.zeros((TH + 4, W2, Cin_p - Cin), pooled.dtype)], axis=-1)

    # ---- conv1 source: only the 1-wide W halo strips are zeroed; interior is
    #      fully overwritten by the pooled store (no full-buffer memset). ----
    zc1 = jnp.zeros((TH + 4, 1, Cin_p), p1_ref.dtype)
    p1_ref[:, pl.ds(0, 1), :] = zc1
    p1_ref[:, pl.ds(W2 + 1, 1), :] = zc1
    p1_ref[:, pl.ds(1, W2), :] = pooled.astype(p1_ref.dtype)

    # ---- conv1 (3x3, pad=1) -> BN -> ReLU over TH+2 rows (1 halo row each side
    #      is recomputed so conv2 never needs a neighbouring tile's result). ----
    acc1 = _conv3x3(p1_ref, w1_ref, TH + 2, W2, Cin_p)
    y1 = jnp.maximum(acc1 * s1_ref[...] + b1_ref[...], 0.0)   # f32 epilogue

    zc2 = jnp.zeros((TH + 2, 1, Cmid_p), p2_ref.dtype)
    p2_ref[:, pl.ds(0, 1), :] = zc2
    p2_ref[:, pl.ds(W2 + 1, 1), :] = zc2
    p2_ref[:, pl.ds(1, W2), :] = y1.astype(p2_ref.dtype).reshape(TH + 2, W2, Cmid_p)

    # Rows that correspond to conv2's spatial zero padding at the image edges.
    @pl.when(t == 0)
    def _():
        p2_ref[pl.ds(0, 1), :, :] = jnp.zeros((1, W2 + 2, Cmid_p), p2_ref.dtype)

    @pl.when(t == n_tiles - 1)
    def _():
        p2_ref[pl.ds(TH + 1, 1), :, :] = jnp.zeros((1, W2 + 2, Cmid_p), p2_ref.dtype)

    # ---- conv2 (3x3, pad=1) -> BN -> ReLU ----
    acc2 = _conv3x3(p2_ref, w2_ref, TH, W2, Cmid_p)
    y2 = jnp.maximum(acc2 * s2_ref[...] + b2_ref[...], 0.0)
    o_ref[0] = y2.astype(o_ref.dtype).reshape(TH, W2, Cout_p)


# ------------------------------- Down module ----------------------------------
def init_down_params(key, in_channels, out_channels, mid_channels=None, eps=1e-5):
    if mid_channels is None:
        mid_channels = out_channels
    k1, k2 = jax.random.split(key)
    # Conv weights in HWIO (3, 3, Cin, Cout); deterministic synthetic init.
    w1 = 0.1 * jax.random.normal(k1, (3, 3, in_channels, mid_channels), jnp.float32)
    w2 = 0.1 * jax.random.normal(k2, (3, 3, mid_channels, out_channels), jnp.float32)

    def bn_fold(c):
        # PyTorch BatchNorm2d init: weight=1, bias=0, running_mean=0, running_var=1.
        gamma = jnp.ones((c,), jnp.float32)
        beta = jnp.zeros((c,), jnp.float32)
        mean = jnp.zeros((c,), jnp.float32)
        var = jnp.ones((c,), jnp.float32)
        scale = gamma / jnp.sqrt(var + eps)
        shift = beta - mean * scale
        return scale, shift

    s1, b1 = bn_fold(mid_channels)
    s2, b2 = bn_fold(out_channels)
    return {"w1": w1, "scale1": s1, "shift1": b1,
            "w2": w2, "scale2": s2, "shift2": b2}


def down_forward(x_nchw, params, *, tile_h=None):
    """Down.forward: MaxPool2d(2) -> (Conv3x3 -> BN(eval) -> ReLU) x 2.  Returns bf16 NCHW."""
    w1, w2 = params["w1"], params["w2"]
    N, C_in, H, W = x_nchw.shape
    C_mid, C_out = w1.shape[3], w2.shape[3]
    H2, W2 = H // 2, W // 2
    assert H2 >= 2 and W2 >= 1, "input too small for MaxPool2d(2) + 3x3 convs"

    Cin_p = _round_up(C_in, 128)    # per-tensor channel padding (K for conv1)
    Cmid_p = _round_up(C_mid, 128)  # N for conv1 / K for conv2
    Cout_p = _round_up(C_out, 128)  # N for conv2

    if tile_h is None:
        TH = _pick_tile_h(H2, W2, C_in, Cin_p, Cmid_p, Cout_p)
    else:
        TH = int(tile_h)
    assert H2 % TH == 0, "tile_h must divide the pooled height"
    assert TH % 2 == 0 or TH == H2, "tile_h must be even (or the full pooled height)"
    n_tiles = H2 // TH

    # One layout pass: NCHW -> (N, 4 pooling taps, H2, W2, C_in) bf16.
    # No channel padding in HBM (the kernel pads lanes inside VMEM).
    x = x_nchw[:, :, : 2 * H2, : 2 * W2].astype(jnp.bfloat16)  # floor odd H/W (MaxPool2d(2))
    x = jnp.transpose(x, (0, 2, 3, 1))                         # channels-last
    x = x.reshape(N, H2, 2, W2, 2, C_in)
    x = jnp.transpose(x, (0, 2, 4, 1, 3, 5)).reshape(N, 4, H2, W2, C_in)

    w1p = _pack_weight(w1, Cin_p, Cmid_p)
    w2p = _pack_weight(w2, Cmid_p, Cout_p)
    s1p, b1p = _pack_vec(params["scale1"], Cmid_p), _pack_vec(params["shift1"], Cmid_p)
    s2p, b2p = _pack_vec(params["scale2"], Cout_p), _pack_vec(params["shift2"], Cout_p)

    # Halo BlockSpecs: 2 pooled rows above / below the tile, block indices clamped
    # so no out-of-bounds DMA ever happens; boundary content is zeroed in-kernel.
    hb = TH // 2
    last_halo_blk = max((H2 - 2) // 2, 0)

    def main_map(n, t):
        return (n, 0, t, 0, 0)

    def above_map(n, t):
        return (n, 0, jnp.maximum(t * hb - 1, 0), 0, 0)

    def below_map(n, t):
        return (n, 0, jnp.minimum(t * hb + hb, last_halo_blk), 0, 0)

    fp = _estimate_vmem_bytes(TH, W2, C_in, Cin_p, Cmid_p, Cout_p)
    vmem_limit = int(min(max(2 * fp, 32 << 20), 64 << 20))     # headroom, <= v7x physical

    out = pl.pallas_call(
        _down_fused_kernel,
        out_shape=jax.ShapeDtypeStruct((N, H2, W2, Cout_p), jnp.bfloat16),
        grid=(N, n_tiles),
        in_specs=[
            pl.BlockSpec((1, 4, TH, W2, C_in), main_map),
            pl.BlockSpec((1, 4, 2, W2, C_in), above_map),
            pl.BlockSpec((1, 4, 2, W2, C_in), below_map),
            pl.BlockSpec((9, Cin_p, Cmid_p), lambda n, t: (0, 0, 0)),
            pl.BlockSpec((1, Cmid_p), lambda n, t: (0, 0)),
            pl.BlockSpec((1, Cmid_p), lambda n, t: (0, 0)),
            pl.BlockSpec((9, Cmid_p, Cout_p), lambda n, t: (0, 0, 0)),
            pl.BlockSpec((1, Cout_p), lambda n, t: (0, 0)),
            pl.BlockSpec((1, Cout_p), lambda n, t: (0, 0)),
        ],
        out_specs=pl.BlockSpec((1, TH, W2, Cout_p), lambda n, t: (n, t, 0, 0)),
        scratch_shapes=[
            pltpu.VMEM((TH + 4, W2 + 2, Cin_p), jnp.bfloat16),   # pooled rows + halo
            pltpu.VMEM((TH + 2, W2 + 2, Cmid_p), jnp.bfloat16),  # conv1 act + halo
        ],
        compiler_params=pltpu.CompilerParams(
            dimension_semantics=("parallel", "parallel"),
            vmem_limit_bytes=vmem_limit),
    )(x, x, x, w1p, s1p, b1p, w2p, s2p, b2p)

    y = out[..., :C_out]                       # drop channel padding: (N, H2, W2, C_out)
    # TODO(synk): keep channels-last here if the surrounding model allows it.
    return jnp.transpose(y, (0, 3, 1, 2))      # NCHW, bf16


# ------------------------------ pure-JAX reference ----------------------------
def reference_down(x_nchw, params):
    x = jax.lax.reduce_window(x_nchw, -jnp.inf, jax.lax.max,
                              (1, 1, 2, 2), (1, 1, 2, 2), "VALID")

    def block(x, w, s, b):
        y = jax.lax.conv_general_dilated(
            x, w, window_strides=(1, 1), padding="SAME",
            dimension_numbers=("NCHW", "HWIO", "NCHW"))
        y = y * s[None, :, None, None] + b[None, :, None, None]
        return jnp.maximum(y, 0.0)

    x = block(x, params["w1"], params["scale1"], params["shift1"])
    x = block(x, params["w2"], params["scale2"], params["shift2"])
    return x


if __name__ == "__main__":
    key = jax.random.PRNGKey(0)
    kx, kp = jax.random.split(key)

    N, C_in, H, W = 2, 4, 16, 16
    C_out = 8

    x = jax.random.normal(kx, (N, C_in, H, W), jnp.float32)
    params = init_down_params(kp, C_in, C_out)

    y_ref = jax.block_until_ready(reference_down(x, params))

    fwd = jax.jit(down_forward, static_argnames=("tile_h",))
    # tile_h=None -> auto (single row tile here); tile_h=4 -> two row tiles,
    # exercising the halo / boundary-zeroing paths.
    for th in (None, 4):
        y = jax.block_until_ready(fwd(x, params, tile_h=th))
        assert y.shape == (N, C_out, H // 2, W // 2), y.shape
        yf = y.astype(jnp.float32)
        assert bool(jnp.all(jnp.isfinite(yf)))
        assert bool(jnp.all(yf >= 0.0))  # final ReLU
        # bf16 matmul inputs + bf16 output -> loose tolerance vs f32 XLA reference.
        err = float(jnp.max(jnp.abs(yf - y_ref)))
        assert err < 5e-2, f"tile_h={th}: max abs error {err}"

    print("KERNEL_OK")
</pallas_src>

<mosaic_0001>
module attributes {stable_mosaic.version = 11 : i64} {
  func.func @_down_fused_kernel(%arg0: i32, %arg1: i32, %arg2: memref<1x4x8x8x4xbf16, #tpu.memory_space<vmem>>, %arg3: memref<1x4x2x8x4xbf16, #tpu.memory_space<vmem>>, %arg4: memref<1x4x2x8x4xbf16, #tpu.memory_space<vmem>>, %arg5: memref<9x128x128xbf16, #tpu.memory_space<vmem>>, %arg6: memref<1x128xf32, #tpu.memory_space<vmem>>, %arg7: memref<1x128xf32, #tpu.memory_space<vmem>>, %arg8: memref<9x128x128xbf16, #tpu.memory_space<vmem>>, %arg9: memref<1x128xf32, #tpu.memory_space<vmem>>, %arg10: memref<1x128xf32, #tpu.memory_space<vmem>>, %arg11: memref<1x8x8x128xbf16, #tpu.memory_space<vmem>>, %arg12: memref<12x10x128xbf16, #tpu.memory_space<vmem>>, %arg13: memref<10x10x128xbf16, #tpu.memory_space<vmem>>) attributes {dimension_semantics = [#tpu.dimension_semantics<parallel>, #tpu.dimension_semantics<parallel>], iteration_bounds = array<i64: 2, 1>, scalar_prefetch = 0 : i64, scratch_operands = 2 : i64, tpu.core_type = #tpu.core_type<tc>, window_params = [{transform_indices = @transform_0, window_bounds = array<i64: 1, 4, 8, 8, 4>}, {transform_indices = @transform_1, window_bounds = array<i64: 1, 4, 2, 8, 4>}, {transform_indices = @transform_2, window_bounds = array<i64: 1, 4, 2, 8, 4>}, {pipeline_mode = #tpu.pipeline_mode<synchronous>, transform_indices = @transform_3, window_bounds = array<i64: 9, 128, 128>}, {pipeline_mode = #tpu.pipeline_mode<synchronous>, transform_indices = @transform_4, window_bounds = array<i64: 1, 128>}, {pipeline_mode = #tpu.pipeline_mode<synchronous>, transform_indices = @transform_5, window_bounds = array<i64: 1, 128>}, {pipeline_mode = #tpu.pipeline_mode<synchronous>, transform_indices = @transform_6, window_bounds = array<i64: 9, 128, 128>}, {pipeline_mode = #tpu.pipeline_mode<synchronous>, transform_indices = @transform_7, window_bounds = array<i64: 1, 128>}, {pipeline_mode = #tpu.pipeline_mode<synchronous>, transform_indices = @transform_8, window_bounds = array<i64: 1, 128>}, {transform_indices = @transform_9, window_bounds = array<i64: 1, 8, 8, 128>}]} {
    %c0 = arith.constant 0 : index
    %c0_0 = arith.constant 0 : index
    %c0_1 = arith.constant 0 : index
    %c0_2 = arith.constant 0 : index
    %c0_3 = arith.constant 0 : index
    %0 = vector.load %arg2[%c0, %c0_0, %c0_1, %c0_2, %c0_3] : memref<1x4x8x8x4xbf16, #tpu.memory_space<vmem>>, vector<1x4x8x8x4xbf16>
    %1 = vector.shape_cast %0 : vector<1x4x8x8x4xbf16> to vector<4x8x8x4xbf16>
    %2 = vector.extract_strided_slice %1 {offsets = [0, 0, 0, 0], sizes = [1, 8, 8, 4], strides = [1, 1, 1, 1]} : vector<4x8x8x4xbf16> to vector<1x8x8x4xbf16>
    %3 = vector.shape_cast %2 : vector<1x8x8x4xbf16> to vector<8x8x4xbf16>
    %4 = vector.extract_strided_slice %1 {offsets = [1, 0, 0, 0], sizes = [1, 8, 8, 4], strides = [1, 1, 1, 1]} : vector<4x8x8x4xbf16> to vector<1x8x8x4xbf16>
    %5 = vector.shape_cast %4 : vector<1x8x8x4xbf16> to vector<8x8x4xbf16>
    %6 = arith.maximumf %3, %5 : vector<8x8x4xbf16>
    %7 = vector.extract_strided_slice %1 {offsets = [2, 0, 0, 0], sizes = [1, 8, 8, 4], strides = [1, 1, 1, 1]} : vector<4x8x8x4xbf16> to vector<1x8x8x4xbf16>
    %8 = vector.shape_cast %7 : vector<1x8x8x4xbf16> to vector<8x8x4xbf16>
    %9 = vector.extract_strided_slice %1 {offsets = [3, 0, 0, 0], sizes = [1, 8, 8, 4], strides = [1, 1, 1, 1]} : vector<4x8x8x4xbf16> to vector<1x8x8x4xbf16>
    %10 = vector.shape_cast %9 : vector<1x8x8x4xbf16> to vector<8x8x4xbf16>
    %11 = arith.maximumf %8, %10 : vector<8x8x4xbf16>
    %12 = arith.maximumf %6, %11 : vector<8x8x4xbf16>
    %c0_i32 = arith.constant 0 : i32
    %13 = arith.cmpi sgt, %arg1, %c0_i32 : i32
    %14 = arith.extui %13 : i1 to i32
    %15 = arith.sitofp %14 : i32 to f32
    %16 = arith.truncf %15 : f32 to bf16
    %c0_i32_4 = arith.constant 0 : i32
    %17 = arith.cmpi slt, %arg1, %c0_i32_4 : i32
    %18 = arith.extui %17 : i1 to i32
    %19 = arith.sitofp %18 : i32 to f32
    %20 = arith.truncf %19 : f32 to bf16
    %c0_5 = arith.constant 0 : index
    %c0_6 = arith.constant 0 : index
    %c0_7 = arith.constant 0 : index
    %c0_8 = arith.constant 0 : index
    %c0_9 = arith.constant 0 : index
    %21 = vector.load %arg3[%c0_5, %c0_6, %c0_7, %c0_8, %c0_9] : memref<1x4x2x8x4xbf16, #tpu.memory_space<vmem>>, vector<1x4x2x8x4xbf16>
    %22 = vector.shape_cast %21 : vector<1x4x2x8x4xbf16> to vector<4x2x8x4xbf16>
    %23 = vector.extract_strided_slice %22 {offsets = [0, 0, 0, 0], sizes = [1, 2, 8, 4], strides = [1, 1, 1, 1]} : vector<4x2x8x4xbf16> to vector<1x2x8x4xbf16>
    %24 = vector.shape_cast %23 : vector<1x2x8x4xbf16> to vector<2x8x4xbf16>
    %25 = vector.extract_strided_slice %22 {offsets = [1, 0, 0, 0], sizes = [1, 2, 8, 4], strides = [1, 1, 1, 1]} : vector<4x2x8x4xbf16> to vector<1x2x8x4xbf16>
    %26 = vector.shape_cast %25 : vector<1x2x8x4xbf16> to vector<2x8x4xbf16>
    %27 = arith.maximumf %24, %26 : vector<2x8x4xbf16>
    %28 = vector.extract_strided_slice %22 {offsets = [2, 0, 0, 0], sizes = [1, 2, 8, 4], strides = [1, 1, 1, 1]} : vector<4x2x8x4xbf16> to vector<1x2x8x4xbf16>
    %29 = vector.shape_cast %28 : vector<1x2x8x4xbf16> to vector<2x8x4xbf16>
    %30 = vector.extract_strided_slice %22 {offsets = [3, 0, 0, 0], sizes = [1, 2, 8, 4], strides = [1, 1, 1, 1]} : vector<4x2x8x4xbf16> to vector<1x2x8x4xbf16>
    %31 = vector.shape_cast %30 : vector<1x2x8x4xbf16> to vector<2x8x4xbf16>
    %32 = arith.maximumf %29, %31 : vector<2x8x4xbf16>
    %33 = arith.maximumf %27, %32 : vector<2x8x4xbf16>
    %34 = vector.broadcast %16 : bf16 to vector<2x8x4xbf16>
    %35 = arith.mulf %33, %34 : vector<2x8x4xbf16>
    %c0_10 = arith.constant 0 : index
    %c0_11 = arith.constant 0 : index
    %c0_12 = arith.constant 0 : index
    %c0_13 = arith.constant 0 : index
    %c0_14 = arith.constant 0 : index
    %36 = vector.load %arg4[%c0_10, %c0_11, %c0_12, %c0_13, %c0_14] : memref<1x4x2x8x4xbf16, #tpu.memory_space<vmem>>, vector<1x4x2x8x4xbf16>
    %37 = vector.shape_cast %36 : vector<1x4x2x8x4xbf16> to vector<4x2x8x4xbf16>
    %38 = vector.extract_strided_slice %37 {offsets = [0, 0, 0, 0], sizes = [1, 2, 8, 4], strides = [1, 1, 1, 1]} : vector<4x2x8x4xbf16> to vector<1x2x8x4xbf16>
    %39 = vector.shape_cast %38 : vector<1x2x8x4xbf16> to vector<2x8x4xbf16>
    %40 = vector.extract_strided_slice %37 {offsets = [1, 0, 0, 0], sizes = [1, 2, 8, 4], strides = [1, 1, 1, 1]} : vector<4x2x8x4xbf16> to vector<1x2x8x4xbf16>
    %41 = vector.shape_cast %40 : vector<1x2x8x4xbf16> to vector<2x8x4xbf16>
    %42 = arith.maximumf %39, %41 : vector<2x8x4xbf16>
    %43 = vector.extract_strided_slice %37 {offsets = [2, 0, 0, 0], sizes = [1, 2, 8, 4], strides = [1, 1, 1, 1]} : vector<4x2x8x4xbf16> to vector<1x2x8x4xbf16>
    %44 = vector.shape_cast %43 : vector<1x2x8x4xbf16> to vector<2x8x4xbf16>
    %45 = vector.extract_strided_slice %37 {offsets = [3, 0, 0, 0], sizes = [1, 2, 8, 4], strides = [1, 1, 1, 1]} : vector<4x2x8x4xbf16> to vector<1x2x8x4xbf16>
    %46 = vector.shape_cast %45 : vector<1x2x8x4xbf16> to vector<2x8x4xbf16>
    %47 = arith.maximumf %44, %46 : vector<2x8x4xbf16>
    %48 = arith.maximumf %42, %47 : vector<2x8x4xbf16>
    %49 = vector.broadcast %20 : bf16 to vector<2x8x4xbf16>
    %50 = arith.mulf %48, %49 : vector<2x8x4xbf16>
    %51 = tpu.concatenate %35, %12, %50 in 0 : vector<2x8x4xbf16>, vector<8x8x4xbf16>, vector<2x8x4xbf16> -> vector<12x8x4xbf16>
    %cst = arith.constant 0.000000e+00 : bf16
    %52 = vector.broadcast %cst : bf16 to vector<12x8x124xbf16>
    %53 = tpu.concatenate %51, %52 in 2 : vector<12x8x4xbf16>, vector<12x8x124xbf16> -> vector<12x8x128xbf16>
    %cst_15 = arith.constant 0.000000e+00 : bf16
    %54 = vector.broadcast %cst_15 : bf16 to vector<12x1x128xbf16>
    %c0_16 = arith.constant 0 : index
    %c0_17 = arith.constant 0 : index
    %c0_18 = arith.constant 0 : index
    %55 = vector.load %arg12[%c0_16, %c0_17, %c0_18] : memref<12x10x128xbf16, #tpu.memory_space<vmem>>, vector<12x1x128xbf16>
    tpu.vector_store %arg12[%c0_16, %c0_17, %c0_18], %54 {strides = array<i32>} : memref<12x10x128xbf16, #tpu.memory_space<vmem>>, vector<12x1x128xbf16>,
    %c0_19 = arith.constant 0 : index
    %c9 = arith.constant 9 : index
    %c0_20 = arith.constant 0 : index
    %56 = vector.load %arg12[%c0_19, %c9, %c0_20] : memref<12x10x128xbf16, #tpu.memory_space<vmem>>, vector<12x1x128xbf16>
    tpu.vector_store %arg12[%c0_19, %c9, %c0_20], %54 {strides = array<i32>} : memref<12x10x128xbf16, #tpu.memory_space<vmem>>, vector<12x1x128xbf16>,
    %c0_21 = arith.constant 0 : index
    %c1 = arith.constant 1 : index
    %c0_22 = arith.constant 0 : index
    %57 = vector.load %arg12[%c0_21, %c1, %c0_22] : memref<12x10x128xbf16, #tpu.memory_space<vmem>>, vector<12x8x128xbf16>
    tpu.vector_store %arg12[%c0_21, %c1, %c0_22], %53 {strides = array<i32>} : memref<12x10x128xbf16, #tpu.memory_space<vmem>>, vector<12x8x128xbf16>,
    %c0_23 = arith.constant 0 : index
    %c0_24 = arith.constant 0 : index
    %c0_25 = arith.constant 0 : index
    %58 = vector.load %arg12[%c0_23, %c0_24, %c0_25] : memref<12x10x128xbf16, #tpu.memory_space<vmem>>, vector<10x8x128xbf16>
    %59 = vector.shape_cast %58 : vector<10x8x128xbf16> to vector<80x128xbf16>
    %c0_26 = arith.constant 0 : index
    %c0_27 = arith.constant 0 : index
    %c0_28 = arith.constant 0 : index
    %60 = vector.load %arg5[%c0_26, %c0_27, %c0_28] : memref<9x128x128xbf16, #tpu.memory_space<vmem>>, vector<1x128x128xbf16>
    %61 = vector.shape_cast %60 : vector<1x128x128xbf16> to vector<128x128xbf16>
    %cst_29 = arith.constant dense<0.000000e+00> : vector<80x128xf32>
    %62 = tpu.matmul %59, %61, %cst_29 {dimension_numbers = #tpu.dot_dimension_numbers<[1], [0], [0], [1], [0, 0, 1, 1], [], []>} : vector<80x128xbf16>, vector<128x128xbf16>, vector<80x128xf32> -> vector<80x128xf32>
    %c0_30 = arith.constant 0 : index
    %c1_31 = arith.constant 1 : index
    %c0_32 = arith.constant 0 : index
    %63 = vector.load %arg12[%c0_30, %c1_31, %c0_32] : memref<12x10x128xbf16, #tpu.memory_space<vmem>>, vector<10x8x128xbf16>
    %64 = vector.shape_cast %63 : vector<10x8x128xbf16> to vector<80x128xbf16>
    %c1_33 = arith.constant 1 : index
    %c0_34 = arith.constant 0 : index
    %c0_35 = arith.constant 0 : index
    %65 = vector.load %arg5[%c1_33, %c0_34, %c0_35] : memref<9x128x128xbf16, #tpu.memory_space<vmem>>, vector<1x128x128xbf16>
    %66 = vector.shape_cast %65 : vector<1x128x128xbf16> to vector<128x128xbf16>
    %cst_36 = arith.constant dense<0.000000e+00> : vector<80x128xf32>
    %67 = tpu.matmul %64, %66, %cst_36 {dimension_numbers = #tpu.dot_dimension_numbers<[1], [0], [0], [1], [0, 0, 1, 1], [], []>} : vector<80x128xbf16>, vector<128x128xbf16>, vector<80x128xf32> -> vector<80x128xf32>
    %68 = arith.addf %62, %67 : vector<80x128xf32>
    %c0_37 = arith.constant 0 : index
    %c2 = arith.constant 2 : index
    %c0_38 = arith.constant 0 : index
    %69 = vector.load %arg12[%c0_37, %c2, %c0_38] : memref<12x10x128xbf16, #tpu.memory_space<vmem>>, vector<10x8x128xbf16>
    %70 = vector.shape_cast %69 : vector<10x8x128xbf16> to vector<80x128xbf16>
    %c2_39 = arith.constant 2 : index
    %c0_40 = arith.constant 0 : index
    %c0_41 = arith.constant 0 : index
    %71 = vector.load %arg5[%c2_39, %c0_40, %c0_41] : memref<9x128x128xbf16, #tpu.memory_space<vmem>>, vector<1x128x128xbf16>
    %72 = vector.shape_cast %71 : vector<1x128x128xbf16> to vector<128x128xbf16>
    %cst_42 = arith.constant dense<0.000000e+00> : vector<80x128xf32>
    %73 = tpu.matmul %70, %72, %cst_42 {dimension_numbers = #tpu.dot_dimension_numbers<[1], [0], [0], [1], [0, 0, 1, 1], [], []>} : vector<80x128xbf16>, vector<128x128xbf16>, vector<80x128xf32> -> vector<80x128xf32>
    %74 = arith.addf %68, %73 : vector<80x128xf32>
    %c1_43 = arith.constant 1 : index
    %c0_44 = arith.constant 0 : index
    %c0_45 = arith.constant 0 : index
    %75 = vector.load %arg12[%c1_43, %c0_44, %c0_45] : memref<12x10x128xbf16, #tpu.memory_space<vmem>>, vector<10x8x128xbf16>
    %76 = vector.shape_cast %75 : vector<10x8x128xbf16> to vector<80x128xbf16>
    %c3 = arith.constant 3 : index
    %c0_46 = arith.constant 0 : index
    %c0_47 = arith.constant 0 : index
    %77 = vector.load %arg5[%c3, %c0_46, %c0_47] : memref<9x128x128xbf16, #tpu.memory_space<vmem>>, vector<1x128x128xbf16>
    %78 = vector.shape_cast %77 : vector<1x128x128xbf16> to vector<128x128xbf16>
    %cst_48 = arith.constant dense<0.000000e+00> : vector<80x128xf32>
    %79 = tpu.matmul %76, %78, %cst_48 {dimension_numbers = #tpu.dot_dimension_numbers<[1], [0], [0], [1], [0, 0, 1, 1], [], []>} : vector<80x128xbf16>, vector<128x128xbf16>, vector<80x128xf32> -> vector<80x128xf32>
    %80 = arith.addf %74, %79 : vector<80x128xf32>
    %c1_49 = arith.constant 1 : index
    %c1_50 = arith.constant 1 : index
    %c0_51 = arith.constant 0 : index
    %81 = vector.load %arg12[%c1_49, %c1_50, %c0_51] : memref<12x10x128xbf16, #tpu.memory_space<vmem>>, vector<10x8x128xbf16>
    %82 = vector.shape_cast %81 : vector<10x8x128xbf16> to vector<80x128xbf16>
    %c4 = arith.constant 4 : index
    %c0_52 = arith.constant 0 : index
    %c0_53 = arith.constant 0 : index
    %83 = vector.load %arg5[%c4, %c0_52, %c0_53] : memref<9x128x128xbf16, #tpu.memory_space<vmem>>, vector<1x128x128xbf16>
    %84 = vector.shape_cast %83 : vector<1x128x128xbf16> to vector<128x128xbf16>
    %cst_54 = arith.constant dense<0.000000e+00> : vector<80x128xf32>
    %85 = tpu.matmul %82, %84, %cst_54 {dimension_numbers = #tpu.dot_dimension_numbers<[1], [0], [0], [1], [0, 0, 1, 1], [], []>} : vector<80x128xbf16>, vector<128x128xbf16>, vector<80x128xf32> -> vector<80x128xf32>
    %86 = arith.addf %80, %85 : vector<80x128xf32>
    %c1_55 = arith.constant 1 : index
    %c2_56 = arith.constant 2 : index
    %c0_57 = arith.constant 0 : index
    %87 = vector.load %arg12[%c1_55, %c2_56, %c0_57] : memref<12x10x128xbf16, #tpu.memory_space<vmem>>, vector<10x8x128xbf16>
    %88 = vector.shape_cast %87 : vector<10x8x128xbf16> to vector<80x128xbf16>
    %c5 = arith.constant 5 : index
    %c0_58 = arith.constant 0 : index
    %c0_59 = arith.constant 0 : index
    %89 = vector.load %arg5[%c5, %c0_58, %c0_59] : memref<9x128x128xbf16, #tpu.memory_space<vmem>>, vector<1x128x128xbf16>
    %90 = vector.shape_cast %89 : vector<1x128x128xbf16> to vector<128x128xbf16>
    %cst_60 = arith.constant dense<0.000000e+00> : vector<80x128xf32>
    %91 = tpu.matmul %88, %90, %cst_60 {dimension_numbers = #tpu.dot_dimension_numbers<[1], [0], [0], [1], [0, 0, 1, 1], [], []>} : vector<80x128xbf16>, vector<128x128xbf16>, vector<80x128xf32> -> vector<80x128xf32>
    %92 = arith.addf %86, %91 : vector<80x128xf32>
    %c2_61 = arith.constant 2 : index
    %c0_62 = arith.constant 0 : index
    %c0_63 = arith.constant 0 : index
    %93 = vector.load %arg12[%c2_61, %c0_62, %c0_63] : memref<12x10x128xbf16, #tpu.memory_space<vmem>>, vector<10x8x128xbf16>
    %94 = vector.shape_cast %93 : vector<10x8x128xbf16> to vector<80x128xbf16>
    %c6 = arith.constant 6 : index
    %c0_64 = arith.constant 0 : index
    %c0_65 = arith.constant 0 : index
    %95 = vector.load %arg5[%c6, %c0_64, %c0_65] : memref<9x128x128xbf16, #tpu.memory_space<vmem>>, vector<1x128x128xbf16>
    %96 = vector.shape_cast %95 : vector<1x128x128xbf16> to vector<128x128xbf16>
    %cst_66 = arith.constant dense<0.000000e+00> : vector<80x128xf32>
    %97 = tpu.matmul %94, %96, %cst_66 {dimension_numbers = #tpu.dot_dimension_numbers<[1], [0], [0], [1], [0, 0, 1, 1], [], []>} : vector<80x128xbf16>, vector<128x128xbf16>, vector<80x128xf32> -> vector<80x128xf32>
    %98 = arith.addf %92, %97 : vector<80x128xf32>
    %c2_67 = arith.constant 2 : index
    %c1_68 = arith.constant 1 : index
    %c0_69 = arith.constant 0 : index
    %99 = vector.load %arg12[%c2_67, %c1_68, %c0_69] : memref<12x10x128xbf16, #tpu.memory_space<vmem>>, vector<10x8x128xbf16>
    %100 = vector.shape_cast %99 : vector<10x8x128xbf16> to vector<80x128xbf16>
    %c7 = arith.constant 7 : index
    %c0_70 = arith.constant 0 : index
    %c0_71 = arith.constant 0 : index
    %101 = vector.load %arg5[%c7, %c0_70, %c0_71] : memref<9x128x128xbf16, #tpu.memory_space<vmem>>, vector<1x128x128xbf16>
    %102 = vector.shape_cast %101 : vector<1x128x128xbf16> to vector<128x128xbf16>
    %cst_72 = arith.constant dense<0.000000e+00> : vector<80x128xf32>
    %103 = tpu.matmul %100, %102, %cst_72 {dimension_numbers = #tpu.dot_dimension_numbers<[1], [0], [0], [1], [0, 0, 1, 1], [], []>} : vector<80x128xbf16>, vector<128x128xbf16>, vector<80x128xf32> -> vector<80x128xf32>
    %104 = arith.addf %98, %103 : vector<80x128xf32>
    %c2_73 = arith.constant 2 : index
    %c2_74 = arith.constant 2 : index
    %c0_75 = arith.constant 0 : index
    %105 = vector.load %arg12[%c2_73, %c2_74, %c0_75] : memref<12x10x128xbf16, #tpu.memory_space<vmem>>, vector<10x8x128xbf16>
    %106 = vector.shape_cast %105 : vector<10x8x128xbf16> to vector<80x128xbf16>
    %c8 = arith.constant 8 : index
    %c0_76 = arith.constant 0 : index
    %c0_77 = arith.constant 0 : index
    %107 = vector.load %arg5[%c8, %c0_76, %c0_77] : memref<9x128x128xbf16, #tpu.memory_space<vmem>>, vector<1x128x128xbf16>
    %108 = vector.shape_cast %107 : vector<1x128x128xbf16> to vector<128x128xbf16>
    %cst_78 = arith.constant dense<0.000000e+00> : vector<80x128xf32>
    %109 = tpu.matmul %106, %108, %cst_78 {dimension_numbers = #tpu.dot_dimension_numbers<[1], [0], [0], [1], [0, 0, 1, 1], [], []>} : vector<80x128xbf16>, vector<128x128xbf16>, vector<80x128xf32> -> vector<80x128xf32>
    %110 = arith.addf %104, %109 : vector<80x128xf32>
    %c0_79 = arith.constant 0 : index
    %c0_80 = arith.constant 0 : index
    %111 = vector.load %arg6[%c0_79, %c0_80] : memref<1x128xf32, #tpu.memory_space<vmem>>, vector<1x128xf32>
    %112 = vector.broadcast %111 : vector<1x128xf32> to vector<80x128xf32>
    %113 = arith.mulf %110, %112 : vector<80x128xf32>
    %c0_81 = arith.constant 0 : index
    %c0_82 = arith.constant 0 : index
    %114 = vector.load %arg7[%c0_81, %c0_82] : memref<1x128xf32, #tpu.memory_space<vmem>>, vector<1x128xf32>
    %115 = vector.broadcast %114 : vector<1x128xf32> to vector<80x128xf32>
    %116 = arith.addf %113, %115 : vector<80x128xf32>
    %cst_83 = arith.constant 0.000000e+00 : f32
    %117 = vector.broadcast %cst_83 : f32 to vector<80x128xf32>
    %118 = arith.maximumf %116, %117 : vector<80x128xf32>
    %cst_84 = arith.constant 0.000000e+00 : bf16
    %119 = vector.broadcast %cst_84 : bf16 to vector<10x1x128xbf16>
    %c0_85 = arith.constant 0 : index
    %c0_86 = arith.constant 0 : index
    %c0_87 = arith.constant 0 : index
    %120 = vector.load %arg13[%c0_85, %c0_86, %c0_87] : memref<10x10x128xbf16, #tpu.memory_space<vmem>>, vector<10x1x128xbf16>
    tpu.vector_store %arg13[%c0_85, %c0_86, %c0_87], %119 {strides = array<i32>} : memref<10x10x128xbf16, #tpu.memory_space<vmem>>, vector<10x1x128xbf16>,
    %c0_88 = arith.constant 0 : index
    %c9_89 = arith.constant 9 : index
    %c0_90 = arith.constant 0 : index
    %121 = vector.load %arg13[%c0_88, %c9_89, %c0_90] : memref<10x10x128xbf16, #tpu.memory_space<vmem>>, vector<10x1x128xbf16>
    tpu.vector_store %arg13[%c0_88, %c9_89, %c0_90], %119 {strides = array<i32>} : memref<10x10x128xbf16, #tpu.memory_space<vmem>>, vector<10x1x128xbf16>,
    %122 = arith.truncf %118 : vector<80x128xf32> to vector<80x128xbf16>
    %123 = vector.shape_cast %122 : vector<80x128xbf16> to vector<10x8x128xbf16>
    %c0_91 = arith.constant 0 : index
    %c1_92 = arith.constant 1 : index
    %c0_93 = arith.constant 0 : index
    %124 = vector.load %arg13[%c0_91, %c1_92, %c0_93] : memref<10x10x128xbf16, #tpu.memory_space<vmem>>, vector<10x8x128xbf16>
    tpu.vector_store %arg13[%c0_91, %c1_92, %c0_93], %123 {strides = array<i32>} : memref<10x10x128xbf16, #tpu.memory_space<vmem>>, vector<10x8x128xbf16>,
    %c0_i32_94 = arith.constant 0 : i32
    %125 = arith.cmpi eq, %arg1, %c0_i32_94 : i32
    %126 = arith.extui %125 : i1 to i32
    %c0_i32_95 = arith.constant 0 : i32
    %127 = arith.cmpi ne, %126, %c0_i32_95 : i32
    scf.if %127 {
      %cst_170 = arith.constant 0.000000e+00 : bf16
      %197 = vector.broadcast %cst_170 : bf16 to vector<1x10x128xbf16>
      %c0_171 = arith.constant 0 : index
      %c0_172 = arith.constant 0 : index
      %c0_173 = arith.constant 0 : index
      %198 = vector.load %arg13[%c0_171, %c0_172, %c0_173] : memref<10x10x128xbf16, #tpu.memory_space<vmem>>, vector<1x10x128xbf16>
      tpu.vector_store %arg13[%c0_171, %c0_172, %c0_173], %197 {strides = array<i32>} : memref<10x10x128xbf16, #tpu.memory_space<vmem>>, vector<1x10x128xbf16>,
    } else {
    }
    %c0_i32_96 = arith.constant 0 : i32
    %128 = arith.cmpi eq, %arg1, %c0_i32_96 : i32
    %129 = arith.extui %128 : i1 to i32
    %c0_i32_97 = arith.constant 0 : i32
    %130 = arith.cmpi ne, %129, %c0_i32_97 : i32
    scf.if %130 {
      %cst_170 = arith.constant 0.000000e+00 : bf16
      %197 = vector.broadcast %cst_170 : bf16 to vector<1x10x128xbf16>
      %c9_171 = arith.constant 9 : index
      %c0_172 = arith.constant 0 : index
      %c0_173 = arith.constant 0 : index
      %198 = vector.load %arg13[%c9_171, %c0_172, %c0_173] : memref<10x10x128xbf16, #tpu.memory_space<vmem>>, vector<1x10x128xbf16>
      tpu.vector_store %arg13[%c9_171, %c0_172, %c0_173], %197 {strides = array<i32>} : memref<10x10x128xbf16, #tpu.memory_space<vmem>>, vector<1x10x128xbf16>,
    } else {
    }
    %c0_98 = arith.constant 0 : index
    %c0_99 = arith.constant 0 : index
    %c0_100 = arith.constant 0 : index
    %131 = vector.load %arg13[%c0_98, %c0_99, %c0_100] : memref<10x10x128xbf16, #tpu.memory_space<vmem>>, vector<8x8x128xbf16>
    %132 = vector.shape_cast %131 : vector<8x8x128xbf16> to vector<64x128xbf16>
    %c0_101 = arith.constant 0 : index
    %c0_102 = arith.constant 0 : index
    %c0_103 = arith.constant 0 : index
    %133 = vector.load %arg8[%c0_101, %c0_102, %c0_103] : memref<9x128x128xbf16, #tpu.memory_space<vmem>>, vector<1x128x128xbf16>
    %134 = vector.shape_cast %133 : vector<1x128x128xbf16> to vector<128x128xbf16>
    %cst_104 = arith.constant dense<0.000000e+00> : vector<64x128xf32>
    %135 = tpu.matmul %132, %134, %cst_104 {dimension_numbers = #tpu.dot_dimension_numbers<[1], [0], [0], [1], [0, 0, 1, 1], [], []>} : vector<64x128xbf16>, vector<128x128xbf16>, vector<64x128xf32> -> vector<64x128xf32>
    %c0_105 = arith.constant 0 : index
    %c1_106 = arith.constant 1 : index
    %c0_107 = arith.constant 0 : index
    %136 = vector.load %arg13[%c0_105, %c1_106, %c0_107] : memref<10x10x128xbf16, #tpu.memory_space<vmem>>, vector<8x8x128xbf16>
    %137 = vector.shape_cast %136 : vector<8x8x128xbf16> to vector<64x128xbf16>
    %c1_108 = arith.constant 1 : index
    %c0_109 = arith.constant 0 : index
    %c0_110 = arith.constant 0 : index
    %138 = vector.load %arg8[%c1_108, %c0_109, %c0_110] : memref<9x128x128xbf16, #tpu.memory_space<vmem>>, vector<1x128x128xbf16>
    %139 = vector.shape_cast %138 : vector<1x128x128xbf16> to vector<128x128xbf16>
    %cst_111 = arith.constant dense<0.000000e+00> : vector<64x128xf32>
    %140 = tpu.matmul %137, %139, %cst_111 {dimension_numbers = #tpu.dot_dimension_numbers<[1], [0], [0], [1], [0, 0, 1, 1], [], []>} : vector<64x128xbf16>, vector<128x128xbf16>, vector<64x128xf32> -> vector<64x128xf32>
    %141 = arith.addf %135, %140 : vector<64x128xf32>
    %c0_112 = arith.constant 0 : index
    %c2_113 = arith.constant 2 : index
    %c0_114 = arith.constant 0 : index
    %142 = vector.load %arg13[%c0_112, %c2_113, %c0_114] : memref<10x10x128xbf16, #tpu.memory_space<vmem>>, vector<8x8x128xbf16>
    %143 = vector.shape_cast %142 : vector<8x8x128xbf16> to vector<64x128xbf16>
    %c2_115 = arith.constant 2 : index
    %c0_116 = arith.constant 0 : index
    %c0_117 = arith.constant 0 : index
    %144 = vector.load %arg8[%c2_115, %c0_116, %c0_117] : memref<9x128x128xbf16, #tpu.memory_space<vmem>>, vector<1x128x128xbf16>
    %145 = vector.shape_cast %144 : vector<1x128x128xbf16> to vector<128x128xbf16>
    %cst_118 = arith.constant dense<0.000000e+00> : vector<64x128xf32>
    %146 = tpu.matmul %143, %145, %cst_118 {dimension_numbers = #tpu.dot_dimension_numbers<[1], [0], [0], [1], [0, 0, 1, 1], [], []>} : vector<64x128xbf16>, vector<128x128xbf16>, vector<64x128xf32> -> vector<64x128xf32>
    %147 = arith.addf %141, %146 : vector<64x128xf32>
    %c1_119 = arith.constant 1 : index
    %c0_120 = arith.constant 0 : index
    %c0_121 = arith.constant 0 : index
    %148 = vector.load %arg13[%c1_119, %c0_120, %c0_121] : memref<10x10x128xbf16, #tpu.memory_space<vmem>>, vector<8x8x128xbf16>
    %149 = vector.shape_cast %148 : vector<8x8x128xbf16> to vector<64x128xbf16>
    %c3_122 = arith.constant 3 : index
    %c0_123 = arith.constant 0 : index
    %c0_124 = arith.constant 0 : index
    %150 = vector.load %arg8[%c3_122, %c0_123, %c0_124] : memref<9x128x128xbf16, #tpu.memory_space<vmem>>, vector<1x128x128xbf16>
    %151 = vector.shape_cast %150 : vector<1x128x128xbf16> to vector<128x128xbf16>
    %cst_125 = arith.constant dense<0.000000e+00> : vector<64x128xf32>
    %152 = tpu.matmul %149, %151, %cst_125 {dimension_numbers = #tpu.dot_dimension_numbers<[1], [0], [0], [1], [0, 0, 1, 1], [], []>} : vector<64x128xbf16>, vector<128x128xbf16>, vector<64x128xf32> -> vector<64x128xf32>
    %153 = arith.addf %147, %152 : vector<64x128xf32>
    %c1_126 = arith.constant 1 : index
    %c1_127 = arith.constant 1 : index
    %c0_128 = arith.constant 0 : index
    %154 = vector.load %arg13[%c1_126, %c1_127, %c0_128] : memref<10x10x128xbf16, #tpu.memory_space<vmem>>, vector<8x8x128xbf16>
    %155 = vector.shape_cast %154 : vector<8x8x128xbf16> to vector<64x128xbf16>
    %c4_129 = arith.constant 4 : index
    %c0_130 = arith.constant 0 : index
    %c0_131 = arith.constant 0 : index
    %156 = vector.load %arg8[%c4_129, %c0_130, %c0_131] : memref<9x128x128xbf16, #tpu.memory_space<vmem>>, vector<1x128x128xbf16>
    %157 = vector.shape_cast %156 : vector<1x128x128xbf16> to vector<128x128xbf16>
    %cst_132 = arith.constant dense<0.000000e+00> : vector<64x128xf32>
    %158 = tpu.matmul %155, %157, %cst_132 {dimension_numbers = #tpu.dot_dimension_numbers<[1], [0], [0], [1], [0, 0, 1, 1], [], []>} : vector<64x128xbf16>, vector<128x128xbf16>, vector<64x128xf32> -> vector<64x128xf32>
    %159 = arith.addf %153, %158 : vector<64x128xf32>
    %c1_133 = arith.constant 1 : index
    %c2_134 = arith.constant 2 : index
    %c0_135 = arith.constant 0 : index
    %160 = vector.load %arg13[%c1_133, %c2_134, %c0_135] : memref<10x10x128xbf16, #tpu.memory_space<vmem>>, vector<8x8x128xbf16>
    %161 = vector.shape_cast %160 : vector<8x8x128xbf16> to vector<64x128xbf16>
    %c5_136 = arith.constant 5 : index
    %c0_137 = arith.constant 0 : index
    %c0_138 = arith.constant 0 : index
    %162 = vector.load %arg8[%c5_136, %c0_137, %c0_138] : memref<9x128x128xbf16, #tpu.memory_space<vmem>>, vector<1x128x128xbf16>
    %163 = vector.shape_cast %162 : vector<1x128x128xbf16> to vector<128x128xbf16>
    %cst_139 = arith.constant dense<0.000000e+00> : vector<64x128xf32>
    %164 = tpu.matmul %161, %163, %cst_139 {dimension_numbers = #tpu.dot_dimension_numbers<[1], [0], [0], [1], [0, 0, 1, 1], [], []>} : vector<64x128xbf16>, vector<128x128xbf16>, vector<64x128xf32> -> vector<64x128xf32>
    %165 = arith.addf %159, %164 : vector<64x128xf32>
    %c2_140 = arith.constant 2 : index
    %c0_141 = arith.constant 0 : index
    %c0_142 = arith.constant 0 : index
    %166 = vector.load %arg13[%c2_140, %c0_141, %c0_142] : memref<10x10x128xbf16, #tpu.memory_space<vmem>>, vector<8x8x128xbf16>
    %167 = vector.shape_cast %166 : vector<8x8x128xbf16> to vector<64x128xbf16>
    %c6_143 = arith.constant 6 : index
    %c0_144 = arith.constant 0 : index
    %c0_145 = arith.constant 0 : index
    %168 = vector.load %arg8[%c6_143, %c0_144, %c0_145] : memref<9x128x128xbf16, #tpu.memory_space<vmem>>, vector<1x128x128xbf16>
    %169 = vector.shape_cast %168 : vector<1x128x128xbf16> to vector<128x128xbf16>
    %cst_146 = arith.constant dense<0.000000e+00> : vector<64x128xf32>
    %170 = tpu.matmul %167, %169, %cst_146 {dimension_numbers = #tpu.dot_dimension_numbers<[1], [0], [0], [1], [0, 0, 1, 1], [], []>} : vector<64x128xbf16>, vector<128x128xbf16>, vector<64x128xf32> -> vector<64x128xf32>
    %171 = arith.addf %165, %170 : vector<64x128xf32>
    %c2_147 = arith.constant 2 : index
    %c1_148 = arith.constant 1 : index
    %c0_149 = arith.constant 0 : index
    %172 = vector.load %arg13[%c2_147, %c1_148, %c0_149] : memref<10x10x128xbf16, #tpu.memory_space<vmem>>, vector<8x8x128xbf16>
    %173 = vector.shape_cast %172 : vector<8x8x128xbf16> to vector<64x128xbf16>
    %c7_150 = arith.constant 7 : index
    %c0_151 = arith.constant 0 : index
    %c0_152 = arith.constant 0 : index
    %174 = vector.load %arg8[%c7_150, %c0_151, %c0_152] : memref<9x128x128xbf16, #tpu.memory_space<vmem>>, vector<1x128x128xbf16>
    %175 = vector.shape_cast %174 : vector<1x128x128xbf16> to vector<128x128xbf16>
    %cst_153 = arith.constant dense<0.000000e+00> : vector<64x128xf32>
    %176 = tpu.matmul %173, %175, %cst_153 {dimension_numbers = #tpu.dot_dimension_numbers<[1], [0], [0], [1], [0, 0, 1, 1], [], []>} : vector<64x128xbf16>, vector<128x128xbf16>, vector<64x128xf32> -> vector<64x128xf32>
    %177 = arith.addf %171, %176 : vector<64x128xf32>
    %c2_154 = arith.constant 2 : index
    %c2_155 = arith.constant 2 : index
    %c0_156 = arith.constant 0 : index
    %178 = vector.load %arg13[%c2_154, %c2_155, %c0_156] : memref<10x10x128xbf16, #tpu.memory_space<vmem>>, vector<8x8x128xbf16>
    %179 = vector.shape_cast %178 : vector<8x8x128xbf16> to vector<64x128xbf16>
    %c8_157 = arith.constant 8 : index
    %c0_158 = arith.constant 0 : index
    %c0_159 = arith.constant 0 : index
    %180 = vector.load %arg8[%c8_157, %c0_158, %c0_159] : memref<9x128x128xbf16, #tpu.memory_space<vmem>>, vector<1x128x128xbf16>
    %181 = vector.shape_cast %180 : vector<1x128x128xbf16> to vector<128x128xbf16>
    %cst_160 = arith.constant dense<0.000000e+00> : vector<64x128xf32>
    %182 = tpu.matmul %179, %181, %cst_160 {dimension_numbers = #tpu.dot_dimension_numbers<[1], [0], [0], [1], [0, 0, 1, 1], [], []>} : vector<64x128xbf16>, vector<128x128xbf16>, vector<64x128xf32> -> vector<64x128xf32>
    %183 = arith.addf %177, %182 : vector<64x128xf32>
    %c0_161 = arith.constant 0 : index
    %c0_162 = arith.constant 0 : index
    %184 = vector.load %arg9[%c0_161, %c0_162] : memref<1x128xf32, #tpu.memory_space<vmem>>, vector<1x128xf32>
    %185 = vector.broadcast %184 : vector<1x128xf32> to vector<64x128xf32>
    %186 = arith.mulf %183, %185 : vector<64x128xf32>
    %c0_163 = arith.constant 0 : index
    %c0_164 = arith.constant 0 : index
    %187 = vector.load %arg10[%c0_163, %c0_164] : memref<1x128xf32, #tpu.memory_space<vmem>>, vector<1x128xf32>
    %188 = vector.broadcast %187 : vector<1x128xf32> to vector<64x128xf32>
    %189 = arith.addf %186, %188 : vector<64x128xf32>
    %cst_165 = arith.constant 0.000000e+00 : f32
    %190 = vector.broadcast %cst_165 : f32 to vector<64x128xf32>
    %191 = arith.maximumf %189, %190 : vector<64x128xf32>
    %192 = arith.truncf %191 : vector<64x128xf32> to vector<64x128xbf16>
    %193 = vector.shape_cast %192 : vector<64x128xbf16> to vector<8x8x128xbf16>
    %c0_166 = arith.constant 0 : index
    %c0_167 = arith.constant 0 : index
    %c0_168 = arith.constant 0 : index
    %c0_169 = arith.constant 0 : index
    %194 = vector.load %arg11[%c0_166, %c0_167, %c0_168, %c0_169] : memref<1x8x8x128xbf16, #tpu.memory_space<vmem>>, vector<1x8x8x128xbf16>
    %195 = vector.shape_cast %194 : vector<1x8x8x128xbf16> to vector<8x8x128xbf16>
    %196 = vector.shape_cast %193 : vector<8x8x128xbf16> to vector<1x8x8x128xbf16>
    tpu.vector_store %arg11[%c0_166, %c0_167, %c0_168, %c0_169], %196 {strides = array<i32>} : memref<1x8x8x128xbf16, #tpu.memory_space<vmem>>, vector<1x8x8x128xbf16>,
    return
  }
  func.func @transform_0(%arg0: i32, %arg1: i32) -> (i32, i32, i32, i32, i32) {
    %c0_i32 = arith.constant 0 : i32
    %c0_i32_0 = arith.constant 0 : i32
    %c0_i32_1 = arith.constant 0 : i32
    %c0_i32_2 = arith.constant 0 : i32
    return %arg0, %c0_i32, %arg1, %c0_i32_0, %c0_i32_1 : i32, i32, i32, i32, i32
  }
  func.func @transform_1(%arg0: i32, %arg1: i32) -> (i32, i32, i32, i32, i32) {
    %c4_i32 = arith.constant 4 : i32
    %0 = arith.muli %arg1, %c4_i32 : i32
    %c1_i32 = arith.constant 1 : i32
    %1 = arith.subi %0, %c1_i32 : i32
    %c0_i32 = arith.constant 0 : i32
    %2 = arith.maxsi %1, %c0_i32 : i32
    %c0_i32_0 = arith.constant 0 : i32
    %c0_i32_1 = arith.constant 0 : i32
    %c0_i32_2 = arith.constant 0 : i32
    %c0_i32_3 = arith.constant 0 : i32
    return %arg0, %c0_i32_0, %2, %c0_i32_1, %c0_i32_2 : i32, i32, i32, i32, i32
  }
  func.func @transform_2(%arg0: i32, %arg1: i32) -> (i32, i32, i32, i32, i32) {
    %c4_i32 = arith.constant 4 : i32
    %0 = arith.muli %arg1, %c4_i32 : i32
    %c4_i32_0 = arith.constant 4 : i32
    %1 = arith.addi %0, %c4_i32_0 : i32
    %c3_i32 = arith.constant 3 : i32
    %2 = arith.minsi %1, %c3_i32 : i32
    %c0_i32 = arith.constant 0 : i32
    %c0_i32_1 = arith.constant 0 : i32
    %c0_i32_2 = arith.constant 0 : i32
    %c0_i32_3 = arith.constant 0 : i32
    return %arg0, %c0_i32, %2, %c0_i32_1, %c0_i32_2 : i32, i32, i32, i32, i32
  }
  func.func @transform_3(%arg0: i32, %arg1: i32) -> (i32, i32, i32) {
    %c0_i32 = arith.constant 0 : i32
    %c0_i32_0 = arith.constant 0 : i32
    %c0_i32_1 = arith.constant 0 : i32
    %c0_i32_2 = arith.constant 0 : i32
    return %c0_i32, %c0_i32_0, %c0_i32_1 : i32, i32, i32
  }
  func.func @transform_4(%arg0: i32, %arg1: i32) -> (i32, i32) {
    %c0_i32 = arith.constant 0 : i32
    %c0_i32_0 = arith.constant 0 : i32
    %c0_i32_1 = arith.constant 0 : i32
    return %c0_i32, %c0_i32_0 : i32, i32
  }
  func.func @transform_5(%arg0: i32, %arg1: i32) -> (i32, i32) {
    %c0_i32 = arith.constant 0 : i32
    %c0_i32_0 = arith.constant 0 : i32
    %c0_i32_1 = arith.constant 0 : i32
    return %c0_i32, %c0_i32_0 : i32, i32
  }
  func.func @transform_6(%arg0: i32, %arg1: i32) -> (i32, i32, i32) {
    %c0_i32 = arith.constant 0 : i32
    %c0_i32_0 = arith.constant 0 : i32
    %c0_i32_1 = arith.constant 0 : i32
    %c0_i32_2 = arith.constant 0 : i32
    return %c0_i32, %c0_i32_0, %c0_i32_1 : i32, i32, i32
  }
  func.func @transform_7(%arg0: i32, %arg1: i32) -> (i32, i32) {
    %c0_i32 = arith.constant 0 : i32
    %c0_i32_0 = arith.constant 0 : i32
    %c0_i32_1 = arith.constant 0 : i32
    return %c0_i32, %c0_i32_0 : i32, i32
  }
  func.func @transform_8(%arg0: i32, %arg1: i32) -> (i32, i32) {
    %c0_i32 = arith.constant 0 : i32
    %c0_i32_0 = arith.constant 0 : i32
    %c0_i32_1 = arith.constant 0 : i32
    return %c0_i32, %c0_i32_0 : i32, i32
  }
  func.func @transform_9(%arg0: i32, %arg1: i32) -> (i32, i32, i32, i32) {
    %c0_i32 = arith.constant 0 : i32
    %c0_i32_0 = arith.constant 0 : i32
    %c0_i32_1 = arith.constant 0 : i32
    return %arg0, %arg1, %c0_i32, %c0_i32_0 : i32, i32, i32, i32
  }
}

</mosaic_0001>

<llo_original>
// kernel: down_forward.1
$region0: #{down_forward.1}
  #allocation0 [shape = 'u32[]', space=smem, size = 0x4, offset = 0x4, fixed_abs, tag = 'smem constant byte address 0x4 - core index']
  #allocation1 [shape = 'u32[144,128]{1,0:T(1,128)}', space=vmem, size = 0x12000, scoped, tag = 'internal scratch']
  #allocation2 [shape = 'bf16[12,10,128]{2,1,0:T(8,128)(2,1)}', space=vmem, size = 0xc000, scoped, tag = 'scratch operand']
  #allocation3 [shape = 'bf16[10,10,128]{2,1,0:T(8,128)(2,1)}', space=vmem, size = 0xa000, scoped, tag = 'scratch operand']
  %s0 = inlined_call_operand.vmem [shape: bf16[2,4,8,8,4], index: 0, kind: input, shape index: {}, may-alias: {0,1,2}]
  %s1 = inlined_call_operand.vmem [shape: bf16[2,4,8,8,4], index: 1, kind: input, shape index: {}, may-alias: {0,1,2}]
  %s2 = inlined_call_operand.vmem [shape: bf16[2,4,8,8,4], index: 2, kind: input, shape index: {}, may-alias: {0,1,2}]
  %s3 = inlined_call_operand.vmem [shape: bf16[9,128,128], index: 3, kind: input, shape index: {}]
  %s4 = inlined_call_operand.vmem [shape: f32[1,128], index: 4, kind: input, shape index: {}]
  %s5 = inlined_call_operand.vmem [shape: f32[1,128], index: 5, kind: input, shape index: {}]
  %s6 = inlined_call_operand.vmem [shape: bf16[9,128,128], index: 6, kind: input, shape index: {}]
  %s7 = inlined_call_operand.vmem [shape: f32[1,128], index: 7, kind: input, shape index: {}]
  %s8 = inlined_call_operand.vmem [shape: f32[1,128], index: 8, kind: input, shape index: {}]
  %s9 = inlined_call_operand.vmem [shape: bf16[2,8,8,128], index: 9, kind: output, shape index: {}]
  %s10 = sld [smem:[#allocation0]]
  $region155: #{down_forward.1} parent=0
    _
  %s12 = ssub.s32 1, %s10
  %s13 = scalar_select 0, %s12, %s10
  $region1: #{down_forward.1} parent=0
    #allocation4 [shape = 'u8[32768]{0}', space=vmem, size = 0x8000, scoped, tag = 'input window, operand 1']
    #allocation5 [shape = 'u8[32768]{0}', space=vmem, size = 0x8000, scoped, tag = 'input window, operand 2']
    loop: start=0, step=1, limit=4
    $region2: #{down_forward.1} parent=1 // loop_pre_header
      _
    $region3: #{down_forward.1} parent=1 // loop_header
      %s15 = sphi 0, %s19
      %p16 = scmp.ge.s32.totalorder %s15, 4
      %s22 = sphi 0, %s34
      %s23 = sphi 0, %s30
      %s24 = sphi 0, %s22
      %s25 = sphi 0, %s23
      %s26 = sphi 0, %s24
      %s27 = sphi 0, %s25
      %s39 = sphi 0, %s41
      %s42 = sphi 0, %s39
      %s43 = sphi 0, %s42
      %s59 = sphi 0, %s43
      %s75 = sphi 0, %s77
      %s78 = sphi 0, %s75
      %s79 = sphi 0, %s78
      %s95 = sphi 0, %s79
      %s111 = sphi 0, %s113
      %s114 = sphi 0, %s111
      %s115 = sphi 0, %s114
      %s131 = sphi 0, %s115
      %s135 = sphi 0, %s135
      %s137 = sphi 0, %s135
      %s138 = sphi 0, %s137
      %s152 = sphi 0, %s138
      %s156 = sphi 0, %s156
      %s158 = sphi 0, %s156
      %s159 = sphi 0, %s158
      %s173 = sphi 0, %s159
      %s177 = sphi 0, %s177
      %s179 = sphi 0, %s177
      %s180 = sphi 0, %s179
      %s194 = sphi 0, %s180
      %s198 = sphi 0, %s198
      %s200 = sphi 0, %s198
      %s201 = sphi 0, %s200
      %s215 = sphi 0, %s201
      %s219 = sphi 0, %s219
      %s221 = sphi 0, %s219
      %s222 = sphi 0, %s221
      %s236 = sphi 0, %s222
      %s240 = sphi 0, %s240
      %s242 = sphi 0, %s240
      %s243 = sphi 0, %s242
      %s257 = sphi 0, %s243
      %s265 = sphi 0, %s267
      %s268 = sphi 0, %s265
      %s269 = sphi 0, %s268
      %s285 = sphi 0, %s269
    $region4: #{down_forward.1} parent=1 // loop_header_branch
      %18 = sbr.rel (%p16) target = $region8
    $region5: #{down_forward.1} parent=1 // loop_body
      %s20 = ssub.s32 %s15, 1
      %s21 = ssub.s32 %s15, 2
      %s28 = sadd.s32 1, %s23
      %p29 = scmp.ge.s32.totalorder %s28, 1
      %s30 = scalar_select %p29, 0, %s28
      %s31 = sadd.s32 1, %s22
      %s32 = scalar_select %p29, %s31, %s22
      %p33 = scmp.ge.s32.totalorder %s32, 2
      %s34 = scalar_select %p33, 0, %s32
      %s35 = ssub.s32 %s22, %s34
      %s36 = ssub.s32 %s23, %s30
      %s37 = sor.u32 %s35, %s36
      %p38 = scmp.eq.s32.totalorder %s37, 0
      %s40 = sadd.s32 %s39, 1
      %s41 = scalar_select %p38, %s39, %s40
      %p44 = pneg %p38
      %p45 = scmp.eq.s32.totalorder %s15, 1
      %p46 = por %p44, %p45
      %p47 = scmp.ne.s32.totalorder %s39, %s42
      %p48 = scmp.eq.s32.totalorder %s15, 0
      %p49 = por %p47, %p48
      %p50 = scmp.ne.s32.totalorder %s39, %s42
      %p51 = scmp.eq.s32.totalorder %s20, 1
      %p52 = por %p50, %p51
      %p53 = scmp.ne.s32.totalorder %s42, %s43
      %p54 = scmp.eq.s32.totalorder %s20, 0
      %p55 = por %p53, %p54
      %p56 = scmp.ne.s32.totalorder %s42, %s43
      %p57 = scmp.eq.s32.totalorder %s21, 1
      %p58 = por %p56, %p57
      %p60 = scmp.ne.s32.totalorder %s43, %s59
      %p61 = scmp.eq.s32.totalorder %s21, 0
      %p62 = por %p60, %p61
      %s63 = smul.u32 %s23, 4
      %s64 = ssub.s32 %s63, 1
      %p65 = scmp.gt.s32.totalorder %s64, 0
      %s66 = scalar_select %p65, %s64, 0
      %s67 = smul.u32 %s30, 4
      %s68 = ssub.s32 %s67, 1
      %p69 = scmp.gt.s32.totalorder %s68, 0
      %s70 = scalar_select %p69, %s68, 0
      %s71 = ssub.s32 %s22, %s34
      %s72 = ssub.s32 %s66, %s70
      %s73 = sor.u32 %s71, %s72
      %p74 = scmp.eq.s32.totalorder %s73, 0
      %s76 = sadd.s32 %s75, 1
      %s77 = scalar_select %p74, %s75, %s76
      %p80 = pneg %p74
      %p81 = scmp.eq.s32.totalorder %s15, 1
      %p82 = por %p80, %p81
      %p83 = scmp.ne.s32.totalorder %s75, %s78
      %p84 = scmp.eq.s32.totalorder %s15, 0
      %p85 = por %p83, %p84
      %p86 = scmp.ne.s32.totalorder %s75, %s78
      %p87 = scmp.eq.s32.totalorder %s20, 1
      %p88 = por %p86, %p87
      %p89 = scmp.ne.s32.totalorder %s78, %s79
      %p90 = scmp.eq.s32.totalorder %s20, 0
      %p91 = por %p89, %p90
      %p92 = scmp.ne.s32.totalorder %s78, %s79
      %p93 = scmp.eq.s32.totalorder %s21, 1
      %p94 = por %p92, %p93
      %p96 = scmp.ne.s32.totalorder %s79, %s95
      %p97 = scmp.eq.s32.totalorder %s21, 0
      %p98 = por %p96, %p97
      %s99 = smul.u32 %s23, 4
      %s100 = sadd.s32 %s99, 4
      %p101 = scmp.lt.s32.totalorder %s100, 3
      %s102 = scalar_select %p101, %s100, 3
      %s103 = smul.u32 %s30, 4
      %s104 = sadd.s32 %s103, 4
      %p105 = scmp.lt.s32.totalorder %s104, 3
      %s106 = scalar_select %p105, %s104, 3
      %s107 = ssub.s32 %s22, %s34
      %s108 = ssub.s32 %s102, %s106
      %s109 = sor.u32 %s107, %s108
      %p110 = scmp.eq.s32.totalorder %s109, 0
      %s112 = sadd.s32 %s111, 1
      %s113 = scalar_select %p110, %s111, %s112
      %p116 = pneg %p110
      %p117 = scmp.eq.s32.totalorder %s15, 1
      %p118 = por %p116, %p117
      %p119 = scmp.ne.s32.totalorder %s111, %s114
      %p120 = scmp.eq.s32.totalorder %s15, 0
      %p121 = por %p119, %p120
      %p122 = scmp.ne.s32.totalorder %s111, %s114
      %p123 = scmp.eq.s32.totalorder %s20, 1
      %p124 = por %p122, %p123
      %p125 = scmp.ne.s32.totalorder %s114, %s115
      %p126 = scmp.eq.s32.totalorder %s20, 0
      %p127 = por %p125, %p126
      %p128 = scmp.ne.s32.totalorder %s114, %s115
      %p129 = scmp.eq.s32.totalorder %s21, 1
      %p130 = por %p128, %p129
      %p132 = scmp.ne.s32.totalorder %s115, %s131
      %p133 = scmp.eq.s32.totalorder %s21, 0
      %p134 = por %p132, %p133
      %s136 = sadd.s32 %s135, 1
      %p139 = scmp.eq.s32.totalorder %s15, 1
      %p140 = scmp.ne.s32.totalorder %s135, %s137
      %p141 = scmp.eq.s32.totalorder %s15, 0
      %p142 = por %p140, %p141
      %p143 = scmp.ne.s32.totalorder %s135, %s137
      %p144 = scmp.eq.s32.totalorder %s20, 1
      %p145 = por %p143, %p144
      %p146 = scmp.ne.s32.totalorder %s137, %s138
      %p147 = scmp.eq.s32.totalorder %s20, 0
      %p148 = por %p146, %p147
      %p149 = scmp.ne.s32.totalorder %s137, %s138
      %p150 = scmp.eq.s32.totalorder %s21, 1
      %p151 = por %p149, %p150
      %p153 = scmp.ne.s32.totalorder %s138, %s152
      %p154 = scmp.eq.s32.totalorder %s21, 0
      %p155 = por %p153, %p154
      %s157 = sadd.s32 %s156, 1
      %p160 = scmp.eq.s32.totalorder %s15, 1
      %p161 = scmp.ne.s32.totalorder %s156, %s158
      %p162 = scmp.eq.s32.totalorder %s15, 0
      %p163 = por %p161, %p162
      %p164 = scmp.ne.s32.totalorder %s156, %s158
      %p165 = scmp.eq.s32.totalorder %s20, 1
      %p166 = por %p164, %p165
      %p167 = scmp.ne.s32.totalorder %s158, %s159
      %p168 = scmp.eq.s32.totalorder %s20, 0
      %p169 = por %p167, %p168
      %p170 = scmp.ne.s32.totalorder %s158, %s159
      %p171 = scmp.eq.s32.totalorder %s21, 1
      %p172 = por %p170, %p171
      %p174 = scmp.ne.s32.totalorder %s159, %s173
      %p175 = scmp.eq.s32.totalorder %s21, 0
      %p176 = por %p174, %p175
      %s178 = sadd.s32 %s177, 1
      %p181 = scmp.eq.s32.totalorder %s15, 1
      %p182 = scmp.ne.s32.totalorder %s177, %s179
      %p183 = scmp.eq.s32.totalorder %s15, 0
      %p184 = por %p182, %p183
      %p185 = scmp.ne.s32.totalorder %s177, %s179
      %p186 = scmp.eq.s32.totalorder %s20, 1
      %p187 = por %p185, %p186
      %p188 = scmp.ne.s32.totalorder %s179, %s180
      %p189 = scmp.eq.s32.totalorder %s20, 0
      %p190 = por %p188, %p189
      %p191 = scmp.ne.s32.totalorder %s179, %s180
      %p192 = scmp.eq.s32.totalorder %s21, 1
      %p193 = por %p191, %p192
      %p195 = scmp.ne.s32.totalorder %s180, %s194
      %p196 = scmp.eq.s32.totalorder %s21, 0
      %p197 = por %p195, %p196
      %s199 = sadd.s32 %s198, 1
      %p202 = scmp.eq.s32.totalorder %s15, 1
      %p203 = scmp.ne.s32.totalorder %s198, %s200
      %p204 = scmp.eq.s32.totalorder %s15, 0
      %p205 = por %p203, %p204
      %p206 = scmp.ne.s32.totalorder %s198, %s200
      %p207 = scmp.eq.s32.totalorder %s20, 1
      %p208 = por %p206, %p207
      %p209 = scmp.ne.s32.totalorder %s200, %s201
      %p210 = scmp.eq.s32.totalorder %s20, 0
      %p211 = por %p209, %p210
      %p212 = scmp.ne.s32.totalorder %s200, %s201
      %p213 = scmp.eq.s32.totalorder %s21, 1
      %p214 = por %p212, %p213
      %p216 = scmp.ne.s32.totalorder %s201, %s215
      %p217 = scmp.eq.s32.totalorder %s21, 0
      %p218 = por %p216, %p217
      %s220 = sadd.s32 %s219, 1
      %p223 = scmp.eq.s32.totalorder %s15, 1
      %p224 = scmp.ne.s32.totalorder %s219, %s221
      %p225 = scmp.eq.s32.totalorder %s15, 0
      %p226 = por %p224, %p225
      %p227 = scmp.ne.s32.totalorder %s219, %s221
      %p228 = scmp.eq.s32.totalorder %s20, 1
      %p229 = por %p227, %p228
      %p230 = scmp.ne.s32.totalorder %s221, %s222
      %p231 = scmp.eq.s32.totalorder %s20, 0
      %p232 = por %p230, %p231
      %p233 = scmp.ne.s32.totalorder %s221, %s222
      %p234 = scmp.eq.s32.totalorder %s21, 1
      %p235 = por %p233, %p234
      %p237 = scmp.ne.s32.totalorder %s222, %s236
      %p238 = scmp.eq.s32.totalorder %s21, 0
      %p239 = por %p237, %p238
      %s241 = sadd.s32 %s240, 1
      %p244 = scmp.eq.s32.totalorder %s15, 1
      %p245 = scmp.ne.s32.totalorder %s240, %s242
      %p246 = scmp.eq.s32.totalorder %s15, 0
      %p247 = por %p245, %p246
      %p248 = scmp.ne.s32.totalorder %s240, %s242
      %p249 = scmp.eq.s32.totalorder %s20, 1
      %p250 = por %p248, %p249
      %p251 = scmp.ne.s32.totalorder %s242, %s243
      %p252 = scmp.eq.s32.totalorder %s20, 0
      %p253 = por %p251, %p252
      %p254 = scmp.ne.s32.totalorder %s242, %s243
      %p255 = scmp.eq.s32.totalorder %s21, 1
      %p256 = por %p254, %p255
      %p258 = scmp.ne.s32.totalorder %s243, %s257
      %p259 = scmp.eq.s32.totalorder %s21, 0
      %p260 = por %p258, %p259
      %s261 = ssub.s32 %s22, %s34
      %s262 = ssub.s32 %s23, %s30
      %s263 = sor.u32 %s261, %s262
      %p264 = scmp.eq.s32.totalorder %s263, 0
      %s266 = sadd.s32 %s265, 1
      %s267 = scalar_select %p264, %s265, %s266
      %p270 = pneg %p264
      %p271 = scmp.eq.s32.totalorder %s15, 1
      %p272 = por %p270, %p271
      %p273 = scmp.ne.s32.totalorder %s265, %s268
      %p274 = scmp.eq.s32.totalorder %s15, 0
      %p275 = por %p273, %p274
      %p276 = scmp.ne.s32.totalorder %s265, %s268
      %p277 = scmp.eq.s32.totalorder %s20, 1
      %p278 = por %p276, %p277
      %p279 = scmp.ne.s32.totalorder %s268, %s269
      %p280 = scmp.eq.s32.totalorder %s20, 0
      %p281 = por %p279, %p280
      %p282 = scmp.ne.s32.totalorder %s268, %s269
      %p283 = scmp.eq.s32.totalorder %s21, 1
      %p284 = por %p282, %p283
      %p286 = scmp.ne.s32.totalorder %s269, %s285
      %p287 = scmp.eq.s32.totalorder %s21, 0
      %p288 = por %p286, %p287
      %p289 = scmp.le.s32.totalorder 1, %s15
      %p290 = scmp.lt.s32.totalorder %s15, 3
      %p291 = pnand %p289, %p290
      %p292 = pneg %p291
      // Predicated region
      $region9: #{down_forward.1} parent=5 // pred_check
        _
      $region10: #{down_forward.1} parent=5 // pred_check_branch
        %294 = sbr.rel (%p291) target = $region12
      $region11: #{down_forward.1} parent=5 // pred_region
        %s295 = ssub.s32 %s15, 1
        // Predicated region
        $region13: #{down_forward.1} parent=11 // pred_check
          %p296 = pneg %p148
        $region14: #{down_forward.1} parent=11 // pred_check_branch
          %298 = sbr.rel (%p296) target = $region16
        $region15: #{down_forward.1} parent=11 // pred_region
          _
        $region16: #{down_forward.1} parent=11 // pred_fallthru
          _
        // Predicated region
        $region17: #{down_forward.1} parent=11 // pred_check
          %p299 = pneg %p169
        $region18: #{down_forward.1} parent=11 // pred_check_branch
          %301 = sbr.rel (%p299) target = $region20
        $region19: #{down_forward.1} parent=11 // pred_region
          _
        $region20: #{down_forward.1} parent=11 // pred_fallthru
          _
        // Predicated region
        $region21: #{down_forward.1} parent=11 // pred_check
          %p302 = pneg %p190
        $region22: #{down_forward.1} parent=11 // pred_check_branch
          %304 = sbr.rel (%p302) target = $region24
        $region23: #{down_forward.1} parent=11 // pred_region
          _
        $region24: #{down_forward.1} parent=11 // pred_fallthru
          _
        // Predicated region
        $region25: #{down_forward.1} parent=11 // pred_check
          %p305 = pneg %p211
        $region26: #{down_forward.1} parent=11 // pred_check_branch
          %307 = sbr.rel (%p305) target = $region28
        $region27: #{down_forward.1} parent=11 // pred_region
          _
        $region28: #{down_forward.1} parent=11 // pred_fallthru
          _
        // Predicated region
        $region29: #{down_forward.1} parent=11 // pred_check
          %p308 = pneg %p232
        $region30: #{down_forward.1} parent=11 // pred_check_branch
          %310 = sbr.rel (%p308) target = $region32
        $region31: #{down_forward.1} parent=11 // pred_region
          _
        $region32: #{down_forward.1} parent=11 // pred_fallthru
          _
        // Predicated region
        $region33: #{down_forward.1} parent=11 // pred_check
          %p311 = pneg %p253
        $region34: #{down_forward.1} parent=11 // pred_check_branch
          %313 = sbr.rel (%p311) target = $region36
        $region35: #{down_forward.1} parent=11 // pred_region
          _
        $region36: #{down_forward.1} parent=11 // pred_fallthru
          _
      $region12: #{down_forward.1} parent=5 // pred_fallthru
        _
      %p314 = scmp.lt.s32.totalorder %s15, 2
      // Predicated region
      $region37: #{down_forward.1} parent=5 // pred_check
        %p315 = pneg %p314
      $region38: #{down_forward.1} parent=5 // pred_check_branch
        %317 = sbr.rel (%p315) target = $region40
      $region39: #{down_forward.1} parent=5 // pred_region
        // Predicated region
        $region41: #{down_forward.1} parent=39 // pred_check
          %p318 = pneg %p49
        $region42: #{down_forward.1} parent=39 // pred_check_branch
          %320 = sbr.rel (%p318) target = $region44
        $region43: #{down_forward.1} parent=39 // pred_region
          %s321 = smul.u32 8, %s23
          %p322 = scmp.lt.s32.totalorder %s22, 1
          %s323 = scalar_select %p322, %s22, 1
          %p324 = scmp.lt.s32.totalorder %s321, 7
          %s325 = scalar_select %p324, %s321, 7
          %s326 = smul.addr %s323, 32
          %s327 = sadd.s32 %s325, %s326
          %s328 = smul.addr %s327, 4
          %s329 = scalar_lea.vmem %s0, %s328
          %s330 = smul.u32 8, %s23
        $region44: #{down_forward.1} parent=39 // pred_fallthru
          _
        // Predicated region
        $region45: #{down_forward.1} parent=39 // pred_check
          %p331 = pneg %p85
        $region46: #{down_forward.1} parent=39 // pred_check_branch
          %333 = sbr.rel (%p331) target = $region48
        $region47: #{down_forward.1} parent=39 // pred_region
          %s334 = sand.u32 %s75, 1
          %s335 = sand.u32 %s75, 1
          %s336 = smul.addr %s335, 32
          %s337 = scalar_lea.vmem [#allocation4], %s336
          %s338 = smul.u32 %s23, 4
          %s339 = ssub.s32 %s338, 1
          %p340 = scmp.gt.s32.totalorder %s339, 0
          %s341 = scalar_select %p340, %s339, 0
          %s342 = smul.u32 2, %s341
          %s343 = smul.addr %s22, 32
          %s344 = sadd.s32 %s342, %s343
          %s345 = smul.addr %s344, 4
          %s346 = scalar_lea.vmem %s1, %s345
          // Predicated region
          $region49: #{down_forward.1} parent=47 // pred_check
            _
          $region50: #{down_forward.1} parent=47 // pred_check_branch
            %348 = sbr.rel (0) target = $region52
          $region51: #{down_forward.1} parent=47 // pred_region
            // Predicated region
            $region53: #{down_forward.1} parent=51 // pred_check
              _
            $region54: #{down_forward.1} parent=51 // pred_check_branch
              %350 = sbr.rel target = $region56
            $region55: #{down_forward.1} parent=51 // pred_region
              // Predicated region
              $region68: #{down_forward.1} parent=55 // pred_check
                _
              $region69: #{down_forward.1} parent=55 // pred_check_branch
                %379 = sbr.rel (0) target = $region71
              $region70: #{down_forward.1} parent=55 // pred_region
                loop: start=0, step=1, limit=1
                $region72: #{down_forward.1} parent=70 // loop_pre_header
                  _
                $region73: #{down_forward.1} parent=70 // loop_header
                  %s381 = sphi 0, %s385
                  %p382 = scmp.ge.s32.totalorder %s381, 1
                  %s386 = sphi %s346, %s346
                  %s387 = sphi %s337, %s337
                $region74: #{down_forward.1} parent=70 // loop_header_branch
                  %384 = sbr.rel (%p382) target = $region78
                $region75: #{down_forward.1} parent=70 // loop_body
                  _
                $region76: #{down_forward.1} parent=70 // loop_footer
                  %s385 = sadd.s32 1, %s381
                $region77: #{down_forward.1} parent=70 // loop_footer_branch
                  %380 = sbr.rel target = $region73
                $region78: #{down_forward.1} parent=70 // loop_exit
                  _
                loop: start=0, step=1, limit=1
                $region79: #{down_forward.1} parent=70 // loop_pre_header
                  _
                $region80: #{down_forward.1} parent=70 // loop_header
                  %s390 = sphi 0, %s394
                  %p391 = scmp.ge.s32.totalorder %s390, 1
                  %s395 = sphi %s346, %s346
                  %s396 = sphi %s337, %s337
                $region81: #{down_forward.1} parent=70 // loop_header_branch
                  %393 = sbr.rel (%p391) target = $region85
                $region82: #{down_forward.1} parent=70 // loop_body
                  %v397 = vld [vmem:[%s395] sm:$0xf]
                  %398 = vst [vmem:[%s396] sm:$0xf] %v397
                  %v399 = vld [vmem:[%s395 + $0x4] sm:$0xf]
                  %400 = vst [vmem:[%s396 + $0x4] sm:$0xf] %v399
                  %v401 = vld [vmem:[%s395 + $0x20] sm:$0xf]
                  %402 = vst [vmem:[%s396 + $0x8] sm:$0xf] %v401
                  %v403 = vld [vmem:[%s395 + $0x24] sm:$0xf]
                  %404 = vst [vmem:[%s396 + $0xc] sm:$0xf] %v403
                  %v405 = vld [vmem:[%s395 + $0x40] sm:$0xf]
                  %406 = vst [vmem:[%s396 + $0x10] sm:$0xf] %v405
                  %v407 = vld [vmem:[%s395 + $0x44] sm:$0xf]
                  %408 = vst [vmem:[%s396 + $0x14] sm:$0xf] %v407
                  %v409 = vld [vmem:[%s395 + $0x60] sm:$0xf]
                  %410 = vst [vmem:[%s396 + $0x18] sm:$0xf] %v409
                  %v411 = vld [vmem:[%s395 + $0x64] sm:$0xf]
                  %412 = vst [vmem:[%s396 + $0x1c] sm:$0xf] %v411
                $region83: #{down_forward.1} parent=70 // loop_footer
                  %s394 = sadd.s32 1, %s390
                $region84: #{down_forward.1} parent=70 // loop_footer_branch
                  %389 = sbr.rel target = $region80
                $region85: #{down_forward.1} parent=70 // loop_exit
                  _
              $region71: #{down_forward.1} parent=55 // pred_fallthru
                _
            $region56: #{down_forward.1} parent=51 // pred_fallthru
              _
            // Predicated region
            $region57: #{down_forward.1} parent=51 // pred_check
              _
            $region58: #{down_forward.1} parent=51 // pred_check_branch
              %352 = sbr.rel (0) target = $region60
            $region59: #{down_forward.1} parent=51 // pred_region
              loop: start=0, step=1, limit=1
              $region61: #{down_forward.1} parent=59 // loop_pre_header
                _
              $region62: #{down_forward.1} parent=59 // loop_header
                %s355 = sphi 0, %s359
                %p356 = scmp.ge.s32.totalorder %s355, 1
                %s360 = sphi %s346, %s346
                %s361 = sphi %s337, %s337
              $region63: #{down_forward.1} parent=59 // loop_header_branch
                %358 = sbr.rel (%p356) target = $region67
              $region64: #{down_forward.1} parent=59 // loop_body
                %v362 = vld [vmem:[%s360] sm:$0xf]
                %363 = vst [vmem:[%s361] sm:$0xf] %v362
                %v364 = vld [vmem:[%s360 + $0x4] sm:$0xf]
                %365 = vst [vmem:[%s361 + $0x4] sm:$0xf] %v364
                %v366 = vld [vmem:[%s360 + $0x20] sm:$0xf]
                %367 = vst [vmem:[%s361 + $0x8] sm:$0xf] %v366
                %v368 = vld [vmem:[%s360 + $0x24] sm:$0xf]
                %369 = vst [vmem:[%s361 + $0xc] sm:$0xf] %v368
                %v370 = vld [vmem:[%s360 + $0x40] sm:$0xf]
                %371 = vst [vmem:[%s361 + $0x10] sm:$0xf] %v370
                %v372 = vld [vmem:[%s360 + $0x44] sm:$0xf]
                %373 = vst [vmem:[%s361 + $0x14] sm:$0xf] %v372
                %v374 = vld [vmem:[%s360 + $0x60] sm:$0xf]
                %375 = vst [vmem:[%s361 + $0x18] sm:$0xf] %v374
                %v376 = vld [vmem:[%s360 + $0x64] sm:$0xf]
                %377 = vst [vmem:[%s361 + $0x1c] sm:$0xf] %v376
              $region65: #{down_forward.1} parent=59 // loop_footer
                %s359 = sadd.s32 1, %s355
              $region66: #{down_forward.1} parent=59 // loop_footer_branch
                %354 = sbr.rel target = $region62
              $region67: #{down_forward.1} parent=59 // loop_exit
                _
            $region60: #{down_forward.1} parent=51 // pred_fallthru
              _
          $region52: #{down_forward.1} parent=47 // pred_fallthru
            _
          %413 = vnop
        $region48: #{down_forward.1} parent=39 // pred_fallthru
          _
        // Predicated region
        $region86: #{down_forward.1} parent=39 // pred_check
          %p414 = pneg %p121
        $region87: #{down_forward.1} parent=39 // pred_check_branch
          %416 = sbr.rel (%p414) target = $region89
        $region88: #{down_forward.1} parent=39 // pred_region
          %s417 = sand.u32 %s111, 1
          %s418 = sand.u32 %s111, 1
          %s419 = smul.addr %s418, 32
          %s420 = scalar_lea.vmem [#allocation5], %s419
          %s421 = smul.u32 %s23, 4
          %s422 = sadd.s32 %s421, 4
          %p423 = scmp.lt.s32.totalorder %s422, 3
          %s424 = scalar_select %p423, %s422, 3
          %s425 = smul.u32 2, %s424
          %s426 = smul.addr %s22, 32
          %s427 = sadd.s32 %s425, %s426
          %s428 = smul.addr %s427, 4
          %s429 = scalar_lea.vmem %s2, %s428
          // Predicated region
          $region90: #{down_forward.1} parent=88 // pred_check
            _
          $region91: #{down_forward.1} parent=88 // pred_check_branch
            %431 = sbr.rel (0) target = $region93
          $region92: #{down_forward.1} parent=88 // pred_region
            // Predicated region
            $region94: #{down_forward.1} parent=92 // pred_check
              _
            $region95: #{down_forward.1} parent=92 // pred_check_branch
              %433 = sbr.rel target = $region97
            $region96: #{down_forward.1} parent=92 // pred_region
              // Predicated region
              $region109: #{down_forward.1} parent=96 // pred_check
                _
              $region110: #{down_forward.1} parent=96 // pred_check_branch
                %462 = sbr.rel (0) target = $region112
              $region111: #{down_forward.1} parent=96 // pred_region
                loop: start=0, step=1, limit=1
                $region113: #{down_forward.1} parent=111 // loop_pre_header
                  _
                $region114: #{down_forward.1} parent=111 // loop_header
                  %s464 = sphi 0, %s468
                  %p465 = scmp.ge.s32.totalorder %s464, 1
                  %s469 = sphi %s429, %s429
                  %s470 = sphi %s420, %s420
                $region115: #{down_forward.1} parent=111 // loop_header_branch
                  %467 = sbr.rel (%p465) target = $region119
                $region116: #{down_forward.1} parent=111 // loop_body
                  _
                $region117: #{down_forward.1} parent=111 // loop_footer
                  %s468 = sadd.s32 1, %s464
                $region118: #{down_forward.1} parent=111 // loop_footer_branch
                  %463 = sbr.rel target = $region114
                $region119: #{down_forward.1} parent=111 // loop_exit
                  _
                loop: start=0, step=1, limit=1
                $region120: #{down_forward.1} parent=111 // loop_pre_header
                  _
                $region121: #{down_forward.1} parent=111 // loop_header
                  %s473 = sphi 0, %s477
                  %p474 = scmp.ge.s32.totalorder %s473, 1
                  %s478 = sphi %s429, %s429
                  %s479 = sphi %s420, %s420
                $region122: #{down_forward.1} parent=111 // loop_header_branch
                  %476 = sbr.rel (%p474) target = $region126
                $region123: #{down_forward.1} parent=111 // loop_body
                  %v480 = vld [vmem:[%s478] sm:$0xf]
                  %481 = vst [vmem:[%s479] sm:$0xf] %v480
                  %v482 = vld [vmem:[%s478 + $0x4] sm:$0xf]
                  %483 = vst [vmem:[%s479 + $0x4] sm:$0xf] %v482
                  %v484 = vld [vmem:[%s478 + $0x20] sm:$0xf]
                  %485 = vst [vmem:[%s479 + $0x8] sm:$0xf] %v484
                  %v486 = vld [vmem:[%s478 + $0x24] sm:$0xf]
                  %487 = vst [vmem:[%s479 + $0xc] sm:$0xf] %v486
                  %v488 = vld [vmem:[%s478 + $0x40] sm:$0xf]
                  %489 = vst [vmem:[%s479 + $0x10] sm:$0xf] %v488
                  %v490 = vld [vmem:[%s478 + $0x44] sm:$0xf]
                  %491 = vst [vmem:[%s479 + $0x14] sm:$0xf] %v490
                  %v492 = vld [vmem:[%s478 + $0x60] sm:$0xf]
                  %493 = vst [vmem:[%s479 + $0x18] sm:$0xf] %v492
                  %v494 = vld [vmem:[%s478 + $0x64] sm:$0xf]
                  %495 = vst [vmem:[%s479 + $0x1c] sm:$0xf] %v494
                $region124: #{down_forward.1} parent=111 // loop_footer
                  %s477 = sadd.s32 1, %s473
                $region125: #{down_forward.1} parent=111 // loop_footer_branch
                  %472 = sbr.rel target = $region121
                $region126: #{down_forward.1} parent=111 // loop_exit
                  _
              $region112: #{down_forward.1} parent=96 // pred_fallthru
                _
            $region97: #{down_forward.1} parent=92 // pred_fallthru
              _
            // Predicated region
            $region98: #{down_forward.1} parent=92 // pred_check
              _
            $region99: #{down_forward.1} parent=92 // pred_check_branch
              %435 = sbr.rel (0) target = $region101
            $region100: #{down_forward.1} parent=92 // pred_region
              loop: start=0, step=1, limit=1
              $region102: #{down_forward.1} parent=100 // loop_pre_header
                _
              $region103: #{down_forward.1} parent=100 // loop_header
                %s438 = sphi 0, %s442
                %p439 = scmp.ge.s32.totalorder %s438, 1
                %s443 = sphi %s429, %s429
                %s444 = sphi %s420, %s420
              $region104: #{down_forward.1} parent=100 // loop_header_branch
                %441 = sbr.rel (%p439) target = $region108
              $region105: #{down_forward.1} parent=100 // loop_body
                %v445 = vld [vmem:[%s443] sm:$0xf]
                %446 = vst [vmem:[%s444] sm:$0xf] %v445
                %v447 = vld [vmem:[%s443 + $0x4] sm:$0xf]
                %448 = vst [vmem:[%s444 + $0x4] sm:$0xf] %v447
                %v449 = vld [vmem:[%s443 + $0x20] sm:$0xf]
                %450 = vst [vmem:[%s444 + $0x8] sm:$0xf] %v449
                %v451 = vld [vmem:[%s443 + $0x24] sm:$0xf]
                %452 = vst [vmem:[%s444 + $0xc] sm:$0xf] %v451
                %v453 = vld [vmem:[%s443 + $0x40] sm:$0xf]
                %454 = vst [vmem:[%s444 + $0x10] sm:$0xf] %v453
                %v455 = vld [vmem:[%s443 + $0x44] sm:$0xf]
                %456 = vst [vmem:[%s444 + $0x14] sm:$0xf] %v455
                %v457 = vld [vmem:[%s443 + $0x60] sm:$0xf]
                %458 = vst [vmem:[%s444 + $0x18] sm:$0xf] %v457
                %v459 = vld [vmem:[%s443 + $0x64] sm:$0xf]
                %460 = vst [vmem:[%s444 + $0x1c] sm:$0xf] %v459
              $region106: #{down_forward.1} parent=100 // loop_footer
                %s442 = sadd.s32 1, %s438
              $region107: #{down_forward.1} parent=100 // loop_footer_branch
                %437 = sbr.rel target = $region103
              $region108: #{down_forward.1} parent=100 // loop_exit
                _
            $region101: #{down_forward.1} parent=92 // pred_fallthru
              _
          $region93: #{down_forward.1} parent=88 // pred_fallthru
            _
          %496 = vnop
        $region89: #{down_forward.1} parent=39 // pred_fallthru
          _
      $region40: #{down_forward.1} parent=5 // pred_fallthru
        _
      %p497 = scmp.le.s32.totalorder 1, %s15
      %p498 = scmp.lt.s32.totalorder %s15, 3
      %p499 = pnand %p497, %p498
      %p500 = pneg %p499
      // Predicated region
      $region127: #{down_forward.1} parent=5 // pred_check
        _
      $region128: #{down_forward.1} parent=5 // pred_check_branch
        %502 = sbr.rel (%p499) target = $region130
      $region129: #{down_forward.1} parent=5 // pred_region
        %s503 = ssub.s32 %s15, 1
        %s504 = sand.u32 %s78, 1
        %s505 = sand.u32 %s78, 1
        %s506 = smul.addr %s505, 32
        %s507 = scalar_lea.vmem [#allocation4], %s506
        // Predicated region
        $region131: #{down_forward.1} parent=129 // pred_check
          %p508 = pneg %p91
        $region132: #{down_forward.1} parent=129 // pred_check_branch
          %510 = sbr.rel (%p508) target = $region134
        $region133: #{down_forward.1} parent=129 // pred_region
          _
        $region134: #{down_forward.1} parent=129 // pred_fallthru
          _
        %s511 = sand.u32 %s114, 1
        %s512 = sand.u32 %s114, 1
        %s513 = smul.addr %s512, 32
        %s514 = scalar_lea.vmem [#allocation5], %s513
        // Predicated region
        $region135: #{down_forward.1} parent=129 // pred_check
          %p515 = pneg %p127
        $region136: #{down_forward.1} parent=129 // pred_check_branch
          %517 = sbr.rel (%p515) target = $region138
        $region137: #{down_forward.1} parent=129 // pred_region
          _
        $region138: #{down_forward.1} parent=129 // pred_fallthru
          _
        %s518 = smul.u32 8, %s25
        %p519 = scmp.lt.s32.totalorder %s24, 1
        %s520 = scalar_select %p519, %s24, 1
        %p521 = scmp.lt.s32.totalorder %s518, 7
        %s522 = scalar_select %p521, %s518, 7
        %s523 = smul.addr %s520, 32
        %s524 = sadd.s32 %s522, %s523
        %s525 = smul.addr %s524, 4
        %s526 = scalar_lea.vmem %s0, %s525
        %p527 = pneg %p55
        %p528 = pneg %p52
        %s529 = sand.u32 %s78, 1
        %s530 = sand.u32 %s78, 1
        %s531 = smul.addr %s530, 32
        %s532 = scalar_lea.vmem [#allocation4], %s531
        %p533 = pneg %p91
        %p534 = pneg %p88
        %s535 = sand.u32 %s114, 1
        %s536 = sand.u32 %s114, 1
        %s537 = smul.addr %s536, 32
        %s538 = scalar_lea.vmem [#allocation5], %s537
        %p539 = pneg %p127
        %p540 = pneg %p124
        %p541 = pneg %p148
        %p542 = pneg %p145
        %p543 = pneg %p169
        %p544 = pneg %p166
        %p545 = pneg %p190
        %p546 = pneg %p187
        %p547 = pneg %p211
        %p548 = pneg %p208
        %p549 = pneg %p232
        %p550 = pneg %p229
        %p551 = pneg %p253
        %p552 = pneg %p250
        %p553 = pneg %p281
        %p554 = pneg %p278
        %s555 = smul.u32 8, %s25
        %p556 = scmp.lt.s32.totalorder %s24, 1
        %s557 = scalar_select %p556, %s24, 1
        %p558 = scmp.lt.s32.totalorder %s555, 7
        %s559 = scalar_select %p558, %s555, 7
        %s560 = smul.addr %s557, 8
        %s561 = sadd.s32 %s559, %s560
        %s562 = smul.addr %s561, 4
        %s563 = scalar_lea.vmem %s9, %s562
        %s564 = smul.u32 8, %s25
        %p565 = scmp.lt.s32.totalorder %s24, 1
        %s566 = scalar_select %p565, %s24, 1
        %p567 = scmp.lt.s32.totalorder %s564, 7
        %s568 = scalar_select %p567, %s564, 7
        %s569 = smul.addr %s566, 32
        %s570 = sadd.s32 %s568, %s569
        %s571 = smul.addr %s570, 4
        %s572 = scalar_lea.vmem %s0, %s571
        %s573 = smul.u32 8, %s25
        %s574 = smul.u32 %s25, 4
        %s575 = ssub.s32 %s574, 1
        %p576 = scmp.gt.s32.totalorder %s575, 0
        %s577 = scalar_select %p576, %s575, 0
        %s578 = smul.u32 2, %s577
        %s579 = smul.u32 %s25, 4
        %s580 = sadd.s32 %s579, 4
        %p581 = scmp.lt.s32.totalorder %s580, 3
        %s582 = scalar_select %p581, %s580, 3
        %s583 = smul.u32 2, %s582
        %s584 = smul.u32 8, %s25
        %p585 = scmp.lt.s32.totalorder %s24, 1
        %s586 = scalar_select %p585, %s24, 1
        %p587 = scmp.lt.s32.totalorder %s584, 7
        %s588 = scalar_select %p587, %s584, 7
        %s589 = smul.addr %s586, 8
        %s590 = sadd.s32 %s588, %s589
        %s591 = smul.addr %s590, 4
        %s592 = scalar_lea.vmem %s9, %s591
        %s593 = smul.u32 8, %s25
        %v595 = vld [vmem:[%s572] sm:$0xf]
        %v596 = vld [vmem:[%s572 + $0x4] sm:$0xf]
        %v597 = vld [vmem:[%s572 + $0x8] sm:$0xf]
        %v598 = vld [vmem:[%s572 + $0xc] sm:$0xf]
        %v599 = vld [vmem:[%s572 + $0x10] sm:$0xf]
        %v600 = vld [vmem:[%s572 + $0x14] sm:$0xf]
        %v601 = vld [vmem:[%s572 + $0x18] sm:$0xf]
        %v602 = vld [vmem:[%s572 + $0x1c] sm:$0xf]
        %v603 = vld [vmem:[%s572 + $0x20] sm:$0xf]
        %v604 = vld [vmem:[%s572 + $0x24] sm:$0xf]
        %v605 = vld [vmem:[%s572 + $0x28] sm:$0xf]
        %v606 = vld [vmem:[%s572 + $0x2c] sm:$0xf]
        %v607 = vld [vmem:[%s572 + $0x30] sm:$0xf]
        %v608 = vld [vmem:[%s572 + $0x34] sm:$0xf]
        %v609 = vld [vmem:[%s572 + $0x38] sm:$0xf]
        %v610 = vld [vmem:[%s572 + $0x3c] sm:$0xf]
        %v611 = vld [vmem:[%s572 + $0x40] sm:$0xf]
        %v612 = vld [vmem:[%s572 + $0x44] sm:$0xf]
        %v613 = vld [vmem:[%s572 + $0x48] sm:$0xf]
        %v614 = vld [vmem:[%s572 + $0x4c] sm:$0xf]
        %v615 = vld [vmem:[%s572 + $0x50] sm:$0xf]
        %v616 = vld [vmem:[%s572 + $0x54] sm:$0xf]
        %v617 = vld [vmem:[%s572 + $0x58] sm:$0xf]
        %v618 = vld [vmem:[%s572 + $0x5c] sm:$0xf]
        %v619 = vld [vmem:[%s572 + $0x60] sm:$0xf]
        %v620 = vld [vmem:[%s572 + $0x64] sm:$0xf]
        %v621 = vld [vmem:[%s572 + $0x68] sm:$0xf]
        %v622 = vld [vmem:[%s572 + $0x6c] sm:$0xf]
        %v623 = vld [vmem:[%s572 + $0x70] sm:$0xf]
        %v624 = vld [vmem:[%s572 + $0x74] sm:$0xf]
        %v625 = vld [vmem:[%s572 + $0x78] sm:$0xf]
        %v626 = vld [vmem:[%s572 + $0x7c] sm:$0xf]
        %v627 = vmax.bf16 %v595, %v603
        %v628 = vmax.bf16 %v596, %v604
        %v629 = vmax.bf16 %v597, %v605
        %v630 = vmax.bf16 %v598, %v606
        %v631 = vmax.bf16 %v599, %v607
        %v632 = vmax.bf16 %v600, %v608
        %v633 = vmax.bf16 %v601, %v609
        %v634 = vmax.bf16 %v602, %v610
        %v635 = vmax.bf16 %v611, %v619
        %v636 = vmax.bf16 %v612, %v620
        %v637 = vmax.bf16 %v613, %v621
        %v638 = vmax.bf16 %v614, %v622
        %v639 = vmax.bf16 %v615, %v623
        %v640 = vmax.bf16 %v616, %v624
        %v641 = vmax.bf16 %v617, %v625
        %v642 = vmax.bf16 %v618, %v626
        %v643 = vmax.bf16 %v627, %v635
        %v644 = vmax.bf16 %v628, %v636
        %v645 = vmax.bf16 %v629, %v637
        %v646 = vmax.bf16 %v630, %v638
        %v647 = vmax.bf16 %v631, %v639
        %v648 = vmax.bf16 %v632, %v640
        %v649 = vmax.bf16 %v633, %v641
        %v650 = vmax.bf16 %v634, %v642
        %p651 = scmp.gt.s32.totalorder %s25, 0
        %s652 = scalar_select %p651, 1, 0
        %s653 = scvt.s32.f32 %s652
        %p655 = scmp.ne.f32.partialorder %s653, %s653
        %s656 = sshrl.u32 %s653, 16
        %s657 = sand.u32 %s656, 1
        %s658 = sadd.s32 32767, %s657
        %s659 = sadd.s32 %s653, %s658
        %s660 = sand.u32 %s659, 4294901760
        %s661 = scalar_select %p655, 2143289344, %s660
        %s663 = sshrl.u32 %s661, 16
        %p664 = scmp.lt.s32.totalorder %s25, 0
        %s665 = scalar_select %p664, 1, 0
        %s666 = scvt.s32.f32 %s665
        %p668 = scmp.ne.f32.partialorder %s666, %s666
        %s669 = sshrl.u32 %s666, 16
        %s670 = sand.u32 %s669, 1
        %s671 = sadd.s32 32767, %s670
        %s672 = sadd.s32 %s666, %s671
        %s673 = sand.u32 %s672, 4294901760
        %s674 = scalar_select %p668, 2143289344, %s673
        %s676 = sshrl.u32 %s674, 16
        %v677 = vld [vmem:[%s507] sm:$0xf]
        %v678 = vld [vmem:[%s507 + $0x4] sm:$0xf]
        %v679 = vld [vmem:[%s507 + $0x8] sm:$0xf]
        %v680 = vld [vmem:[%s507 + $0xc] sm:$0xf]
        %v681 = vld [vmem:[%s507 + $0x10] sm:$0xf]
        %v682 = vld [vmem:[%s507 + $0x14] sm:$0xf]
        %v683 = vld [vmem:[%s507 + $0x18] sm:$0xf]
        %v684 = vld [vmem:[%s507 + $0x1c] sm:$0xf]
        %v685 = vmax.bf16 %v677, %v679
        %v686 = vmax.bf16 %v678, %v680
        %v687 = vmax.bf16 %v681, %v683
        %v688 = vmax.bf16 %v682, %v684
        %v689 = vmax.bf16 %v685, %v687
        %v690 = vmax.bf16 %v686, %v688
        %s691 = sshll.u32 %s663, 16
        %s692 = sor.u32 %s663, %s691
        %v693 = vstv %s692
        %v695 = vmul.bf16 %v689, %v693
        %v696 = vmul.bf16 %v690, %v693
        %v697 = vld [vmem:[%s514] sm:$0xf]
        %v698 = vld [vmem:[%s514 + $0x4] sm:$0xf]
        %v699 = vld [vmem:[%s514 + $0x8] sm:$0xf]
        %v700 = vld [vmem:[%s514 + $0xc] sm:$0xf]
        %v701 = vld [vmem:[%s514 + $0x10] sm:$0xf]
        %v702 = vld [vmem:[%s514 + $0x14] sm:$0xf]
        %v703 = vld [vmem:[%s514 + $0x18] sm:$0xf]
        %v704 = vld [vmem:[%s514 + $0x1c] sm:$0xf]
        %v705 = vmax.bf16 %v697, %v699
        %v706 = vmax.bf16 %v698, %v700
        %v707 = vmax.bf16 %v701, %v703
        %v708 = vmax.bf16 %v702, %v704
        %v709 = vmax.bf16 %v705, %v707
        %v710 = vmax.bf16 %v706, %v708
        %s711 = sshll.u32 %s676, 16
        %s712 = sor.u32 %s676, %s711
        %v713 = vstv %s712
        %v715 = vmul.bf16 %v709, %v713
        %v716 = vmul.bf16 %v710, %v713
        %vm717 = vcmask 31744
        %v720 = vsel %vm717, %v695, 0
        %v722 = vsel %vm717, %v696, 0
        %v724 = vsel %vm717, %v643, 0
        %v726 = vsel %vm717, %v644, 0
        %v728 = vsel %vm717, %v645, 0
        %v730 = vsel %vm717, %v646, 0
        %v732 = vsel %vm717, %v647, 0
        %v734 = vsel %vm717, %v648, 0
        %v736 = vsel %vm717, %v649, 0
        %v738 = vsel %vm717, %v650, 0
        %v740 = vsel %vm717, %v715, 0
        %v742 = vsel %vm717, %v716, 0
        %vm743 = vcmask 1040384
        %vm744 = vsmask.f32 256
        %vm745 = vmand %vm743, %vm744
        %v746 = vld [vmem:[#allocation2] sm:$0x1]
        %v747 = vsel %vm745, 0, %v746
        %748 = vst [vmem:[#allocation2] sm:$0x1] %v747
        %v749 = vld [vmem:[#allocation2 + $0x8] sm:$0x1]
        %v750 = vsel %vm745, 0, %v749
        %751 = vst [vmem:[#allocation2 + $0x8] sm:$0x1] %v750
        %v752 = vld [vmem:[#allocation2 + $0x10] sm:$0x1]
        %v753 = vsel %vm745, 0, %v752
        %754 = vst [vmem:[#allocation2 + $0x10] sm:$0x1] %v753
        %v755 = vld [vmem:[#allocation2 + $0x18] sm:$0x1]
        %v756 = vsel %vm745, 0, %v755
        %757 = vst [vmem:[#allocation2 + $0x18] sm:$0x1] %v756
        %v758 = vld [vmem:[#allocation2 + $0x20] sm:$0x1]
        %v759 = vsel %vm745, 0, %v758
        %760 = vst [vmem:[#allocation2 + $0x20] sm:$0x1] %v759
        %v761 = vld [vmem:[#allocation2 + $0x28] sm:$0x1]
        %v762 = vsel %vm745, 0, %v761
        %763 = vst [vmem:[#allocation2 + $0x28] sm:$0x1] %v762
        %v764 = vld [vmem:[#allocation2 + $0x30] sm:$0x1]
        %v765 = vsel %vm745, 0, %v764
        %766 = vst [vmem:[#allocation2 + $0x30] sm:$0x1] %v765
        %v767 = vld [vmem:[#allocation2 + $0x38] sm:$0x1]
        %v768 = vsel %vm745, 0, %v767
        %769 = vst [vmem:[#allocation2 + $0x38] sm:$0x1] %v768
        %v770 = vld [vmem:[#allocation2 + $0x40] sm:$0x1]
        %v771 = vsel %vm745, 0, %v770
        %772 = vst [vmem:[#allocation2 + $0x40] sm:$0x1] %v771
        %v773 = vld [vmem:[#allocation2 + $0x48] sm:$0x1]
        %v774 = vsel %vm745, 0, %v773
        %775 = vst [vmem:[#allocation2 + $0x48] sm:$0x1] %v774
        %v776 = vld [vmem:[#allocation2 + $0x50] sm:$0x1]
        %v777 = vsel %vm745, 0, %v776
        %778 = vst [vmem:[#allocation2 + $0x50] sm:$0x1] %v777
        %v779 = vld [vmem:[#allocation2 + $0x58] sm:$0x1]
        %v780 = vsel %vm745, 0, %v779
        %781 = vst [vmem:[#allocation2 + $0x58] sm:$0x1] %v780
        %vm782 = vsmask.f32 7938
        %vm783 = vmand %vm743, %vm782
        %v784 = vld [vmem:[#allocation2 + $0x4] sm:$0x1]
        %v785 = vsel %vm783, 0, %v784
        %786 = vst [vmem:[#allocation2 + $0x4] sm:$0x1] %v785
        %v787 = vld [vmem:[#allocation2 + $0xc] sm:$0x1]
        %v788 = vsel %vm783, 0, %v787
        %789 = vst [vmem:[#allocation2 + $0xc] sm:$0x1] %v788
        %v790 = vld [vmem:[#allocation2 + $0x14] sm:$0x1]
        %v791 = vsel %vm783, 0, %v790
        %792 = vst [vmem:[#allocation2 + $0x14] sm:$0x1] %v791
        %v793 = vld [vmem:[#allocation2 + $0x1c] sm:$0x1]
        %v794 = vsel %vm783, 0, %v793
        %795 = vst [vmem:[#allocation2 + $0x1c] sm:$0x1] %v794
        %v796 = vld [vmem:[#allocation2 + $0x24] sm:$0x1]
        %v797 = vsel %vm783, 0, %v796
        %798 = vst [vmem:[#allocation2 + $0x24] sm:$0x1] %v797
        %v799 = vld [vmem:[#allocation2 + $0x2c] sm:$0x1]
        %v800 = vsel %vm783, 0, %v799
        %801 = vst [vmem:[#allocation2 + $0x2c] sm:$0x1] %v800
        %v802 = vld [vmem:[#allocation2 + $0x34] sm:$0x1]
        %v803 = vsel %vm783, 0, %v802
        %804 = vst [vmem:[#allocation2 + $0x34] sm:$0x1] %v803
        %v805 = vld [vmem:[#allocation2 + $0x3c] sm:$0x1]
        %v806 = vsel %vm783, 0, %v805
        %807 = vst [vmem:[#allocation2 + $0x3c] sm:$0x1] %v806
        %v808 = vld [vmem:[#allocation2 + $0x44] sm:$0x1]
        %v809 = vsel %vm783, 0, %v808
        %810 = vst [vmem:[#allocation2 + $0x44] sm:$0x1] %v809
        %v811 = vld [vmem:[#allocation2 + $0x4c] sm:$0x1]
        %v812 = vsel %vm783, 0, %v811
        %813 = vst [vmem:[#allocation2 + $0x4c] sm:$0x1] %v812
        %v814 = vld [vmem:[#allocation2 + $0x54] sm:$0x1]
        %v815 = vsel %vm783, 0, %v814
        %816 = vst [vmem:[#allocation2 + $0x54] sm:$0x1] %v815
        %v817 = vld [vmem:[#allocation2 + $0x5c] sm:$0x1]
        %v818 = vsel %vm783, 0, %v817
        %819 = vst [vmem:[#allocation2 + $0x5c] sm:$0x1] %v818
        %v832 = vunpack.c.l.b16 %v720
        %v833 = vunpack.c.l.b16 %v722
        %v834 = vunpack.c.l.b16 %v724
        %v835 = vunpack.c.l.b16 %v726
        %v836 = vunpack.c.l.b16 %v728
        %v837 = vunpack.c.l.b16 %v730
        %v838 = vunpack.c.l.b16 %v732
        %v839 = vunpack.c.l.b16 %v734
        %v840 = vunpack.c.l.b16 %v736
        %v841 = vunpack.c.l.b16 %v738
        %v842 = vunpack.c.l.b16 %v740
        %v843 = vunpack.c.l.b16 %v742
        %v844 = vpack.c.b16 %v832, %v832
        %v845 = vpack.c.b16 %v833, %v833
        %v846 = vpack.c.b16 %v834, %v834
        %v847 = vpack.c.b16 %v835, %v835
        %v848 = vpack.c.b16 %v836, %v836
        %v849 = vpack.c.b16 %v837, %v837
        %v850 = vpack.c.b16 %v838, %v838
        %v851 = vpack.c.b16 %v839, %v839
        %v852 = vpack.c.b16 %v840, %v840
        %v853 = vpack.c.b16 %v841, %v841
        %v854 = vpack.c.b16 %v842, %v842
        %v855 = vpack.c.b16 %v843, %v843
        %v857 = vshrl.u32 %v844, 16
        %v859 = vrot.slane %v857, 7
        %v860 = vshll.u32 %v844, 16
        %v862 = vor.u32 %v859, %v860
        %v863 = vrot.slane %v859, 4
        %v865 = vshrl.u32 %v845, 16
        %v867 = vrot.slane %v865, 7
        %v868 = vshll.u32 %v845, 16
        %v870 = vor.u32 %v867, %v868
        %v871 = vrot.slane %v867, 4
        %v873 = vshrl.u32 %v846, 16
        %v875 = vrot.slane %v873, 7
        %v876 = vshll.u32 %v846, 16
        %v878 = vor.u32 %v875, %v876
        %v879 = vrot.slane %v875, 4
        %v881 = vshrl.u32 %v847, 16
        %v883 = vrot.slane %v881, 7
        %v884 = vshll.u32 %v847, 16
        %v886 = vor.u32 %v883, %v884
        %v887 = vrot.slane %v883, 4
        %v889 = vshrl.u32 %v848, 16
        %v891 = vrot.slane %v889, 7
        %v892 = vshll.u32 %v848, 16
        %v894 = vor.u32 %v891, %v892
        %v895 = vrot.slane %v891, 4
        %v897 = vshrl.u32 %v849, 16
        %v899 = vrot.slane %v897, 7
        %v900 = vshll.u32 %v849, 16
        %v902 = vor.u32 %v899, %v900
        %v903 = vrot.slane %v899, 4
        %v905 = vshrl.u32 %v850, 16
        %v907 = vrot.slane %v905, 7
        %v908 = vshll.u32 %v850, 16
        %v910 = vor.u32 %v907, %v908
        %v911 = vrot.slane %v907, 4
        %v913 = vshrl.u32 %v851, 16
        %v915 = vrot.slane %v913, 7
        %v916 = vshll.u32 %v851, 16
        %v918 = vor.u32 %v915, %v916
        %v919 = vrot.slane %v915, 4
        %v921 = vshrl.u32 %v852, 16
        %v923 = vrot.slane %v921, 7
        %v924 = vshll.u32 %v852, 16
        %v926 = vor.u32 %v923, %v924
        %v927 = vrot.slane %v923, 4
        %v929 = vshrl.u32 %v853, 16
        %v931 = vrot.slane %v929, 7
        %v932 = vshll.u32 %v853, 16
        %v934 = vor.u32 %v931, %v932
        %v935 = vrot.slane %v931, 4
        %v937 = vshrl.u32 %v854, 16
        %v939 = vrot.slane %v937, 7
        %v940 = vshll.u32 %v854, 16
        %v942 = vor.u32 %v939, %v940
        %v943 = vrot.slane %v939, 4
        %v945 = vshrl.u32 %v855, 16
        %v947 = vrot.slane %v945, 7
        %v948 = vshll.u32 %v855, 16
        %v950 = vor.u32 %v947, %v948
        %v951 = vrot.slane %v947, 4
        %vm976 = vcmask 1043456
        %vm977 = vmand %vm976, %vm782
        %v978 = vld [vmem:[#allocation2] sm:$0xf]
        %v979 = vsel %vm977, %v862, %v978
        %980 = vst [vmem:[#allocation2] sm:$0xf] %v979
        %v981 = vld [vmem:[#allocation2 + $0x4] sm:$0x1]
        %v982 = vsel %vm745, %v863, %v981
        %983 = vst [vmem:[#allocation2 + $0x4] sm:$0x1] %v982
        %v984 = vld [vmem:[#allocation2 + $0x8] sm:$0xf]
        %v985 = vsel %vm977, %v870, %v984
        %986 = vst [vmem:[#allocation2 + $0x8] sm:$0xf] %v985
        %v987 = vld [vmem:[#allocation2 + $0xc] sm:$0x1]
        %v988 = vsel %vm745, %v871, %v987
        %989 = vst [vmem:[#allocation2 + $0xc] sm:$0x1] %v988
        %v990 = vld [vmem:[#allocation2 + $0x10] sm:$0xf]
        %v991 = vsel %vm977, %v878, %v990
        %992 = vst [vmem:[#allocation2 + $0x10] sm:$0xf] %v991
        %v993 = vld [vmem:[#allocation2 + $0x14] sm:$0x1]
        %v994 = vsel %vm745, %v879, %v993
        %995 = vst [vmem:[#allocation2 + $0x14] sm:$0x1] %v994
        %v996 = vld [vmem:[#allocation2 + $0x18] sm:$0xf]
        %v997 = vsel %vm977, %v886, %v996
        %998 = vst [vmem:[#allocation2 + $0x18] sm:$0xf] %v997
        %v999 = vld [vmem:[#allocation2 + $0x1c] sm:$0x1]
        %v1000 = vsel %vm745, %v887, %v999
        %1001 = vst [vmem:[#allocation2 + $0x1c] sm:$0x1] %v1000
        %v1002 = vld [vmem:[#allocation2 + $0x20] sm:$0xf]
        %v1003 = vsel %vm977, %v894, %v1002
        %1004 = vst [vmem:[#allocation2 + $0x20] sm:$0xf] %v1003
        %v1005 = vld [vmem:[#allocation2 + $0x24] sm:$0x1]
        %v1006 = vsel %vm745, %v895, %v1005
        %1007 = vst [vmem:[#allocation2 + $0x24] sm:$0x1] %v1006
        %v1008 = vld [vmem:[#allocation2 + $0x28] sm:$0xf]
        %v1009 = vsel %vm977, %v902, %v1008
        %1010 = vst [vmem:[#allocation2 + $0x28] sm:$0xf] %v1009
        %v1011 = vld [vmem:[#allocation2 + $0x2c] sm:$0x1]
        %v1012 = vsel %vm745, %v903, %v1011
        %1013 = vst [vmem:[#allocation2 + $0x2c] sm:$0x1] %v1012
        %v1014 = vld [vmem:[#allocation2 + $0x30] sm:$0xf]
        %v1015 = vsel %vm977, %v910, %v1014
        %1016 = vst [vmem:[#allocation2 + $0x30] sm:$0xf] %v1015
        %v1017 = vld [vmem:[#allocation2 + $0x34] sm:$0x1]
        %v1018 = vsel %vm745, %v911, %v1017
        %1019 = vst [vmem:[#allocation2 + $0x34] sm:$0x1] %v1018
        %v1020 = vld [vmem:[#allocation2 + $0x38] sm:$0xf]
        %v1021 = vsel %vm977, %v918, %v1020
        %1022 = vst [vmem:[#allocation2 + $0x38] sm:$0xf] %v1021
        %v1023 = vld [vmem:[#allocation2 + $0x3c] sm:$0x1]
        %v1024 = vsel %vm745, %v919, %v1023
        %1025 = vst [vmem:[#allocation2 + $0x3c] sm:$0x1] %v1024
        %v1026 = vld [vmem:[#allocation2 + $0x40] sm:$0xf]
        %v1027 = vsel %vm977, %v926, %v1026
        %1028 = vst [vmem:[#allocation2 + $0x40] sm:$0xf] %v1027
        %v1029 = vld [vmem:[#allocation2 + $0x44] sm:$0x1]
        %v1030 = vsel %vm745, %v927, %v1029
        %1031 = vst [vmem:[#allocation2 + $0x44] sm:$0x1] %v1030
        %v1032 = vld [vmem:[#allocation2 + $0x48] sm:$0xf]
        %v1033 = vsel %vm977, %v934, %v1032
        %1034 = vst [vmem:[#allocation2 + $0x48] sm:$0xf] %v1033
        %v1035 = vld [vmem:[#allocation2 + $0x4c] sm:$0x1]
        %v1036 = vsel %vm745, %v935, %v1035
        %1037 = vst [vmem:[#allocation2 + $0x4c] sm:$0x1] %v1036
        %v1038 = vld [vmem:[#allocation2 + $0x50] sm:$0xf]
        %v1039 = vsel %vm977, %v942, %v1038
        %1040 = vst [vmem:[#allocation2 + $0x50] sm:$0xf] %v1039
        %v1041 = vld [vmem:[#allocation2 + $0x54] sm:$0x1]
        %v1042 = vsel %vm745, %v943, %v1041
        %1043 = vst [vmem:[#allocation2 + $0x54] sm:$0x1] %v1042
        %v1044 = vld [vmem:[#allocation2 + $0x58] sm:$0xf]
        %v1045 = vsel %vm977, %v950, %v1044
        %1046 = vst [vmem:[#allocation2 + $0x58] sm:$0xf] %v1045
        %v1047 = vld [vmem:[#allocation2 + $0x5c] sm:$0x1]
        %v1048 = vsel %vm745, %v951, %v1047
        %1049 = vst [vmem:[#allocation2 + $0x5c] sm:$0x1] %v1048
        %v1050 = vld [vmem:[#allocation2] sm:$0xf]
        %v1051 = vld [vmem:[#allocation2 + $0x8] sm:$0xf]
        %v1052 = vld [vmem:[#allocation2 + $0x10] sm:$0xf]
        %v1053 = vld [vmem:[#allocation2 + $0x18] sm:$0xf]
        %v1054 = vld [vmem:[#allocation2 + $0x20] sm:$0xf]
        %v1055 = vld [vmem:[#allocation2 + $0x28] sm:$0xf]
        %v1056 = vld [vmem:[#allocation2 + $0x30] sm:$0xf]
        %v1057 = vld [vmem:[#allocation2 + $0x38] sm:$0xf]
        %v1058 = vld [vmem:[#allocation2 + $0x40] sm:$0xf]
        %v1059 = vld [vmem:[#allocation2 + $0x48] sm:$0xf]
        %v1060 = vld [vmem:[%s3] sm:$0xf]
        %v1061 = vld [vmem:[%s3 + $0x4] sm:$0xf]
        %v1062 = vld [vmem:[%s3 + $0x8] sm:$0xf]
        %v1063 = vld [vmem:[%s3 + $0xc] sm:$0xf]
        %v1064 = vld [vmem:[%s3 + $0x10] sm:$0xf]
        %v1065 = vld [vmem:[%s3 + $0x14] sm:$0xf]
        %v1066 = vld [vmem:[%s3 + $0x18] sm:$0xf]
        %v1067 = vld [vmem:[%s3 + $0x1c] sm:$0xf]
        %v1068 = vld [vmem:[%s3 + $0x20] sm:$0xf]
        %v1069 = vld [vmem:[%s3 + $0x24] sm:$0xf]
        %v1070 = vld [vmem:[%s3 + $0x28] sm:$0xf]
        %v1071 = vld [vmem:[%s3 + $0x2c] sm:$0xf]
        %v1072 = vld [vmem:[%s3 + $0x30] sm:$0xf]
        %v1073 = vld [vmem:[%s3 + $0x34] sm:$0xf]
        %v1074 = vld [vmem:[%s3 + $0x38] sm:$0xf]
        %v1075 = vld [vmem:[%s3 + $0x3c] sm:$0xf]
        %v1076 = vld [vmem:[#allocation2 + $0x4] sm:$0x1]
        %v1077 = vld [vmem:[#allocation2 + $0xc] sm:$0x1]
        %v1078 = vld [vmem:[#allocation2 + $0x14] sm:$0x1]
        %v1079 = vld [vmem:[#allocation2 + $0x1c] sm:$0x1]
        %v1080 = vld [vmem:[#allocation2 + $0x24] sm:$0x1]
        %v1081 = vld [vmem:[#allocation2 + $0x2c] sm:$0x1]
        %v1082 = vld [vmem:[#allocation2 + $0x34] sm:$0x1]
        %v1083 = vld [vmem:[#allocation2 + $0x3c] sm:$0x1]
        %v1084 = vld [vmem:[#allocation2 + $0x44] sm:$0x1]
        %v1085 = vld [vmem:[#allocation2 + $0x4c] sm:$0x1]
        %vm1086 = vsmask.f32 3328
        %vm1087 = vsmask.f32 7440
        %vm1088 = vmor %vm1086, %vm1087
        %v1090 = vshrl.u32 %v1050, 16
        %v1092 = vrot.slane %v1090, 4
        %v1093 = vshll.u32 %v1050, 16
        %v1095 = vrot.slane %v1093, 5
        %v1096 = vor.u32 %v1092, %v1095
        %v1097 = vrot.slane %v1096, 4
        %v1099 = vshll.u32 %v1076, 16
        %v1101 = vrot.slane %v1099, 5
        %v1102 = vsel %vm1088, %v1097, %v1101
        %v1104 = vshrl.u32 %v1051, 16
        %v1106 = vrot.slane %v1104, 4
        %v1107 = vshll.u32 %v1051, 16
        %v1109 = vrot.slane %v1107, 5
        %v1110 = vor.u32 %v1106, %v1109
        %v1111 = vrot.slane %v1110, 4
        %v1113 = vshll.u32 %v1077, 16
        %v1115 = vrot.slane %v1113, 5
        %v1116 = vsel %vm1088, %v1111, %v1115
        %v1118 = vshrl.u32 %v1052, 16
        %v1120 = vrot.slane %v1118, 4
        %v1121 = vshll.u32 %v1052, 16
        %v1123 = vrot.slane %v1121, 5
        %v1124 = vor.u32 %v1120, %v1123
        %v1125 = vrot.slane %v1124, 4
        %v1127 = vshll.u32 %v1078, 16
        %v1129 = vrot.slane %v1127, 5
        %v1130 = vsel %vm1088, %v1125, %v1129
        %v1132 = vshrl.u32 %v1053, 16
        %v1134 = vrot.slane %v1132, 4
        %v1135 = vshll.u32 %v1053, 16
        %v1137 = vrot.slane %v1135, 5
        %v1138 = vor.u32 %v1134, %v1137
        %v1139 = vrot.slane %v1138, 4
        %v1141 = vshll.u32 %v1079, 16
        %v1143 = vrot.slane %v1141, 5
        %v1144 = vsel %vm1088, %v1139, %v1143
        %v1146 = vshrl.u32 %v1054, 16
        %v1148 = vrot.slane %v1146, 4
        %v1149 = vshll.u32 %v1054, 16
        %v1151 = vrot.slane %v1149, 5
        %v1152 = vor.u32 %v1148, %v1151
        %v1153 = vrot.slane %v1152, 4
        %v1155 = vshll.u32 %v1080, 16
        %v1157 = vrot.slane %v1155, 5
        %v1158 = vsel %vm1088, %v1153, %v1157
        %v1160 = vshrl.u32 %v1055, 16
        %v1162 = vrot.slane %v1160, 4
        %v1163 = vshll.u32 %v1055, 16
        %v1165 = vrot.slane %v1163, 5
        %v1166 = vor.u32 %v1162, %v1165
        %v1167 = vrot.slane %v1166, 4
        %v1169 = vshll.u32 %v1081, 16
        %v1171 = vrot.slane %v1169, 5
        %v1172 = vsel %vm1088, %v1167, %v1171
        %v1174 = vshrl.u32 %v1056, 16
        %v1176 = vrot.slane %v1174, 4
        %v1177 = vshll.u32 %v1056, 16
        %v1179 = vrot.slane %v1177, 5
        %v1180 = vor.u32 %v1176, %v1179
        %v1181 = vrot.slane %v1180, 4
        %v1183 = vshll.u32 %v1082, 16
        %v1185 = vrot.slane %v1183, 5
        %v1186 = vsel %vm1088, %v1181, %v1185
        %v1188 = vshrl.u32 %v1057, 16
        %v1190 = vrot.slane %v1188, 4
        %v1191 = vshll.u32 %v1057, 16
        %v1193 = vrot.slane %v1191, 5
        %v1194 = vor.u32 %v1190, %v1193
        %v1195 = vrot.slane %v1194, 4
        %v1197 = vshll.u32 %v1083, 16
        %v1199 = vrot.slane %v1197, 5
        %v1200 = vsel %vm1088, %v1195, %v1199
        %v1202 = vshrl.u32 %v1058, 16
        %v1204 = vrot.slane %v1202, 4
        %v1205 = vshll.u32 %v1058, 16
        %v1207 = vrot.slane %v1205, 5
        %v1208 = vor.u32 %v1204, %v1207
        %v1209 = vrot.slane %v1208, 4
        %v1211 = vshll.u32 %v1084, 16
        %v1213 = vrot.slane %v1211, 5
        %v1214 = vsel %vm1088, %v1209, %v1213
        %v1216 = vshrl.u32 %v1059, 16
        %v1218 = vrot.slane %v1216, 4
        %v1219 = vshll.u32 %v1059, 16
        %v1221 = vrot.slane %v1219, 5
        %v1222 = vor.u32 %v1218, %v1221
        %v1223 = vrot.slane %v1222, 4
        %v1225 = vshll.u32 %v1085, 16
        %v1227 = vrot.slane %v1225, 5
        %v1228 = vsel %vm1088, %v1223, %v1227
        %s1229 = scalar_lea.vmem %s3, 64
        %v1230 = vld [vmem:[%s1229] sm:$0xf]
        %v1231 = vld [vmem:[%s1229 + $0x4] sm:$0xf]
        %v1232 = vld [vmem:[%s1229 + $0x8] sm:$0xf]
        %v1233 = vld [vmem:[%s1229 + $0xc] sm:$0xf]
        %v1234 = vld [vmem:[%s1229 + $0x10] sm:$0xf]
        %v1235 = vld [vmem:[%s1229 + $0x14] sm:$0xf]
        %v1236 = vld [vmem:[%s1229 + $0x18] sm:$0xf]
        %v1237 = vld [vmem:[%s1229 + $0x1c] sm:$0xf]
        %v1238 = vld [vmem:[%s1229 + $0x20] sm:$0xf]
        %v1239 = vld [vmem:[%s1229 + $0x24] sm:$0xf]
        %v1240 = vld [vmem:[%s1229 + $0x28] sm:$0xf]
        %v1241 = vld [vmem:[%s1229 + $0x2c] sm:$0xf]
        %v1242 = vld [vmem:[%s1229 + $0x30] sm:$0xf]
        %v1243 = vld [vmem:[%s1229 + $0x34] sm:$0xf]
        %v1244 = vld [vmem:[%s1229 + $0x38] sm:$0xf]
        %v1245 = vld [vmem:[%s1229 + $0x3c] sm:$0xf]
        %v1246 = vunpack.c.l.b16 %v1102
        %v1247 = vunpack.c.l.b16 %v1116
        %v1248 = vunpack.c.l.b16 %v1130
        %v1249 = vunpack.c.l.b16 %v1144
        %v1250 = vunpack.c.l.b16 %v1158
        %v1251 = vunpack.c.l.b16 %v1172
        %v1252 = vunpack.c.l.b16 %v1186
        %v1253 = vunpack.c.l.b16 %v1200
        %v1254 = vunpack.c.l.b16 %v1214
        %v1255 = vunpack.c.l.b16 %v1228
        %v1256 = vpack.c.b16 %v1247, %v1246
        %v1257 = vpack.c.b16 %v1249, %v1248
        %v1258 = vpack.c.b16 %v1251, %v1250
        %v1259 = vpack.c.b16 %v1253, %v1252
        %v1260 = vpack.c.b16 %v1255, %v1254
        %v1282 = vunpack.c.l.b16 %v1230
        %v1283 = vunpack.c.l.b16 %v1231
        %v1284 = vunpack.c.l.b16 %v1232
        %v1285 = vunpack.c.l.b16 %v1233
        %v1286 = vunpack.c.l.b16 %v1234
        %v1287 = vunpack.c.l.b16 %v1235
        %v1288 = vunpack.c.l.b16 %v1236
        %v1289 = vunpack.c.l.b16 %v1237
        %v1290 = vunpack.c.l.b16 %v1238
        %v1291 = vunpack.c.l.b16 %v1239
        %v1292 = vunpack.c.l.b16 %v1240
        %v1293 = vunpack.c.l.b16 %v1241
        %v1294 = vunpack.c.l.b16 %v1242
        %v1295 = vunpack.c.l.b16 %v1243
        %v1296 = vunpack.c.l.b16 %v1244
        %v1297 = vunpack.c.l.b16 %v1245
        %v1298 = vpack.c.b16 %v1283, %v1282
        %v1299 = vpack.c.b16 %v1285, %v1284
        %v1300 = vpack.c.b16 %v1287, %v1286
        %v1301 = vpack.c.b16 %v1289, %v1288
        %v1302 = vpack.c.b16 %v1291, %v1290
        %v1303 = vpack.c.b16 %v1293, %v1292
        %v1304 = vpack.c.b16 %v1295, %v1294
        %v1305 = vpack.c.b16 %v1297, %v1296
        %1314 = vmatprep.subr.bf16.mxu0 0
        %1315 = vmatpush1.bf16.msra.mxu0 %v1298
        %1316 = vmatprep.subr.bf16.mxu0 0
        %1317 = vmatpush1.bf16.msra.mxu0 %v1299
        %1318 = vmatprep.subr.bf16.mxu0 0
        %1319 = vmatpush1.bf16.msra.mxu0 %v1300
        %1320 = vmatprep.subr.bf16.mxu0 0
        %1321 = vmatpush1.bf16.msra.mxu0 %v1301
        %1322 = vmatprep.subr.bf16.mxu0 0
        %1323 = vmatpush1.bf16.msra.mxu0 %v1302
        %1324 = vmatprep.subr.bf16.mxu0 0
        %1325 = vmatpush1.bf16.msra.mxu0 %v1303
        %1326 = vmatprep.subr.bf16.mxu0 0
        %1327 = vmatpush1.bf16.msra.mxu0 %v1304
        %1328 = vmatprep.subr.bf16.mxu0 0
        %1329 = vmatpush1.bf16.msra.mxu0 %v1305
        %1330 = vmatprep.subr.bf16.mxu0 0
        %1331 = vmatpush1.bf16.msra.mxu0 0
        %1332 = vmatprep.subr.bf16.mxu0 0
        %1333 = vmatpush1.bf16.msra.mxu0 0
        %1334 = vmatprep.subr.bf16.mxu0 0
        %1335 = vmatpush1.bf16.msra.mxu0 0
        %1336 = vmatprep.subr.bf16.mxu0 0
        %1337 = vmatpush1.bf16.msra.mxu0 0
        %1338 = vmatprep.subr.bf16.mxu0 0
        %1339 = vmatpush1.bf16.msra.mxu0 0
        %1340 = vmatprep.subr.bf16.mxu0 0
        %1341 = vmatpush1.bf16.msra.mxu0 0
        %1342 = vmatprep.subr.bf16.mxu0 0
        %1343 = vmatpush1.bf16.msra.mxu0 0
        %1344 = vmatprep.subr.bf16.mxu0 0
        %1345 = vmatpush1.bf16.msra.mxu0 0
        %1346 = vmatprep.mubr.bf16.mxu0 0
        %1347 = vmatmul.mubr.bf16.gmra.mrb[0].mxu0 %v1256
        %v1348 = vpop.f32.mrb[0].mxu0
        %v1349 = vadd.f32 0.0, %v1348
        %v1350 = vpop.f32.mrb[0].mxu0
        %v1351 = vpop.f32.mrb[0].mxu0
        %v1352 = vadd.f32 0.0, %v1351
        %v1353 = vpop.f32.mrb[0].mxu0
        %1354 = vmatprep.mubr.bf16.mxu0 0
        %1355 = vmatmul.mubr.bf16.gmra.mrb[0].mxu0 %v1257
        %v1356 = vpop.f32.mrb[0].mxu0
        %v1357 = vadd.f32 0.0, %v1356
        %v1358 = vpop.f32.mrb[0].mxu0
        %v1359 = vpop.f32.mrb[0].mxu0
        %v1360 = vadd.f32 0.0, %v1359
        %v1361 = vpop.f32.mrb[0].mxu0
        %1362 = vmatprep.mubr.bf16.mxu0 0
        %1363 = vmatmul.mubr.bf16.gmra.mrb[0].mxu0 %v1258
        %v1364 = vpop.f32.mrb[0].mxu0
        %v1365 = vadd.f32 0.0, %v1364
        %v1366 = vpop.f32.mrb[0].mxu0
        %v1367 = vpop.f32.mrb[0].mxu0
        %v1368 = vadd.f32 0.0, %v1367
        %v1369 = vpop.f32.mrb[0].mxu0
        %1370 = vmatprep.mubr.bf16.mxu0 0
        %1371 = vmatmul.mubr.bf16.gmra.mrb[0].mxu0 %v1259
        %v1372 = vpop.f32.mrb[0].mxu0
        %v1373 = vadd.f32 0.0, %v1372
        %v1374 = vpop.f32.mrb[0].mxu0
        %v1375 = vpop.f32.mrb[0].mxu0
        %v1376 = vadd.f32 0.0, %v1375
        %v1377 = vpop.f32.mrb[0].mxu0
        %1378 = vmatprep.mubr.bf16.mxu0 0
        %1379 = vmatmul.mubr.bf16.gmra.mrb[0].mxu0 %v1260
        %v1380 = vpop.f32.mrb[0].mxu0
        %v1381 = vadd.f32 0.0, %v1380
        %v1382 = vpop.f32.mrb[0].mxu0
        %v1383 = vpop.f32.mrb[0].mxu0
        %v1384 = vadd.f32 0.0, %v1383
        %v1385 = vpop.f32.mrb[0].mxu0
        %1386 = vdwg.mxu0
        %v1397 = vunpack.c.l.b16 %v1050
        %v1398 = vunpack.c.l.b16 %v1051
        %v1399 = vunpack.c.l.b16 %v1052
        %v1400 = vunpack.c.l.b16 %v1053
        %v1401 = vunpack.c.l.b16 %v1054
        %v1402 = vunpack.c.l.b16 %v1055
        %v1403 = vunpack.c.l.b16 %v1056
        %v1404 = vunpack.c.l.b16 %v1057
        %v1405 = vunpack.c.l.b16 %v1058
        %v1406 = vunpack.c.l.b16 %v1059
        %v1407 = vpack.c.b16 %v1398, %v1397
        %v1408 = vpack.c.b16 %v1400, %v1399
        %v1409 = vpack.c.b16 %v1402, %v1401
        %v1410 = vpack.c.b16 %v1404, %v1403
        %v1411 = vpack.c.b16 %v1406, %v1405
        %v1433 = vunpack.c.l.b16 %v1060
        %v1434 = vunpack.c.l.b16 %v1061
        %v1435 = vunpack.c.l.b16 %v1062
        %v1436 = vunpack.c.l.b16 %v1063
        %v1437 = vunpack.c.l.b16 %v1064
        %v1438 = vunpack.c.l.b16 %v1065
        %v1439 = vunpack.c.l.b16 %v1066
        %v1440 = vunpack.c.l.b16 %v1067
        %v1441 = vunpack.c.l.b16 %v1068
        %v1442 = vunpack.c.l.b16 %v1069
        %v1443 = vunpack.c.l.b16 %v1070
        %v1444 = vunpack.c.l.b16 %v1071
        %v1445 = vunpack.c.l.b16 %v1072
        %v1446 = vunpack.c.l.b16 %v1073
        %v1447 = vunpack.c.l.b16 %v1074
        %v1448 = vunpack.c.l.b16 %v1075
        %v1449 = vpack.c.b16 %v1434, %v1433
        %v1450 = vpack.c.b16 %v1436, %v1435
        %v1451 = vpack.c.b16 %v1438, %v1437
        %v1452 = vpack.c.b16 %v1440, %v1439
        %v1453 = vpack.c.b16 %v1442, %v1441
        %v1454 = vpack.c.b16 %v1444, %v1443
        %v1455 = vpack.c.b16 %v1446, %v1445
        %v1456 = vpack.c.b16 %v1448, %v1447
        %1465 = vmatprep.subr.bf16.mxu0 0
        %1466 = vmatpush1.bf16.msra.mxu0 %v1449
        %1467 = vmatprep.subr.bf16.mxu0 0
        %1468 = vmatpush1.bf16.msra.mxu0 %v1450
        %1469 = vmatprep.subr.bf16.mxu0 0
        %1470 = vmatpush1.bf16.msra.mxu0 %v1451
        %1471 = vmatprep.subr.bf16.mxu0 0
        %1472 = vmatpush1.bf16.msra.mxu0 %v1452
        %1473 = vmatprep.subr.bf16.mxu0 0
        %1474 = vmatpush1.bf16.msra.mxu0 %v1453
        %1475 = vmatprep.subr.bf16.mxu0 0
        %1476 = vmatpush1.bf16.msra.mxu0 %v1454
        %1477 = vmatprep.subr.bf16.mxu0 0
        %1478 = vmatpush1.bf16.msra.mxu0 %v1455
        %1479 = vmatprep.subr.bf16.mxu0 0
        %1480 = vmatpush1.bf16.msra.mxu0 %v1456
        %1481 = vmatprep.subr.bf16.mxu0 0
        %1482 = vmatpush1.bf16.msra.mxu0 0
        %1483 = vmatprep.subr.bf16.mxu0 0
        %1484 = vmatpush1.bf16.msra.mxu0 0
        %1485 = vmatprep.subr.bf16.mxu0 0
        %1486 = vmatpush1.bf16.msra.mxu0 0
        %1487 = vmatprep.subr.bf16.mxu0 0
        %1488 = vmatpush1.bf16.msra.mxu0 0
        %1489 = vmatprep.subr.bf16.mxu0 0
        %1490 = vmatpush1.bf16.msra.mxu0 0
        %1491 = vmatprep.subr.bf16.mxu0 0
        %1492 = vmatpush1.bf16.msra.mxu0 0
        %1493 = vmatprep.subr.bf16.mxu0 0
        %1494 = vmatpush1.bf16.msra.mxu0 0
        %1495 = vmatprep.subr.bf16.mxu0 0
        %1496 = vmatpush1.bf16.msra.mxu0 0
        %1497 = vmatprep.mubr.bf16.mxu0 0
        %1498 = vmatmul.mubr.bf16.gmra.mrb[0].mxu0 %v1407
        %v1499 = vpop.f32.mrb[0].mxu0
        %v1500 = vadd.f32 %v1349, %v1499
        %v1501 = vpop.f32.mrb[0].mxu0
        %v1502 = vpop.f32.mrb[0].mxu0
        %v1503 = vadd.f32 %v1352, %v1502
        %v1504 = vpop.f32.mrb[0].mxu0
        %1505 = vmatprep.mubr.bf16.mxu0 0
        %1506 = vmatmul.mubr.bf16.gmra.mrb[0].mxu0 %v1408
        %v1507 = vpop.f32.mrb[0].mxu0
        %v1508 = vadd.f32 %v1357, %v1507
        %v1509 = vpop.f32.mrb[0].mxu0
        %v1510 = vpop.f32.mrb[0].mxu0
        %v1511 = vadd.f32 %v1360, %v1510
        %v1512 = vpop.f32.mrb[0].mxu0
        %1513 = vmatprep.mubr.bf16.mxu0 0
        %1514 = vmatmul.mubr.bf16.gmra.mrb[0].mxu0 %v1409
        %v1515 = vpop.f32.mrb[0].mxu0
        %v1516 = vadd.f32 %v1365, %v1515
        %v1517 = vpop.f32.mrb[0].mxu0
        %v1518 = vpop.f32.mrb[0].mxu0
        %v1519 = vadd.f32 %v1368, %v1518
        %v1520 = vpop.f32.mrb[0].mxu0
        %1521 = vmatprep.mubr.bf16.mxu0 0
        %1522 = vmatmul.mubr.bf16.gmra.mrb[0].mxu0 %v1410
        %v1523 = vpop.f32.mrb[0].mxu0
        %v1524 = vadd.f32 %v1373, %v1523
        %v1525 = vpop.f32.mrb[0].mxu0
        %v1526 = vpop.f32.mrb[0].mxu0
        %v1527 = vadd.f32 %v1376, %v1526
        %v1528 = vpop.f32.mrb[0].mxu0
        %1529 = vmatprep.mubr.bf16.mxu0 0
        %1530 = vmatmul.mubr.bf16.gmra.mrb[0].mxu0 %v1411
        %v1531 = vpop.f32.mrb[0].mxu0
        %v1532 = vadd.f32 %v1381, %v1531
        %v1533 = vpop.f32.mrb[0].mxu0
        %v1534 = vpop.f32.mrb[0].mxu0
        %v1535 = vadd.f32 %v1384, %v1534
        %v1536 = vpop.f32.mrb[0].mxu0
        %1537 = vdwg.mxu0
        %v1538 = vld [vmem:[#allocation2] sm:$0xe]
        %v1539 = vld [vmem:[#allocation2 + $0x8] sm:$0xe]
        %v1540 = vld [vmem:[#allocation2 + $0x10] sm:$0xe]
        %v1541 = vld [vmem:[#allocation2 + $0x18] sm:$0xe]
        %v1542 = vld [vmem:[#allocation2 + $0x20] sm:$0xe]
        %v1543 = vld [vmem:[#allocation2 + $0x28] sm:$0xe]
        %v1544 = vld [vmem:[#allocation2 + $0x30] sm:$0xe]
        %v1545 = vld [vmem:[#allocation2 + $0x38] sm:$0xe]
        %v1546 = vld [vmem:[#allocation2 + $0x40] sm:$0xe]
        %v1547 = vld [vmem:[#allocation2 + $0x48] sm:$0xe]
        %vm1568 = vcmask 1042432
        %vm1569 = vcmask 1046532
        %vm1570 = vmor %vm1568, %vm1569
        %v1571 = vrot.slane %v1538, 5
        %v1572 = vrot.slane %v1571, 4
        %v1573 = vrot.slane %v1076, 5
        %v1574 = vsel %vm1570, %v1572, %v1573
        %v1575 = vrot.slane %v1539, 5
        %v1576 = vrot.slane %v1575, 4
        %v1577 = vrot.slane %v1077, 5
        %v1578 = vsel %vm1570, %v1576, %v1577
        %v1579 = vrot.slane %v1540, 5
        %v1580 = vrot.slane %v1579, 4
        %v1581 = vrot.slane %v1078, 5
        %v1582 = vsel %vm1570, %v1580, %v1581
        %v1583 = vrot.slane %v1541, 5
        %v1584 = vrot.slane %v1583, 4
        %v1585 = vrot.slane %v1079, 5
        %v1586 = vsel %vm1570, %v1584, %v1585
        %v1587 = vrot.slane %v1542, 5
        %v1588 = vrot.slane %v1587, 4
        %v1589 = vrot.slane %v1080, 5
        %v1590 = vsel %vm1570, %v1588, %v1589
        %v1591 = vrot.slane %v1543, 5
        %v1592 = vrot.slane %v1591, 4
        %v1593 = vrot.slane %v1081, 5
        %v1594 = vsel %vm1570, %v1592, %v1593
        %v1595 = vrot.slane %v1544, 5
        %v1596 = vrot.slane %v1595, 4
        %v1597 = vrot.slane %v1082, 5
        %v1598 = vsel %vm1570, %v1596, %v1597
        %v1599 = vrot.slane %v1545, 5
        %v1600 = vrot.slane %v1599, 4
        %v1601 = vrot.slane %v1083, 5
        %v1602 = vsel %vm1570, %v1600, %v1601
        %v1603 = vrot.slane %v1546, 5
        %v1604 = vrot.slane %v1603, 4
        %v1605 = vrot.slane %v1084, 5
        %v1606 = vsel %vm1570, %v1604, %v1605
        %v1607 = vrot.slane %v1547, 5
        %v1608 = vrot.slane %v1607, 4
        %v1609 = vrot.slane %v1085, 5
        %v1610 = vsel %vm1570, %v1608, %v1609
        %s1611 = scalar_lea.vmem %s3, 128
        %v1612 = vld [vmem:[%s1611] sm:$0xf]
        %v1613 = vld [vmem:[%s1611 + $0x4] sm:$0xf]
        %v1614 = vld [vmem:[%s1611 + $0x8] sm:$0xf]
        %v1615 = vld [vmem:[%s1611 + $0xc] sm:$0xf]
        %v1616 = vld [vmem:[%s1611 + $0x10] sm:$0xf]
        %v1617 = vld [vmem:[%s1611 + $0x14] sm:$0xf]
        %v1618 = vld [vmem:[%s1611 + $0x18] sm:$0xf]
        %v1619 = vld [vmem:[%s1611 + $0x1c] sm:$0xf]
        %v1620 = vld [vmem:[%s1611 + $0x20] sm:$0xf]
        %v1621 = vld [vmem:[%s1611 + $0x24] sm:$0xf]
        %v1622 = vld [vmem:[%s1611 + $0x28] sm:$0xf]
        %v1623 = vld [vmem:[%s1611 + $0x2c] sm:$0xf]
        %v1624 = vld [vmem:[%s1611 + $0x30] sm:$0xf]
        %v1625 = vld [vmem:[%s1611 + $0x34] sm:$0xf]
        %v1626 = vld [vmem:[%s1611 + $0x38] sm:$0xf]
        %v1627 = vld [vmem:[%s1611 + $0x3c] sm:$0xf]
        %v1628 = vunpack.c.l.b16 %v1574
        %v1629 = vunpack.c.l.b16 %v1578
        %v1630 = vunpack.c.l.b16 %v1582
        %v1631 = vunpack.c.l.b16 %v1586
        %v1632 = vunpack.c.l.b16 %v1590
        %v1633 = vunpack.c.l.b16 %v1594
        %v1634 = vunpack.c.l.b16 %v1598
        %v1635 = vunpack.c.l.b16 %v1602
        %v1636 = vunpack.c.l.b16 %v1606
        %v1637 = vunpack.c.l.b16 %v1610
        %v1638 = vpack.c.b16 %v1629, %v1628
        %v1639 = vpack.c.b16 %v1631, %v1630
        %v1640 = vpack.c.b16 %v1633, %v1632
        %v1641 = vpack.c.b16 %v1635, %v1634
        %v1642 = vpack.c.b16 %v1637, %v1636
        %v1664 = vunpack.c.l.b16 %v1612
        %v1665 = vunpack.c.l.b16 %v1613
        %v1666 = vunpack.c.l.b16 %v1614
        %v1667 = vunpack.c.l.b16 %v1615
        %v1668 = vunpack.c.l.b16 %v1616
        %v1669 = vunpack.c.l.b16 %v1617
        %v1670 = vunpack.c.l.b16 %v1618
        %v1671 = vunpack.c.l.b16 %v1619
        %v1672 = vunpack.c.l.b16 %v1620
        %v1673 = vunpack.c.l.b16 %v1621
        %v1674 = vunpack.c.l.b16 %v1622
        %v1675 = vunpack.c.l.b16 %v1623
        %v1676 = vunpack.c.l.b16 %v1624
        %v1677 = vunpack.c.l.b16 %v1625
        %v1678 = vunpack.c.l.b16 %v1626
        %v1679 = vunpack.c.l.b16 %v1627
        %v1680 = vpack.c.b16 %v1665, %v1664
        %v1681 = vpack.c.b16 %v1667, %v1666
        %v1682 = vpack.c.b16 %v1669, %v1668
        %v1683 = vpack.c.b16 %v1671, %v1670
        %v1684 = vpack.c.b16 %v1673, %v1672
        %v1685 = vpack.c.b16 %v1675, %v1674
        %v1686 = vpack.c.b16 %v1677, %v1676
        %v1687 = vpack.c.b16 %v1679, %v1678
        %1696 = vmatprep.subr.bf16.mxu0 0
        %1697 = vmatpush1.bf16.msra.mxu0 %v1680
        %1698 = vmatprep.subr.bf16.mxu0 0
        %1699 = vmatpush1.bf16.msra.mxu0 %v1681
        %1700 = vmatprep.subr.bf16.mxu0 0
        %1701 = vmatpush1.bf16.msra.mxu0 %v1682
        %1702 = vmatprep.subr.bf16.mxu0 0
        %1703 = vmatpush1.bf16.msra.mxu0 %v1683
        %1704 = vmatprep.subr.bf16.mxu0 0
        %1705 = vmatpush1.bf16.msra.mxu0 %v1684
        %1706 = vmatprep.subr.bf16.mxu0 0
        %1707 = vmatpush1.bf16.msra.mxu0 %v1685
        %1708 = vmatprep.subr.bf16.mxu0 0
        %1709 = vmatpush1.bf16.msra.mxu0 %v1686
        %1710 = vmatprep.subr.bf16.mxu0 0
        %1711 = vmatpush1.bf16.msra.mxu0 %v1687
        %1712 = vmatprep.subr.bf16.mxu0 0
        %1713 = vmatpush1.bf16.msra.mxu0 0
        %1714 = vmatprep.subr.bf16.mxu0 0
        %1715 = vmatpush1.bf16.msra.mxu0 0
        %1716 = vmatprep.subr.bf16.mxu0 0
        %1717 = vmatpush1.bf16.msra.mxu0 0
        %1718 = vmatprep.subr.bf16.mxu0 0
        %1719 = vmatpush1.bf16.msra.mxu0 0
        %1720 = vmatprep.subr.bf16.mxu0 0
        %1721 = vmatpush1.bf16.msra.mxu0 0
        %1722 = vmatprep.subr.bf16.mxu0 0
        %1723 = vmatpush1.bf16.msra.mxu0 0
        %1724 = vmatprep.subr.bf16.mxu0 0
        %1725 = vmatpush1.bf16.msra.mxu0 0
        %1726 = vmatprep.subr.bf16.mxu0 0
        %1727 = vmatpush1.bf16.msra.mxu0 0
        %1728 = vmatprep.mubr.bf16.mxu0 0
        %1729 = vmatmul.mubr.bf16.gmra.mrb[0].mxu0 %v1638
        %v1730 = vpop.f32.mrb[0].mxu0
        %v1731 = vadd.f32 0.0, %v1730
        %v1732 = vpop.f32.mrb[0].mxu0
        %v1733 = vpop.f32.mrb[0].mxu0
        %v1734 = vadd.f32 0.0, %v1733
        %v1735 = vpop.f32.mrb[0].mxu0
        %1736 = vmatprep.mubr.bf16.mxu0 0
        %1737 = vmatmul.mubr.bf16.gmra.mrb[0].mxu0 %v1639
        %v1738 = vpop.f32.mrb[0].mxu0
        %v1739 = vadd.f32 0.0, %v1738
        %v1740 = vpop.f32.mrb[0].mxu0
        %v1741 = vpop.f32.mrb[0].mxu0
        %v1742 = vadd.f32 0.0, %v1741
        %v1743 = vpop.f32.mrb[0].mxu0
        %1744 = vmatprep.mubr.bf16.mxu0 0
        %1745 = vmatmul.mubr.bf16.gmra.mrb[0].mxu0 %v1640
        %v1746 = vpop.f32.mrb[0].mxu0
        %v1747 = vadd.f32 0.0, %v1746
        %v1748 = vpop.f32.mrb[0].mxu0
        %v1749 = vpop.f32.mrb[0].mxu0
        %v1750 = vadd.f32 0.0, %v1749
        %v1751 = vpop.f32.mrb[0].mxu0
        %1752 = vmatprep.mubr.bf16.mxu0 0
        %1753 = vmatmul.mubr.bf16.gmra.mrb[0].mxu0 %v1641
        %v1754 = vpop.f32.mrb[0].mxu0
        %v1755 = vadd.f32 0.0, %v1754
        %v1756 = vpop.f32.mrb[0].mxu0
        %v1757 = vpop.f32.mrb[0].mxu0
        %v1758 = vadd.f32 0.0, %v1757
        %v1759 = vpop.f32.mrb[0].mxu0
        %1760 = vmatprep.mubr.bf16.mxu0 0
        %1761 = vmatmul.mubr.bf16.gmra.mrb[0].mxu0 %v1642
        %v1762 = vpop.f32.mrb[0].mxu0
        %v1763 = vadd.f32 0.0, %v1762
        %v1764 = vpop.f32.mrb[0].mxu0
        %v1765 = vpop.f32.mrb[0].mxu0
        %v1766 = vadd.f32 0.0, %v1765
        %v1767 = vpop.f32.mrb[0].mxu0
        %1768 = vdwg.mxu0
        %v1769 = vadd.f32 %v1500, %v1731
        %v1770 = vadd.f32 %v1503, %v1734
        %v1771 = vadd.f32 %v1508, %v1739
        %v1772 = vadd.f32 %v1511, %v1742
        %v1773 = vadd.f32 %v1516, %v1747
        %v1774 = vadd.f32 %v1519, %v1750
        %v1775 = vadd.f32 %v1524, %v1755
        %v1776 = vadd.f32 %v1527, %v1758
        %v1777 = vadd.f32 %v1532, %v1763
        %v1778 = vadd.f32 %v1535, %v1766
        %s1779 = scalar_lea.vmem [#allocation2], 8
        %v1780 = vld [vmem:[%s1779] sm:$0xf]
        %v1781 = vld [vmem:[%s1779 + $0x8] sm:$0xf]
        %v1782 = vld [vmem:[%s1779 + $0x10] sm:$0xf]
        %v1783 = vld [vmem:[%s1779 + $0x18] sm:$0xf]
        %v1784 = vld [vmem:[%s1779 + $0x20] sm:$0xf]
        %v1785 = vld [vmem:[%s1779 + $0x28] sm:$0xf]
        %v1786 = vld [vmem:[%s1779 + $0x30] sm:$0xf]
        %v1787 = vld [vmem:[%s1779 + $0x38] sm:$0xf]
        %v1788 = vld [vmem:[%s1779 + $0x40] sm:$0xf]
        %v1789 = vld [vmem:[%s1779 + $0x48] sm:$0xf]
        %s1790 = scalar_lea.vmem %s3, 192
        %v1791 = vld [vmem:[%s1790] sm:$0xf]
        %v1792 = vld [vmem:[%s1790 + $0x4] sm:$0xf]
        %v1793 = vld [vmem:[%s1790 + $0x8] sm:$0xf]
        %v1794 = vld [vmem:[%s1790 + $0xc] sm:$0xf]
        %v1795 = vld [vmem:[%s1790 + $0x10] sm:$0xf]
        %v1796 = vld [vmem:[%s1790 + $0x14] sm:$0xf]
        %v1797 = vld [vmem:[%s1790 + $0x18] sm:$0xf]
        %v1798 = vld [vmem:[%s1790 + $0x1c] sm:$0xf]
        %v1799 = vld [vmem:[%s1790 + $0x20] sm:$0xf]
        %v1800 = vld [vmem:[%s1790 + $0x24] sm:$0xf]
        %v1801 = vld [vmem:[%s1790 + $0x28] sm:$0xf]
        %v1802 = vld [vmem:[%s1790 + $0x2c] sm:$0xf]
        %v1803 = vld [vmem:[%s1790 + $0x30] sm:$0xf]
        %v1804 = vld [vmem:[%s1790 + $0x34] sm:$0xf]
        %v1805 = vld [vmem:[%s1790 + $0x38] sm:$0xf]
        %v1806 = vld [vmem:[%s1790 + $0x3c] sm:$0xf]
        %v1817 = vunpack.c.l.b16 %v1780
        %v1818 = vunpack.c.l.b16 %v1781
        %v1819 = vunpack.c.l.b16 %v1782
        %v1820 = vunpack.c.l.b16 %v1783
        %v1821 = vunpack.c.l.b16 %v1784
        %v1822 = vunpack.c.l.b16 %v1785
        %v1823 = vunpack.c.l.b16 %v1786
        %v1824 = vunpack.c.l.b16 %v1787
        %v1825 = vunpack.c.l.b16 %v1788
        %v1826 = vunpack.c.l.b16 %v1789
        %v1827 = vpack.c.b16 %v1818, %v1817
        %v1828 = vpack.c.b16 %v1820, %v1819
        %v1829 = vpack.c.b16 %v1822, %v1821
        %v1830 = vpack.c.b16 %v1824, %v1823
        %v1831 = vpack.c.b16 %v1826, %v1825
        %v1853 = vunpack.c.l.b16 %v1791
        %v1854 = vunpack.c.l.b16 %v1792
        %v1855 = vunpack.c.l.b16 %v1793
        %v1856 = vunpack.c.l.b16 %v1794
        %v1857 = vunpack.c.l.b16 %v1795
        %v1858 = vunpack.c.l.b16 %v1796
        %v1859 = vunpack.c.l.b16 %v1797
        %v1860 = vunpack.c.l.b16 %v1798
        %v1861 = vunpack.c.l.b16 %v1799
        %v1862 = vunpack.c.l.b16 %v1800
        %v1863 = vunpack.c.l.b16 %v1801
        %v1864 = vunpack.c.l.b16 %v1802
        %v1865 = vunpack.c.l.b16 %v1803
        %v1866 = vunpack.c.l.b16 %v1804
        %v1867 = vunpack.c.l.b16 %v1805
        %v1868 = vunpack.c.l.b16 %v1806
        %v1869 = vpack.c.b16 %v1854, %v1853
        %v1870 = vpack.c.b16 %v1856, %v1855
        %v1871 = vpack.c.b16 %v1858, %v1857
        %v1872 = vpack.c.b16 %v1860, %v1859
        %v1873 = vpack.c.b16 %v1862, %v1861
        %v1874 = vpack.c.b16 %v1864, %v1863
        %v1875 = vpack.c.b16 %v1866, %v1865
        %v1876 = vpack.c.b16 %v1868, %v1867
        %1885 = vmatprep.subr.bf16.mxu0 0
        %1886 = vmatpush1.bf16.msra.mxu0 %v1869
        %1887 = vmatprep.subr.bf16.mxu0 0
        %1888 = vmatpush1.bf16.msra.mxu0 %v1870
        %1889 = vmatprep.subr.bf16.mxu0 0
        %1890 = vmatpush1.bf16.msra.mxu0 %v1871
        %1891 = vmatprep.subr.bf16.mxu0 0
        %1892 = vmatpush1.bf16.msra.mxu0 %v1872
        %1893 = vmatprep.subr.bf16.mxu0 0
        %1894 = vmatpush1.bf16.msra.mxu0 %v1873
        %1895 = vmatprep.subr.bf16.mxu0 0
        %1896 = vmatpush1.bf16.msra.mxu0 %v1874
        %1897 = vmatprep.subr.bf16.mxu0 0
        %1898 = vmatpush1.bf16.msra.mxu0 %v1875
        %1899 = vmatprep.subr.bf16.mxu0 0
        %1900 = vmatpush1.bf16.msra.mxu0 %v1876
        %1901 = vmatprep.subr.bf16.mxu0 0
        %1902 = vmatpush1.bf16.msra.mxu0 0
        %1903 = vmatprep.subr.bf16.mxu0 0
        %1904 = vmatpush1.bf16.msra.mxu0 0
        %1905 = vmatprep.subr.bf16.mxu0 0
        %1906 = vmatpush1.bf16.msra.mxu0 0
        %1907 = vmatprep.subr.bf16.mxu0 0
        %1908 = vmatpush1.bf16.msra.mxu0 0
        %1909 = vmatprep.subr.bf16.mxu0 0
        %1910 = vmatpush1.bf16.msra.mxu0 0
        %1911 = vmatprep.subr.bf16.mxu0 0
        %1912 = vmatpush1.bf16.msra.mxu0 0
        %1913 = vmatprep.subr.bf16.mxu0 0
        %1914 = vmatpush1.bf16.msra.mxu0 0
        %1915 = vmatprep.subr.bf16.mxu0 0
        %1916 = vmatpush1.bf16.msra.mxu0 0
        %1917 = vmatprep.mubr.bf16.mxu0 0
        %1918 = vmatmul.mubr.bf16.gmra.mrb[0].mxu0 %v1827
        %v1919 = vpop.f32.mrb[0].mxu0
        %v1920 = vadd.f32 0.0, %v1919
        %v1921 = vpop.f32.mrb[0].mxu0
        %v1922 = vpop.f32.mrb[0].mxu0
        %v1923 = vadd.f32 0.0, %v1922
        %v1924 = vpop.f32.mrb[0].mxu0
        %1925 = vmatprep.mubr.bf16.mxu0 0
        %1926 = vmatmul.mubr.bf16.gmra.mrb[0].mxu0 %v1828
        %v1927 = vpop.f32.mrb[0].mxu0
        %v1928 = vadd.f32 0.0, %v1927
        %v1929 = vpop.f32.mrb[0].mxu0
        %v1930 = vpop.f32.mrb[0].mxu0
        %v1931 = vadd.f32 0.0, %v1930
        %v1932 = vpop.f32.mrb[0].mxu0
        %1933 = vmatprep.mubr.bf16.mxu0 0
        %1934 = vmatmul.mubr.bf16.gmra.mrb[0].mxu0 %v1829
        %v1935 = vpop.f32.mrb[0].mxu0
        %v1936 = vadd.f32 0.0, %v1935
        %v1937 = vpop.f32.mrb[0].mxu0
        %v1938 = vpop.f32.mrb[0].mxu0
        %v1939 = vadd.f32 0.0, %v1938
        %v1940 = vpop.f32.mrb[0].mxu0
        %1941 = vmatprep.mubr.bf16.mxu0 0
        %1942 = vmatmul.mubr.bf16.gmra.mrb[0].mxu0 %v1830
        %v1943 = vpop.f32.mrb[0].mxu0
        %v1944 = vadd.f32 0.0, %v1943
        %v1945 = vpop.f32.mrb[0].mxu0
        %v1946 = vpop.f32.mrb[0].mxu0
        %v1947 = vadd.f32 0.0, %v1946
        %v1948 = vpop.f32.mrb[0].mxu0
        %1949 = vmatprep.mubr.bf16.mxu0 0
        %1950 = vmatmul.mubr.bf16.gmra.mrb[0].mxu0 %v1831
        %v1951 = vpop.f32.mrb[0].mxu0
        %v1952 = vadd.f32 0.0, %v1951
        %v1953 = vpop.f32.mrb[0].mxu0
        %v1954 = vpop.f32.mrb[0].mxu0
        %v1955 = vadd.f32 0.0, %v1954
        %v1956 = vpop.f32.mrb[0].mxu0
        %1957 = vdwg.mxu0
        %v1958 = vadd.f32 %v1769, %v1920
        %v1959 = vadd.f32 %v1770, %v1923
        %v1960 = vadd.f32 %v1771, %v1928
        %v1961 = vadd.f32 %v1772, %v1931
        %v1962 = vadd.f32 %v1773, %v1936
        %v1963 = vadd.f32 %v1774, %v1939
        %v1964 = vadd.f32 %v1775, %v1944
        %v1965 = vadd.f32 %v1776, %v1947
        %v1966 = vadd.f32 %v1777, %v1952
        %v1967 = vadd.f32 %v1778, %v1955
        %v1968 = vld [vmem:[%s1779] sm:$0xf]
        %v1969 = vld [vmem:[%s1779 + $0x4] sm:$0x1]
        %v1970 = vld [vmem:[%s1779 + $0x8] sm:$0xf]
        %v1971 = vld [vmem:[%s1779 + $0xc] sm:$0x1]
        %v1972 = vld [vmem:[%s1779 + $0x10] sm:$0xf]
        %v1973 = vld [vmem:[%s1779 + $0x14] sm:$0x1]
        %v1974 = vld [vmem:[%s1779 + $0x18] sm:$0xf]
        %v1975 = vld [vmem:[%s1779 + $0x1c] sm:$0x1]
        %v1976 = vld [vmem:[%s1779 + $0x20] sm:$0xf]
        %v1977 = vld [vmem:[%s1779 + $0x24] sm:$0x1]
        %v1978 = vld [vmem:[%s1779 + $0x28] sm:$0xf]
        %v1979 = vld [vmem:[%s1779 + $0x2c] sm:$0x1]
        %v1980 = vld [vmem:[%s1779 + $0x30] sm:$0xf]
        %v1981 = vld [vmem:[%s1779 + $0x34] sm:$0x1]
        %v1982 = vld [vmem:[%s1779 + $0x38] sm:$0xf]
        %v1983 = vld [vmem:[%s1779 + $0x3c] sm:$0x1]
        %v1984 = vld [vmem:[%s1779 + $0x40] sm:$0xf]
        %v1985 = vld [vmem:[%s1779 + $0x44] sm:$0x1]
        %v1986 = vld [vmem:[%s1779 + $0x48] sm:$0xf]
        %v1987 = vld [vmem:[%s1779 + $0x4c] sm:$0x1]
        %v1989 = vshrl.u32 %v1968, 16
        %v1991 = vrot.slane %v1989, 4
        %v1992 = vshll.u32 %v1968, 16
        %v1994 = vrot.slane %v1992, 5
        %v1995 = vor.u32 %v1991, %v1994
        %v1996 = vrot.slane %v1995, 4
        %v1998 = vshll.u32 %v1969, 16
        %v2000 = vrot.slane %v1998, 5
        %v2001 = vsel %vm1088, %v1996, %v2000
        %v2003 = vshrl.u32 %v1970, 16
        %v2005 = vrot.slane %v2003, 4
        %v2006 = vshll.u32 %v1970, 16
        %v2008 = vrot.slane %v2006, 5
        %v2009 = vor.u32 %v2005, %v2008
        %v2010 = vrot.slane %v2009, 4
        %v2012 = vshll.u32 %v1971, 16
        %v2014 = vrot.slane %v2012, 5
        %v2015 = vsel %vm1088, %v2010, %v2014
        %v2017 = vshrl.u32 %v1972, 16
        %v2019 = vrot.slane %v2017, 4
        %v2020 = vshll.u32 %v1972, 16
        %v2022 = vrot.slane %v2020, 5
        %v2023 = vor.u32 %v2019, %v2022
        %v2024 = vrot.slane %v2023, 4
        %v2026 = vshll.u32 %v1973, 16
        %v2028 = vrot.slane %v2026, 5
        %v2029 = vsel %vm1088, %v2024, %v2028
        %v2031 = vshrl.u32 %v1974, 16
        %v2033 = vrot.slane %v2031, 4
        %v2034 = vshll.u32 %v1974, 16
        %v2036 = vrot.slane %v2034, 5
        %v2037 = vor.u32 %v2033, %v2036
        %v2038 = vrot.slane %v2037, 4
        %v2040 = vshll.u32 %v1975, 16
        %v2042 = vrot.slane %v2040, 5
        %v2043 = vsel %vm1088, %v2038, %v2042
        %v2045 = vshrl.u32 %v1976, 16
        %v2047 = vrot.slane %v2045, 4
        %v2048 = vshll.u32 %v1976, 16
        %v2050 = vrot.slane %v2048, 5
        %v2051 = vor.u32 %v2047, %v2050
        %v2052 = vrot.slane %v2051, 4
        %v2054 = vshll.u32 %v1977, 16
        %v2056 = vrot.slane %v2054, 5
        %v2057 = vsel %vm1088, %v2052, %v2056
        %v2059 = vshrl.u32 %v1978, 16
        %v2061 = vrot.slane %v2059, 4
        %v2062 = vshll.u32 %v1978, 16
        %v2064 = vrot.slane %v2062, 5
        %v2065 = vor.u32 %v2061, %v2064
        %v2066 = vrot.slane %v2065, 4
        %v2068 = vshll.u32 %v1979, 16
        %v2070 = vrot.slane %v2068, 5
        %v2071 = vsel %vm1088, %v2066, %v2070
        %v2073 = vshrl.u32 %v1980, 16
        %v2075 = vrot.slane %v2073, 4
        %v2076 = vshll.u32 %v1980, 16
        %v2078 = vrot.slane %v2076, 5
        %v2079 = vor.u32 %v2075, %v2078
        %v2080 = vrot.slane %v2079, 4
        %v2082 = vshll.u32 %v1981, 16
        %v2084 = vrot.slane %v2082, 5
        %v2085 = vsel %vm1088, %v2080, %v2084
        %v2087 = vshrl.u32 %v1982, 16
        %v2089 = vrot.slane %v2087, 4
        %v2090 = vshll.u32 %v1982, 16
        %v2092 = vrot.slane %v2090, 5
        %v2093 = vor.u32 %v2089, %v2092
        %v2094 = vrot.slane %v2093, 4
        %v2096 = vshll.u32 %v1983, 16
        %v2098 = vrot.slane %v2096, 5
        %v2099 = vsel %vm1088, %v2094, %v2098
        %v2101 = vshrl.u32 %v1984, 16
        %v2103 = vrot.slane %v2101, 4
        %v2104 = vshll.u32 %v1984, 16
        %v2106 = vrot.slane %v2104, 5
        %v2107 = vor.u32 %v2103, %v2106
        %v2108 = vrot.slane %v2107, 4
        %v2110 = vshll.u32 %v1985, 16
        %v2112 = vrot.slane %v2110, 5
        %v2113 = vsel %vm1088, %v2108, %v2112
        %v2115 = vshrl.u32 %v1986, 16
        %v2117 = vrot.slane %v2115, 4
        %v2118 = vshll.u32 %v1986, 16
        %v2120 = vrot.slane %v2118, 5
        %v2121 = vor.u32 %v2117, %v2120
        %v2122 = vrot.slane %v2121, 4
        %v2124 = vshll.u32 %v1987, 16
        %v2126 = vrot.slane %v2124, 5
        %v2127 = vsel %vm1088, %v2122, %v2126
        %s2128 = scalar_lea.vmem %s3, 256
        %v2129 = vld [vmem:[%s2128] sm:$0xf]
        %v2130 = vld [vmem:[%s2128 + $0x4] sm:$0xf]
        %v2131 = vld [vmem:[%s2128 + $0x8] sm:$0xf]
        %v2132 = vld [vmem:[%s2128 + $0xc] sm:$0xf]
        %v2133 = vld [vmem:[%s2128 + $0x10] sm:$0xf]
        %v2134 = vld [vmem:[%s2128 + $0x14] sm:$0xf]
        %v2135 = vld [vmem:[%s2128 + $0x18] sm:$0xf]
        %v2136 = vld [vmem:[%s2128 + $0x1c] sm:$0xf]
        %v2137 = vld [vmem:[%s2128 + $0x20] sm:$0xf]
        %v2138 = vld [vmem:[%s2128 + $0x24] sm:$0xf]
        %v2139 = vld [vmem:[%s2128 + $0x28] sm:$0xf]
        %v2140 = vld [vmem:[%s2128 + $0x2c] sm:$0xf]
        %v2141 = vld [vmem:[%s2128 + $0x30] sm:$0xf]
        %v2142 = vld [vmem:[%s2128 + $0x34] sm:$0xf]
        %v2143 = vld [vmem:[%s2128 + $0x38] sm:$0xf]
        %v2144 = vld [vmem:[%s2128 + $0x3c] sm:$0xf]
        %v2145 = vunpack.c.l.b16 %v2001
        %v2146 = vunpack.c.l.b16 %v2015
        %v2147 = vunpack.c.l.b16 %v2029
        %v2148 = vunpack.c.l.b16 %v2043
        %v2149 = vunpack.c.l.b16 %v2057
        %v2150 = vunpack.c.l.b16 %v2071
        %v2151 = vunpack.c.l.b16 %v2085
        %v2152 = vunpack.c.l.b16 %v2099
        %v2153 = vunpack.c.l.b16 %v2113
        %v2154 = vunpack.c.l.b16 %v2127
        %v2155 = vpack.c.b16 %v2146, %v2145
        %v2156 = vpack.c.b16 %v2148, %v2147
        %v2157 = vpack.c.b16 %v2150, %v2149
        %v2158 = vpack.c.b16 %v2152, %v2151
        %v2159 = vpack.c.b16 %v2154, %v2153
        %v2181 = vunpack.c.l.b16 %v2129
        %v2182 = vunpack.c.l.b16 %v2130
        %v2183 = vunpack.c.l.b16 %v2131
        %v2184 = vunpack.c.l.b16 %v2132
        %v2185 = vunpack.c.l.b16 %v2133
        %v2186 = vunpack.c.l.b16 %v2134
        %v2187 = vunpack.c.l.b16 %v2135
        %v2188 = vunpack.c.l.b16 %v2136
        %v2189 = vunpack.c.l.b16 %v2137
        %v2190 = vunpack.c.l.b16 %v2138
        %v2191 = vunpack.c.l.b16 %v2139
        %v2192 = vunpack.c.l.b16 %v2140
        %v2193 = vunpack.c.l.b16 %v2141
        %v2194 = vunpack.c.l.b16 %v2142
        %v2195 = vunpack.c.l.b16 %v2143
        %v2196 = vunpack.c.l.b16 %v2144
        %v2197 = vpack.c.b16 %v2182, %v2181
        %v2198 = vpack.c.b16 %v2184, %v2183
        %v2199 = vpack.c.b16 %v2186, %v2185
        %v2200 = vpack.c.b16 %v2188, %v2187
        %v2201 = vpack.c.b16 %v2190, %v2189
        %v2202 = vpack.c.b16 %v2192, %v2191
        %v2203 = vpack.c.b16 %v2194, %v2193
        %v2204 = vpack.c.b16 %v2196, %v2195
        %2213 = vmatprep.subr.bf16.mxu0 0
        %2214 = vmatpush1.bf16.msra.mxu0 %v2197
        %2215 = vmatprep.subr.bf16.mxu0 0
        %2216 = vmatpush1.bf16.msra.mxu0 %v2198
        %2217 = vmatprep.subr.bf16.mxu0 0
        %2218 = vmatpush1.bf16.msra.mxu0 %v2199
        %2219 = vmatprep.subr.bf16.mxu0 0
        %2220 = vmatpush1.bf16.msra.mxu0 %v2200
        %2221 = vmatprep.subr.bf16.mxu0 0
        %2222 = vmatpush1.bf16.msra.mxu0 %v2201
        %2223 = vmatprep.subr.bf16.mxu0 0
        %2224 = vmatpush1.bf16.msra.mxu0 %v2202
        %2225 = vmatprep.subr.bf16.mxu0 0
        %2226 = vmatpush1.bf16.msra.mxu0 %v2203
        %2227 = vmatprep.subr.bf16.mxu0 0
        %2228 = vmatpush1.bf16.msra.mxu0 %v2204
        %2229 = vmatprep.subr.bf16.mxu0 0
        %2230 = vmatpush1.bf16.msra.mxu0 0
        %2231 = vmatprep.subr.bf16.mxu0 0
        %2232 = vmatpush1.bf16.msra.mxu0 0
        %2233 = vmatprep.subr.bf16.mxu0 0
        %2234 = vmatpush1.bf16.msra.mxu0 0
        %2235 = vmatprep.subr.bf16.mxu0 0
        %2236 = vmatpush1.bf16.msra.mxu0 0
        %2237 = vmatprep.subr.bf16.mxu0 0
        %2238 = vmatpush1.bf16.msra.mxu0 0
        %2239 = vmatprep.subr.bf16.mxu0 0
        %2240 = vmatpush1.bf16.msra.mxu0 0
        %2241 = vmatprep.subr.bf16.mxu0 0
        %2242 = vmatpush1.bf16.msra.mxu0 0
        %2243 = vmatprep.subr.bf16.mxu0 0
        %2244 = vmatpush1.bf16.msra.mxu0 0
        %2245 = vmatprep.mubr.bf16.mxu0 0
        %2246 = vmatmul.mubr.bf16.gmra.mrb[0].mxu0 %v2155
        %v2247 = vpop.f32.mrb[0].mxu0
        %v2248 = vadd.f32 0.0, %v2247
        %v2249 = vpop.f32.mrb[0].mxu0
        %v2250 = vpop.f32.mrb[0].mxu0
        %v2251 = vadd.f32 0.0, %v2250
        %v2252 = vpop.f32.mrb[0].mxu0
        %2253 = vmatprep.mubr.bf16.mxu0 0
        %2254 = vmatmul.mubr.bf16.gmra.mrb[0].mxu0 %v2156
        %v2255 = vpop.f32.mrb[0].mxu0
        %v2256 = vadd.f32 0.0, %v2255
        %v2257 = vpop.f32.mrb[0].mxu0
        %v2258 = vpop.f32.mrb[0].mxu0
        %v2259 = vadd.f32 0.0, %v2258
        %v2260 = vpop.f32.mrb[0].mxu0
        %2261 = vmatprep.mubr.bf16.mxu0 0
        %2262 = vmatmul.mubr.bf16.gmra.mrb[0].mxu0 %v2157
        %v2263 = vpop.f32.mrb[0].mxu0
        %v2264 = vadd.f32 0.0, %v2263
        %v2265 = vpop.f32.mrb[0].mxu0
        %v2266 = vpop.f32.mrb[0].mxu0
        %v2267 = vadd.f32 0.0, %v2266
        %v2268 = vpop.f32.mrb[0].mxu0
        %2269 = vmatprep.mubr.bf16.mxu0 0
        %2270 = vmatmul.mubr.bf16.gmra.mrb[0].mxu0 %v2158
        %v2271 = vpop.f32.mrb[0].mxu0
        %v2272 = vadd.f32 0.0, %v2271
        %v2273 = vpop.f32.mrb[0].mxu0
        %v2274 = vpop.f32.mrb[0].mxu0
        %v2275 = vadd.f32 0.0, %v2274
        %v2276 = vpop.f32.mrb[0].mxu0
        %2277 = vmatprep.mubr.bf16.mxu0 0
        %2278 = vmatmul.mubr.bf16.gmra.mrb[0].mxu0 %v2159
        %v2279 = vpop.f32.mrb[0].mxu0
        %v2280 = vadd.f32 0.0, %v2279
        %v2281 = vpop.f32.mrb[0].mxu0
        %v2282 = vpop.f32.mrb[0].mxu0
        %v2283 = vadd.f32 0.0, %v2282
        %v2284 = vpop.f32.mrb[0].mxu0
        %2285 = vdwg.mxu0
        %v2286 = vadd.f32 %v1958, %v2248
        %v2287 = vadd.f32 %v1959, %v2251
        %v2288 = vadd.f32 %v1960, %v2256
        %v2289 = vadd.f32 %v1961, %v2259
        %v2290 = vadd.f32 %v1962, %v2264
        %v2291 = vadd.f32 %v1963, %v2267
        %v2292 = vadd.f32 %v1964, %v2272
        %v2293 = vadd.f32 %v1965, %v2275
        %v2294 = vadd.f32 %v1966, %v2280
        %v2295 = vadd.f32 %v1967, %v2283
        %v2296 = vld [vmem:[%s1779] sm:$0xe]
        %v2297 = vld [vmem:[%s1779 + $0x8] sm:$0xe]
        %v2298 = vld [vmem:[%s1779 + $0x10] sm:$0xe]
        %v2299 = vld [vmem:[%s1779 + $0x18] sm:$0xe]
        %v2300 = vld [vmem:[%s1779 + $0x20] sm:$0xe]
        %v2301 = vld [vmem:[%s1779 + $0x28] sm:$0xe]
        %v2302 = vld [vmem:[%s1779 + $0x30] sm:$0xe]
        %v2303 = vld [vmem:[%s1779 + $0x38] sm:$0xe]
        %v2304 = vld [vmem:[%s1779 + $0x40] sm:$0xe]
        %v2305 = vld [vmem:[%s1779 + $0x48] sm:$0xe]
        %v2326 = vrot.slane %v2296, 5
        %v2327 = vrot.slane %v2326, 4
        %v2328 = vrot.slane %v1969, 5
        %v2329 = vsel %vm1570, %v2327, %v2328
        %v2330 = vrot.slane %v2297, 5
        %v2331 = vrot.slane %v2330, 4
        %v2332 = vrot.slane %v1971, 5
        %v2333 = vsel %vm1570, %v2331, %v2332
        %v2334 = vrot.slane %v2298, 5
        %v2335 = vrot.slane %v2334, 4
        %v2336 = vrot.slane %v1973, 5
        %v2337 = vsel %vm1570, %v2335, %v2336
        %v2338 = vrot.slane %v2299, 5
        %v2339 = vrot.slane %v2338, 4
        %v2340 = vrot.slane %v1975, 5
        %v2341 = vsel %vm1570, %v2339, %v2340
        %v2342 = vrot.slane %v2300, 5
        %v2343 = vrot.slane %v2342, 4
        %v2344 = vrot.slane %v1977, 5
        %v2345 = vsel %vm1570, %v2343, %v2344
        %v2346 = vrot.slane %v2301, 5
        %v2347 = vrot.slane %v2346, 4
        %v2348 = vrot.slane %v1979, 5
        %v2349 = vsel %vm1570, %v2347, %v2348
        %v2350 = vrot.slane %v2302, 5
        %v2351 = vrot.slane %v2350, 4
        %v2352 = vrot.slane %v1981, 5
        %v2353 = vsel %vm1570, %v2351, %v2352
        %v2354 = vrot.slane %v2303, 5
        %v2355 = vrot.slane %v2354, 4
        %v2356 = vrot.slane %v1983, 5
        %v2357 = vsel %vm1570, %v2355, %v2356
        %v2358 = vrot.slane %v2304, 5
        %v2359 = vrot.slane %v2358, 4
        %v2360 = vrot.slane %v1985, 5
        %v2361 = vsel %vm1570, %v2359, %v2360
        %v2362 = vrot.slane %v2305, 5
        %v2363 = vrot.slane %v2362, 4
        %v2364 = vrot.slane %v1987, 5
        %v2365 = vsel %vm1570, %v2363, %v2364
        %s2366 = scalar_lea.vmem %s3, 320
        %v2367 = vld [vmem:[%s2366] sm:$0xf]
        %v2368 = vld [vmem:[%s2366 + $0x4] sm:$0xf]
        %v2369 = vld [vmem:[%s2366 + $0x8] sm:$0xf]
        %v2370 = vld [vmem:[%s2366 + $0xc] sm:$0xf]
        %v2371 = vld [vmem:[%s2366 + $0x10] sm:$0xf]
        %v2372 = vld [vmem:[%s2366 + $0x14] sm:$0xf]
        %v2373 = vld [vmem:[%s2366 + $0x18] sm:$0xf]
        %v2374 = vld [vmem:[%s2366 + $0x1c] sm:$0xf]
        %v2375 = vld [vmem:[%s2366 + $0x20] sm:$0xf]
        %v2376 = vld [vmem:[%s2366 + $0x24] sm:$0xf]
        %v2377 = vld [vmem:[%s2366 + $0x28] sm:$0xf]
        %v2378 = vld [vmem:[%s2366 + $0x2c] sm:$0xf]
        %v2379 = vld [vmem:[%s2366 + $0x30] sm:$0xf]
        %v2380 = vld [vmem:[%s2366 + $0x34] sm:$0xf]
        %v2381 = vld [vmem:[%s2366 + $0x38] sm:$0xf]
        %v2382 = vld [vmem:[%s2366 + $0x3c] sm:$0xf]
        %v2383 = vunpack.c.l.b16 %v2329
        %v2384 = vunpack.c.l.b16 %v2333
        %v2385 = vunpack.c.l.b16 %v2337
        %v2386 = vunpack.c.l.b16 %v2341
        %v2387 = vunpack.c.l.b16 %v2345
        %v2388 = vunpack.c.l.b16 %v2349
        %v2389 = vunpack.c.l.b16 %v2353
        %v2390 = vunpack.c.l.b16 %v2357
        %v2391 = vunpack.c.l.b16 %v2361
        %v2392 = vunpack.c.l.b16 %v2365
        %v2393 = vpack.c.b16 %v2384, %v2383
        %v2394 = vpack.c.b16 %v2386, %v2385
        %v2395 = vpack.c.b16 %v2388, %v2387
        %v2396 = vpack.c.b16 %v2390, %v2389
        %v2397 = vpack.c.b16 %v2392, %v2391
        %v2419 = vunpack.c.l.b16 %v2367
        %v2420 = vunpack.c.l.b16 %v2368
        %v2421 = vunpack.c.l.b16 %v2369
        %v2422 = vunpack.c.l.b16 %v2370
        %v2423 = vunpack.c.l.b16 %v2371
        %v2424 = vunpack.c.l.b16 %v2372
        %v2425 = vunpack.c.l.b16 %v2373
        %v2426 = vunpack.c.l.b16 %v2374
        %v2427 = vunpack.c.l.b16 %v2375
        %v2428 = vunpack.c.l.b16 %v2376
        %v2429 = vunpack.c.l.b16 %v2377
        %v2430 = vunpack.c.l.b16 %v2378
        %v2431 = vunpack.c.l.b16 %v2379
        %v2432 = vunpack.c.l.b16 %v2380
        %v2433 = vunpack.c.l.b16 %v2381
        %v2434 = vunpack.c.l.b16 %v2382
        %v2435 = vpack.c.b16 %v2420, %v2419
        %v2436 = vpack.c.b16 %v2422, %v2421
        %v2437 = vpack.c.b16 %v2424, %v2423
        %v2438 = vpack.c.b16 %v2426, %v2425
        %v2439 = vpack.c.b16 %v2428, %v2427
        %v2440 = vpack.c.b16 %v2430, %v2429
        %v2441 = vpack.c.b16 %v2432, %v2431
        %v2442 = vpack.c.b16 %v2434, %v2433
        %2451 = vmatprep.subr.bf16.mxu0 0
        %2452 = vmatpush1.bf16.msra.mxu0 %v2435
        %2453 = vmatprep.subr.bf16.mxu0 0
        %2454 = vmatpush1.bf16.msra.mxu0 %v2436
        %2455 = vmatprep.subr.bf16.mxu0 0
        %2456 = vmatpush1.bf16.msra.mxu0 %v2437
        %2457 = vmatprep.subr.bf16.mxu0 0
        %2458 = vmatpush1.bf16.msra.mxu0 %v2438
        %2459 = vmatprep.subr.bf16.mxu0 0
        %2460 = vmatpush1.bf16.msra.mxu0 %v2439
        %2461 = vmatprep.subr.bf16.mxu0 0
        %2462 = vmatpush1.bf16.msra.mxu0 %v2440
        %2463 = vmatprep.subr.bf16.mxu0 0
        %2464 = vmatpush1.bf16.msra.mxu0 %v2441
        %2465 = vmatprep.subr.bf16.mxu0 0
        %2466 = vmatpush1.bf16.msra.mxu0 %v2442
        %2467 = vmatprep.subr.bf16.mxu0 0
        %2468 = vmatpush1.bf16.msra.mxu0 0
        %2469 = vmatprep.subr.bf16.mxu0 0
        %2470 = vmatpush1.bf16.msra.mxu0 0
        %2471 = vmatprep.subr.bf16.mxu0 0
        %2472 = vmatpush1.bf16.msra.mxu0 0
        %2473 = vmatprep.subr.bf16.mxu0 0
        %2474 = vmatpush1.bf16.msra.mxu0 0
        %2475 = vmatprep.subr.bf16.mxu0 0
        %2476 = vmatpush1.bf16.msra.mxu0 0
        %2477 = vmatprep.subr.bf16.mxu0 0
        %2478 = vmatpush1.bf16.msra.mxu0 0
        %2479 = vmatprep.subr.bf16.mxu0 0
        %2480 = vmatpush1.bf16.msra.mxu0 0
        %2481 = vmatprep.subr.bf16.mxu0 0
        %2482 = vmatpush1.bf16.msra.mxu0 0
        %2483 = vmatprep.mubr.bf16.mxu0 0
        %2484 = vmatmul.mubr.bf16.gmra.mrb[0].mxu0 %v2393
        %v2485 = vpop.f32.mrb[0].mxu0
        %v2486 = vadd.f32 0.0, %v2485
        %v2487 = vpop.f32.mrb[0].mxu0
        %v2488 = vpop.f32.mrb[0].mxu0
        %v2489 = vadd.f32 0.0, %v2488
        %v2490 = vpop.f32.mrb[0].mxu0
        %2491 = vmatprep.mubr.bf16.mxu0 0
        %2492 = vmatmul.mubr.bf16.gmra.mrb[0].mxu0 %v2394
        %v2493 = vpop.f32.mrb[0].mxu0
        %v2494 = vadd.f32 0.0, %v2493
        %v2495 = vpop.f32.mrb[0].mxu0
        %v2496 = vpop.f32.mrb[0].mxu0
        %v2497 = vadd.f32 0.0, %v2496
        %v2498 = vpop.f32.mrb[0].mxu0
        %2499 = vmatprep.mubr.bf16.mxu0 0
        %2500 = vmatmul.mubr.bf16.gmra.mrb[0].mxu0 %v2395
        %v2501 = vpop.f32.mrb[0].mxu0
        %v2502 = vadd.f32 0.0, %v2501
        %v2503 = vpop.f32.mrb[0].mxu0
        %v2504 = vpop.f32.mrb[0].mxu0
        %v2505 = vadd.f32 0.0, %v2504
        %v2506 = vpop.f32.mrb[0].mxu0
        %2507 = vmatprep.mubr.bf16.mxu0 0
        %2508 = vmatmul.mubr.bf16.gmra.mrb[0].mxu0 %v2396
        %v2509 = vpop.f32.mrb[0].mxu0
        %v2510 = vadd.f32 0.0, %v2509
        %v2511 = vpop.f32.mrb[0].mxu0
        %v2512 = vpop.f32.mrb[0].mxu0
        %v2513 = vadd.f32 0.0, %v2512
        %v2514 = vpop.f32.mrb[0].mxu0
        %2515 = vmatprep.mubr.bf16.mxu0 0
        %2516 = vmatmul.mubr.bf16.gmra.mrb[0].mxu0 %v2397
        %v2517 = vpop.f32.mrb[0].mxu0
        %v2518 = vadd.f32 0.0, %v2517
        %v2519 = vpop.f32.mrb[0].mxu0
        %v2520 = vpop.f32.mrb[0].mxu0
        %v2521 = vadd.f32 0.0, %v2520
        %v2522 = vpop.f32.mrb[0].mxu0
        %2523 = vdwg.mxu0
        %v2524 = vadd.f32 %v2286, %v2486
        %v2525 = vadd.f32 %v2287, %v2489
        %v2526 = vadd.f32 %v2288, %v2494
        %v2527 = vadd.f32 %v2289, %v2497
        %v2528 = vadd.f32 %v2290, %v2502
        %v2529 = vadd.f32 %v2291, %v2505
        %v2530 = vadd.f32 %v2292, %v2510
        %v2531 = vadd.f32 %v2293, %v2513
        %v2532 = vadd.f32 %v2294, %v2518
        %v2533 = vadd.f32 %v2295, %v2521
        %s2534 = scalar_lea.vmem [#allocation2], 16
        %v2535 = vld [vmem:[%s2534] sm:$0xf]
        %v2536 = vld [vmem:[%s2534 + $0x8] sm:$0xf]
        %v2537 = vld [vmem:[%s2534 + $0x10] sm:$0xf]
        %v2538 = vld [vmem:[%s2534 + $0x18] sm:$0xf]
        %v2539 = vld [vmem:[%s2534 + $0x20] sm:$0xf]
        %v2540 = vld [vmem:[%s2534 + $0x28] sm:$0xf]
        %v2541 = vld [vmem:[%s2534 + $0x30] sm:$0xf]
        %v2542 = vld [vmem:[%s2534 + $0x38] sm:$0xf]
        %v2543 = vld [vmem:[%s2534 + $0x40] sm:$0xf]
        %v2544 = vld [vmem:[%s2534 + $0x48] sm:$0xf]
        %s2545 = scalar_lea.vmem %s3, 384
        %v2546 = vld [vmem:[%s2545] sm:$0xf]
        %v2547 = vld [vmem:[%s2545 + $0x4] sm:$0xf]
        %v2548 = vld [vmem:[%s2545 + $0x8] sm:$0xf]
        %v2549 = vld [vmem:[%s2545 + $0xc] sm:$0xf]
        %v2550 = vld [vmem:[%s2545 + $0x10] sm:$0xf]
        %v2551 = vld [vmem:[%s2545 + $0x14] sm:$0xf]
        %v2552 = vld [vmem:[%s2545 + $0x18] sm:$0xf]
        %v2553 = vld [vmem:[%s2545 + $0x1c] sm:$0xf]
        %v2554 = vld [vmem:[%s2545 + $0x20] sm:$0xf]
        %v2555 = vld [vmem:[%s2545 + $0x24] sm:$0xf]
        %v2556 = vld [vmem:[%s2545 + $0x28] sm:$0xf]
        %v2557 = vld [vmem:[%s2545 + $0x2c] sm:$0xf]
        %v2558 = vld [vmem:[%s2545 + $0x30] sm:$0xf]
        %v2559 = vld [vmem:[%s2545 + $0x34] sm:$0xf]
        %v2560 = vld [vmem:[%s2545 + $0x38] sm:$0xf]
        %v2561 = vld [vmem:[%s2545 + $0x3c] sm:$0xf]
        %v2572 = vunpack.c.l.b16 %v2535
        %v2573 = vunpack.c.l.b16 %v2536
        %v2574 = vunpack.c.l.b16 %v2537
        %v2575 = vunpack.c.l.b16 %v2538
        %v2576 = vunpack.c.l.b16 %v2539
        %v2577 = vunpack.c.l.b16 %v2540
        %v2578 = vunpack.c.l.b16 %v2541
        %v2579 = vunpack.c.l.b16 %v2542
        %v2580 = vunpack.c.l.b16 %v2543
        %v2581 = vunpack.c.l.b16 %v2544
        %v2582 = vpack.c.b16 %v2573, %v2572
        %v2583 = vpack.c.b16 %v2575, %v2574
        %v2584 = vpack.c.b16 %v2577, %v2576
        %v2585 = vpack.c.b16 %v2579, %v2578
        %v2586 = vpack.c.b16 %v2581, %v2580
        %v2608 = vunpack.c.l.b16 %v2546
        %v2609 = vunpack.c.l.b16 %v2547
        %v2610 = vunpack.c.l.b16 %v2548
        %v2611 = vunpack.c.l.b16 %v2549
        %v2612 = vunpack.c.l.b16 %v2550
        %v2613 = vunpack.c.l.b16 %v2551
        %v2614 = vunpack.c.l.b16 %v2552
        %v2615 = vunpack.c.l.b16 %v2553
        %v2616 = vunpack.c.l.b16 %v2554
        %v2617 = vunpack.c.l.b16 %v2555
        %v2618 = vunpack.c.l.b16 %v2556
        %v2619 = vunpack.c.l.b16 %v2557
        %v2620 = vunpack.c.l.b16 %v2558
        %v2621 = vunpack.c.l.b16 %v2559
        %v2622 = vunpack.c.l.b16 %v2560
        %v2623 = vunpack.c.l.b16 %v2561
        %v2624 = vpack.c.b16 %v2609, %v2608
        %v2625 = vpack.c.b16 %v2611, %v2610
        %v2626 = vpack.c.b16 %v2613, %v2612
        %v2627 = vpack.c.b16 %v2615, %v2614
        %v2628 = vpack.c.b16 %v2617, %v2616
        %v2629 = vpack.c.b16 %v2619, %v2618
        %v2630 = vpack.c.b16 %v2621, %v2620
        %v2631 = vpack.c.b16 %v2623, %v2622
        %2640 = vmatprep.subr.bf16.mxu0 0
        %2641 = vmatpush1.bf16.msra.mxu0 %v2624
        %2642 = vmatprep.subr.bf16.mxu0 0
        %2643 = vmatpush1.bf16.msra.mxu0 %v2625
        %2644 = vmatprep.subr.bf16.mxu0 0
        %2645 = vmatpush1.bf16.msra.mxu0 %v2626
        %2646 = vmatprep.subr.bf16.mxu0 0
        %2647 = vmatpush1.bf16.msra.mxu0 %v2627
        %2648 = vmatprep.subr.bf16.mxu0 0
        %2649 = vmatpush1.bf16.msra.mxu0 %v2628
        %2650 = vmatprep.subr.bf16.mxu0 0
        %2651 = vmatpush1.bf16.msra.mxu0 %v2629
        %2652 = vmatprep.subr.bf16.mxu0 0
        %2653 = vmatpush1.bf16.msra.mxu0 %v2630
        %2654 = vmatprep.subr.bf16.mxu0 0
        %2655 = vmatpush1.bf16.msra.mxu0 %v2631
        %2656 = vmatprep.subr.bf16.mxu0 0
        %2657 = vmatpush1.bf16.msra.mxu0 0
        %2658 = vmatprep.subr.bf16.mxu0 0
        %2659 = vmatpush1.bf16.msra.mxu0 0
        %2660 = vmatprep.subr.bf16.mxu0 0
        %2661 = vmatpush1.bf16.msra.mxu0 0
        %2662 = vmatprep.subr.bf16.mxu0 0
        %2663 = vmatpush1.bf16.msra.mxu0 0
        %2664 = vmatprep.subr.bf16.mxu0 0
        %2665 = vmatpush1.bf16.msra.mxu0 0
        %2666 = vmatprep.subr.bf16.mxu0 0
        %2667 = vmatpush1.bf16.msra.mxu0 0
        %2668 = vmatprep.subr.bf16.mxu0 0
        %2669 = vmatpush1.bf16.msra.mxu0 0
        %2670 = vmatprep.subr.bf16.mxu0 0
        %2671 = vmatpush1.bf16.msra.mxu0 0
        %2672 = vmatprep.mubr.bf16.mxu0 0
        %2673 = vmatmul.mubr.bf16.gmra.mrb[0].mxu0 %v2582
        %v2674 = vpop.f32.mrb[0].mxu0
        %v2675 = vadd.f32 0.0, %v2674
        %v2676 = vpop.f32.mrb[0].mxu0
        %v2677 = vpop.f32.mrb[0].mxu0
        %v2678 = vadd.f32 0.0, %v2677
        %v2679 = vpop.f32.mrb[0].mxu0
        %2680 = vmatprep.mubr.bf16.mxu0 0
        %2681 = vmatmul.mubr.bf16.gmra.mrb[0].mxu0 %v2583
        %v2682 = vpop.f32.mrb[0].mxu0
        %v2683 = vadd.f32 0.0, %v2682
        %v2684 = vpop.f32.mrb[0].mxu0
        %v2685 = vpop.f32.mrb[0].mxu0
        %v2686 = vadd.f32 0.0, %v2685
        %v2687 = vpop.f32.mrb[0].mxu0
        %2688 = vmatprep.mubr.bf16.mxu0 0
        %2689 = vmatmul.mubr.bf16.gmra.mrb[0].mxu0 %v2584
        %v2690 = vpop.f32.mrb[0].mxu0
        %v2691 = vadd.f32 0.0, %v2690
        %v2692 = vpop.f32.mrb[0].mxu0
        %v2693 = vpop.f32.mrb[0].mxu0
        %v2694 = vadd.f32 0.0, %v2693
        %v2695 = vpop.f32.mrb[0].mxu0
        %2696 = vmatprep.mubr.bf16.mxu0 0
        %2697 = vmatmul.mubr.bf16.gmra.mrb[0].mxu0 %v2585
        %v2698 = vpop.f32.mrb[0].mxu0
        %v2699 = vadd.f32 0.0, %v2698
        %v2700 = vpop.f32.mrb[0].mxu0
        %v2701 = vpop.f32.mrb[0].mxu0
        %v2702 = vadd.f32 0.0, %v2701
        %v2703 = vpop.f32.mrb[0].mxu0
        %2704 = vmatprep.mubr.bf16.mxu0 0
        %2705 = vmatmul.mubr.bf16.gmra.mrb[0].mxu0 %v2586
        %v2706 = vpop.f32.mrb[0].mxu0
        %v2707 = vadd.f32 0.0, %v2706
        %v2708 = vpop.f32.mrb[0].mxu0
        %v2709 = vpop.f32.mrb[0].mxu0
        %v2710 = vadd.f32 0.0, %v2709
        %v2711 = vpop.f32.mrb[0].mxu0
        %2712 = vdwg.mxu0
        %v2713 = vadd.f32 %v2524, %v2675
        %v2714 = vadd.f32 %v2525, %v2678
        %v2715 = vadd.f32 %v2526, %v2683
        %v2716 = vadd.f32 %v2527, %v2686
        %v2717 = vadd.f32 %v2528, %v2691
        %v2718 = vadd.f32 %v2529, %v2694
        %v2719 = vadd.f32 %v2530, %v2699
        %v2720 = vadd.f32 %v2531, %v2702
        %v2721 = vadd.f32 %v2532, %v2707
        %v2722 = vadd.f32 %v2533, %v2710
        %v2723 = vld [vmem:[%s2534] sm:$0xf]
        %v2724 = vld [vmem:[%s2534 + $0x4] sm:$0x1]
        %v2725 = vld [vmem:[%s2534 + $0x8] sm:$0xf]
        %v2726 = vld [vmem:[%s2534 + $0xc] sm:$0x1]
        %v2727 = vld [vmem:[%s2534 + $0x10] sm:$0xf]
        %v2728 = vld [vmem:[%s2534 + $0x14] sm:$0x1]
        %v2729 = vld [vmem:[%s2534 + $0x18] sm:$0xf]
        %v2730 = vld [vmem:[%s2534 + $0x1c] sm:$0x1]
        %v2731 = vld [vmem:[%s2534 + $0x20] sm:$0xf]
        %v2732 = vld [vmem:[%s2534 + $0x24] sm:$0x1]
        %v2733 = vld [vmem:[%s2534 + $0x28] sm:$0xf]
        %v2734 = vld [vmem:[%s2534 + $0x2c] sm:$0x1]
        %v2735 = vld [vmem:[%s2534 + $0x30] sm:$0xf]
        %v2736 = vld [vmem:[%s2534 + $0x34] sm:$0x1]
        %v2737 = vld [vmem:[%s2534 + $0x38] sm:$0xf]
        %v2738 = vld [vmem:[%s2534 + $0x3c] sm:$0x1]
        %v2739 = vld [vmem:[%s2534 + $0x40] sm:$0xf]
        %v2740 = vld [vmem:[%s2534 + $0x44] sm:$0x1]
        %v2741 = vld [vmem:[%s2534 + $0x48] sm:$0xf]
        %v2742 = vld [vmem:[%s2534 + $0x4c] sm:$0x1]
        %v2744 = vshrl.u32 %v2723, 16
        %v2746 = vrot.slane %v2744, 4
        %v2747 = vshll.u32 %v2723, 16
        %v2749 = vrot.slane %v2747, 5
        %v2750 = vor.u32 %v2746, %v2749
        %v2751 = vrot.slane %v2750, 4
        %v2753 = vshll.u32 %v2724, 16
        %v2755 = vrot.slane %v2753, 5
        %v2756 = vsel %vm1088, %v2751, %v2755
        %v2758 = vshrl.u32 %v2725, 16
        %v2760 = vrot.slane %v2758, 4
        %v2761 = vshll.u32 %v2725, 16
        %v2763 = vrot.slane %v2761, 5
        %v2764 = vor.u32 %v2760, %v2763
        %v2765 = vrot.slane %v2764, 4
        %v2767 = vshll.u32 %v2726, 16
        %v2769 = vrot.slane %v2767, 5
        %v2770 = vsel %vm1088, %v2765, %v2769
        %v2772 = vshrl.u32 %v2727, 16
        %v2774 = vrot.slane %v2772, 4
        %v2775 = vshll.u32 %v2727, 16
        %v2777 = vrot.slane %v2775, 5
        %v2778 = vor.u32 %v2774, %v2777
        %v2779 = vrot.slane %v2778, 4
        %v2781 = vshll.u32 %v2728, 16
        %v2783 = vrot.slane %v2781, 5
        %v2784 = vsel %vm1088, %v2779, %v2783
        %v2786 = vshrl.u32 %v2729, 16
        %v2788 = vrot.slane %v2786, 4
        %v2789 = vshll.u32 %v2729, 16
        %v2791 = vrot.slane %v2789, 5
        %v2792 = vor.u32 %v2788, %v2791
        %v2793 = vrot.slane %v2792, 4
        %v2795 = vshll.u32 %v2730, 16
        %v2797 = vrot.slane %v2795, 5
        %v2798 = vsel %vm1088, %v2793, %v2797
        %v2800 = vshrl.u32 %v2731, 16
        %v2802 = vrot.slane %v2800, 4
        %v2803 = vshll.u32 %v2731, 16
        %v2805 = vrot.slane %v2803, 5
        %v2806 = vor.u32 %v2802, %v2805
        %v2807 = vrot.slane %v2806, 4
        %v2809 = vshll.u32 %v2732, 16
        %v2811 = vrot.slane %v2809, 5
        %v2812 = vsel %vm1088, %v2807, %v2811
        %v2814 = vshrl.u32 %v2733, 16
        %v2816 = vrot.slane %v2814, 4
        %v2817 = vshll.u32 %v2733, 16
        %v2819 = vrot.slane %v2817, 5
        %v2820 = vor.u32 %v2816, %v2819
        %v2821 = vrot.slane %v2820, 4
        %v2823 = vshll.u32 %v2734, 16
        %v2825 = vrot.slane %v2823, 5
        %v2826 = vsel %vm1088, %v2821, %v2825
        %v2828 = vshrl.u32 %v2735, 16
        %v2830 = vrot.slane %v2828, 4
        %v2831 = vshll.u32 %v2735, 16
        %v2833 = vrot.slane %v2831, 5
        %v2834 = vor.u32 %v2830, %v2833
        %v2835 = vrot.slane %v2834, 4
        %v2837 = vshll.u32 %v2736, 16
        %v2839 = vrot.slane %v2837, 5
        %v2840 = vsel %vm1088, %v2835, %v2839
        %v2842 = vshrl.u32 %v2737, 16
        %v2844 = vrot.slane %v2842, 4
        %v2845 = vshll.u32 %v2737, 16
        %v2847 = vrot.slane %v2845, 5
        %v2848 = vor.u32 %v2844, %v2847
        %v2849 = vrot.slane %v2848, 4
        %v2851 = vshll.u32 %v2738, 16
        %v2853 = vrot.slane %v2851, 5
        %v2854 = vsel %vm1088, %v2849, %v2853
        %v2856 = vshrl.u32 %v2739, 16
        %v2858 = vrot.slane %v2856, 4
        %v2859 = vshll.u32 %v2739, 16
        %v2861 = vrot.slane %v2859, 5
        %v2862 = vor.u32 %v2858, %v2861
        %v2863 = vrot.slane %v2862, 4
        %v2865 = vshll.u32 %v2740, 16
        %v2867 = vrot.slane %v2865, 5
        %v2868 = vsel %vm1088, %v2863, %v2867
        %v2870 = vshrl.u32 %v2741, 16
        %v2872 = vrot.slane %v2870, 4
        %v2873 = vshll.u32 %v2741, 16
        %v2875 = vrot.slane %v2873, 5
        %v2876 = vor.u32 %v2872, %v2875
        %v2877 = vrot.slane %v2876, 4
        %v2879 = vshll.u32 %v2742, 16
        %v2881 = vrot.slane %v2879, 5
        %v2882 = vsel %vm1088, %v2877, %v2881
        %s2883 = scalar_lea.vmem %s3, 448
        %v2884 = vld [vmem:[%s2883] sm:$0xf]
        %v2885 = vld [vmem:[%s2883 + $0x4] sm:$0xf]
        %v2886 = vld [vmem:[%s2883 + $0x8] sm:$0xf]
        %v2887 = vld [vmem:[%s2883 + $0xc] sm:$0xf]
        %v2888 = vld [vmem:[%s2883 + $0x10] sm:$0xf]
        %v2889 = vld [vmem:[%s2883 + $0x14] sm:$0xf]
        %v2890 = vld [vmem:[%s2883 + $0x18] sm:$0xf]
        %v2891 = vld [vmem:[%s2883 + $0x1c] sm:$0xf]
        %v2892 = vld [vmem:[%s2883 + $0x20] sm:$0xf]
        %v2893 = vld [vmem:[%s2883 + $0x24] sm:$0xf]
        %v2894 = vld [vmem:[%s2883 + $0x28] sm:$0xf]
        %v2895 = vld [vmem:[%s2883 + $0x2c] sm:$0xf]
        %v2896 = vld [vmem:[%s2883 + $0x30] sm:$0xf]
        %v2897 = vld [vmem:[%s2883 + $0x34] sm:$0xf]
        %v2898 = vld [vmem:[%s2883 + $0x38] sm:$0xf]
        %v2899 = vld [vmem:[%s2883 + $0x3c] sm:$0xf]
        %v2900 = vunpack.c.l.b16 %v2756
        %v2901 = vunpack.c.l.b16 %v2770
        %v2902 = vunpack.c.l.b16 %v2784
        %v2903 = vunpack.c.l.b16 %v2798
        %v2904 = vunpack.c.l.b16 %v2812
        %v2905 = vunpack.c.l.b16 %v2826
        %v2906 = vunpack.c.l.b16 %v2840
        %v2907 = vunpack.c.l.b16 %v2854
        %v2908 = vunpack.c.l.b16 %v2868
        %v2909 = vunpack.c.l.b16 %v2882
        %v2910 = vpack.c.b16 %v2901, %v2900
        %v2911 = vpack.c.b16 %v2903, %v2902
        %v2912 = vpack.c.b16 %v2905, %v2904
        %v2913 = vpack.c.b16 %v2907, %v2906
        %v2914 = vpack.c.b16 %v2909, %v2908
        %v2936 = vunpack.c.l.b16 %v2884
        %v2937 = vunpack.c.l.b16 %v2885
        %v2938 = vunpack.c.l.b16 %v2886
        %v2939 = vunpack.c.l.b16 %v2887
        %v2940 = vunpack.c.l.b16 %v2888
        %v2941 = vunpack.c.l.b16 %v2889
        %v2942 = vunpack.c.l.b16 %v2890
        %v2943 = vunpack.c.l.b16 %v2891
        %v2944 = vunpack.c.l.b16 %v2892
        %v2945 = vunpack.c.l.b16 %v2893
        %v2946 = vunpack.c.l.b16 %v2894
        %v2947 = vunpack.c.l.b16 %v2895
        %v2948 = vunpack.c.l.b16 %v2896
        %v2949 = vunpack.c.l.b16 %v2897
        %v2950 = vunpack.c.l.b16 %v2898
        %v2951 = vunpack.c.l.b16 %v2899
        %v2952 = vpack.c.b16 %v2937, %v2936
        %v2953 = vpack.c.b16 %v2939, %v2938
        %v2954 = vpack.c.b16 %v2941, %v2940
        %v2955 = vpack.c.b16 %v2943, %v2942
        %v2956 = vpack.c.b16 %v2945, %v2944
        %v2957 = vpack.c.b16 %v2947, %v2946
        %v2958 = vpack.c.b16 %v2949, %v2948
        %v2959 = vpack.c.b16 %v2951, %v2950
        %2968 = vmatprep.subr.bf16.mxu0 0
        %2969 = vmatpush1.bf16.msra.mxu0 %v2952
        %2970 = vmatprep.subr.bf16.mxu0 0
        %2971 = vmatpush1.bf16.msra.mxu0 %v2953
        %2972 = vmatprep.subr.bf16.mxu0 0
        %2973 = vmatpush1.bf16.msra.mxu0 %v2954
        %2974 = vmatprep.subr.bf16.mxu0 0
        %2975 = vmatpush1.bf16.msra.mxu0 %v2955
        %2976 = vmatprep.subr.bf16.mxu0 0
        %2977 = vmatpush1.bf16.msra.mxu0 %v2956
        %2978 = vmatprep.subr.bf16.mxu0 0
        %2979 = vmatpush1.bf16.msra.mxu0 %v2957
        %2980 = vmatprep.subr.bf16.mxu0 0
        %2981 = vmatpush1.bf16.msra.mxu0 %v2958
        %2982 = vmatprep.subr.bf16.mxu0 0
        %2983 = vmatpush1.bf16.msra.mxu0 %v2959
        %2984 = vmatprep.subr.bf16.mxu0 0
        %2985 = vmatpush1.bf16.msra.mxu0 0
        %2986 = vmatprep.subr.bf16.mxu0 0
        %2987 = vmatpush1.bf16.msra.mxu0 0
        %2988 = vmatprep.subr.bf16.mxu0 0
        %2989 = vmatpush1.bf16.msra.mxu0 0
        %2990 = vmatprep.subr.bf16.mxu0 0
        %2991 = vmatpush1.bf16.msra.mxu0 0
        %2992 = vmatprep.subr.bf16.mxu0 0
        %2993 = vmatpush1.bf16.msra.mxu0 0
        %2994 = vmatprep.subr.bf16.mxu0 0
        %2995 = vmatpush1.bf16.msra.mxu0 0
        %2996 = vmatprep.subr.bf16.mxu0 0
        %2997 = vmatpush1.bf16.msra.mxu0 0
        %2998 = vmatprep.subr.bf16.mxu0 0
        %2999 = vmatpush1.bf16.msra.mxu0 0
        %3000 = vmatprep.mubr.bf16.mxu0 0
        %3001 = vmatmul.mubr.bf16.gmra.mrb[0].mxu0 %v2910
        %v3002 = vpop.f32.mrb[0].mxu0
        %v3003 = vadd.f32 0.0, %v3002
        %v3004 = vpop.f32.mrb[0].mxu0
        %v3005 = vpop.f32.mrb[0].mxu0
        %v3006 = vadd.f32 0.0, %v3005
        %v3007 = vpop.f32.mrb[0].mxu0
        %3008 = vmatprep.mubr.bf16.mxu0 0
        %3009 = vmatmul.mubr.bf16.gmra.mrb[0].mxu0 %v2911
        %v3010 = vpop.f32.mrb[0].mxu0
        %v3011 = vadd.f32 0.0, %v3010
        %v3012 = vpop.f32.mrb[0].mxu0
        %v3013 = vpop.f32.mrb[0].mxu0
        %v3014 = vadd.f32 0.0, %v3013
        %v3015 = vpop.f32.mrb[0].mxu0
        %3016 = vmatprep.mubr.bf16.mxu0 0
        %3017 = vmatmul.mubr.bf16.gmra.mrb[0].mxu0 %v2912
        %v3018 = vpop.f32.mrb[0].mxu0
        %v3019 = vadd.f32 0.0, %v3018
        %v3020 = vpop.f32.mrb[0].mxu0
        %v3021 = vpop.f32.mrb[0].mxu0
        %v3022 = vadd.f32 0.0, %v3021
        %v3023 = vpop.f32.mrb[0].mxu0
        %3024 = vmatprep.mubr.bf16.mxu0 0
        %3025 = vmatmul.mubr.bf16.gmra.mrb[0].mxu0 %v2913
        %v3026 = vpop.f32.mrb[0].mxu0
        %v3027 = vadd.f32 0.0, %v3026
        %v3028 = vpop.f32.mrb[0].mxu0
        %v3029 = vpop.f32.mrb[0].mxu0
        %v3030 = vadd.f32 0.0, %v3029
        %v3031 = vpop.f32.mrb[0].mxu0
        %3032 = vmatprep.mubr.bf16.mxu0 0
        %3033 = vmatmul.mubr.bf16.gmra.mrb[0].mxu0 %v2914
        %v3034 = vpop.f32.mrb[0].mxu0
        %v3035 = vadd.f32 0.0, %v3034
        %v3036 = vpop.f32.mrb[0].mxu0
        %v3037 = vpop.f32.mrb[0].mxu0
        %v3038 = vadd.f32 0.0, %v3037
        %v3039 = vpop.f32.mrb[0].mxu0
        %3040 = vdwg.mxu0
        %v3041 = vadd.f32 %v2713, %v3003
        %v3042 = vadd.f32 %v2714, %v3006
        %v3043 = vadd.f32 %v2715, %v3011
        %v3044 = vadd.f32 %v2716, %v3014
        %v3045 = vadd.f32 %v2717, %v3019
        %v3046 = vadd.f32 %v2718, %v3022
        %v3047 = vadd.f32 %v2719, %v3027
        %v3048 = vadd.f32 %v2720, %v3030
        %v3049 = vadd.f32 %v2721, %v3035
        %v3050 = vadd.f32 %v2722, %v3038
        %v3051 = vld [vmem:[%s2534] sm:$0xe]
        %v3052 = vld [vmem:[%s2534 + $0x8] sm:$0xe]
        %v3053 = vld [vmem:[%s2534 + $0x10] sm:$0xe]
        %v3054 = vld [vmem:[%s2534 + $0x18] sm:$0xe]
        %v3055 = vld [vmem:[%s2534 + $0x20] sm:$0xe]
        %v3056 = vld [vmem:[%s2534 + $0x28] sm:$0xe]
        %v3057 = vld [vmem:[%s2534 + $0x30] sm:$0xe]
        %v3058 = vld [vmem:[%s2534 + $0x38] sm:$0xe]
        %v3059 = vld [vmem:[%s2534 + $0x40] sm:$0xe]
        %v3060 = vld [vmem:[%s2534 + $0x48] sm:$0xe]
        %v3081 = vrot.slane %v3051, 5
        %v3082 = vrot.slane %v3081, 4
        %v3083 = vrot.slane %v2724, 5
        %v3084 = vsel %vm1570, %v3082, %v3083
        %v3085 = vrot.slane %v3052, 5
        %v3086 = vrot.slane %v3085, 4
        %v3087 = vrot.slane %v2726, 5
        %v3088 = vsel %vm1570, %v3086, %v3087
        %v3089 = vrot.slane %v3053, 5
        %v3090 = vrot.slane %v3089, 4
        %v3091 = vrot.slane %v2728, 5
        %v3092 = vsel %vm1570, %v3090, %v3091
        %v3093 = vrot.slane %v3054, 5
        %v3094 = vrot.slane %v3093, 4
        %v3095 = vrot.slane %v2730, 5
        %v3096 = vsel %vm1570, %v3094, %v3095
        %v3097 = vrot.slane %v3055, 5
        %v3098 = vrot.slane %v3097, 4
        %v3099 = vrot.slane %v2732, 5
        %v3100 = vsel %vm1570, %v3098, %v3099
        %v3101 = vrot.slane %v3056, 5
        %v3102 = vrot.slane %v3101, 4
        %v3103 = vrot.slane %v2734, 5
        %v3104 = vsel %vm1570, %v3102, %v3103
        %v3105 = vrot.slane %v3057, 5
        %v3106 = vrot.slane %v3105, 4
        %v3107 = vrot.slane %v2736, 5
        %v3108 = vsel %vm1570, %v3106, %v3107
        %v3109 = vrot.slane %v3058, 5
        %v3110 = vrot.slane %v3109, 4
        %v3111 = vrot.slane %v2738, 5
        %v3112 = vsel %vm1570, %v3110, %v3111
        %v3113 = vrot.slane %v3059, 5
        %v3114 = vrot.slane %v3113, 4
        %v3115 = vrot.slane %v2740, 5
        %v3116 = vsel %vm1570, %v3114, %v3115
        %v3117 = vrot.slane %v3060, 5
        %v3118 = vrot.slane %v3117, 4
        %v3119 = vrot.slane %v2742, 5
        %v3120 = vsel %vm1570, %v3118, %v3119
        %s3121 = scalar_lea.vmem %s3, 512
        %v3122 = vld [vmem:[%s3121] sm:$0xf]
        %v3123 = vld [vmem:[%s3121 + $0x4] sm:$0xf]
        %v3124 = vld [vmem:[%s3121 + $0x8] sm:$0xf]
        %v3125 = vld [vmem:[%s3121 + $0xc] sm:$0xf]
        %v3126 = vld [vmem:[%s3121 + $0x10] sm:$0xf]
        %v3127 = vld [vmem:[%s3121 + $0x14] sm:$0xf]
        %v3128 = vld [vmem:[%s3121 + $0x18] sm:$0xf]
        %v3129 = vld [vmem:[%s3121 + $0x1c] sm:$0xf]
        %v3130 = vld [vmem:[%s3121 + $0x20] sm:$0xf]
        %v3131 = vld [vmem:[%s3121 + $0x24] sm:$0xf]
        %v3132 = vld [vmem:[%s3121 + $0x28] sm:$0xf]
        %v3133 = vld [vmem:[%s3121 + $0x2c] sm:$0xf]
        %v3134 = vld [vmem:[%s3121 + $0x30] sm:$0xf]
        %v3135 = vld [vmem:[%s3121 + $0x34] sm:$0xf]
        %v3136 = vld [vmem:[%s3121 + $0x38] sm:$0xf]
        %v3137 = vld [vmem:[%s3121 + $0x3c] sm:$0xf]
        %v3138 = vunpack.c.l.b16 %v3084
        %v3139 = vunpack.c.l.b16 %v3088
        %v3140 = vunpack.c.l.b16 %v3092
        %v3141 = vunpack.c.l.b16 %v3096
        %v3142 = vunpack.c.l.b16 %v3100
        %v3143 = vunpack.c.l.b16 %v3104
        %v3144 = vunpack.c.l.b16 %v3108
        %v3145 = vunpack.c.l.b16 %v3112
        %v3146 = vunpack.c.l.b16 %v3116
        %v3147 = vunpack.c.l.b16 %v3120
        %v3148 = vpack.c.b16 %v3139, %v3138
        %v3149 = vpack.c.b16 %v3141, %v3140
        %v3150 = vpack.c.b16 %v3143, %v3142
        %v3151 = vpack.c.b16 %v3145, %v3144
        %v3152 = vpack.c.b16 %v3147, %v3146
        %v3174 = vunpack.c.l.b16 %v3122
        %v3175 = vunpack.c.l.b16 %v3123
        %v3176 = vunpack.c.l.b16 %v3124
        %v3177 = vunpack.c.l.b16 %v3125
        %v3178 = vunpack.c.l.b16 %v3126
        %v3179 = vunpack.c.l.b16 %v3127
        %v3180 = vunpack.c.l.b16 %v3128
        %v3181 = vunpack.c.l.b16 %v3129
        %v3182 = vunpack.c.l.b16 %v3130
        %v3183 = vunpack.c.l.b16 %v3131
        %v3184 = vunpack.c.l.b16 %v3132
        %v3185 = vunpack.c.l.b16 %v3133
        %v3186 = vunpack.c.l.b16 %v3134
        %v3187 = vunpack.c.l.b16 %v3135
        %v3188 = vunpack.c.l.b16 %v3136
        %v3189 = vunpack.c.l.b16 %v3137
        %v3190 = vpack.c.b16 %v3175, %v3174
        %v3191 = vpack.c.b16 %v3177, %v3176
        %v3192 = vpack.c.b16 %v3179, %v3178
        %v3193 = vpack.c.b16 %v3181, %v3180
        %v3194 = vpack.c.b16 %v3183, %v3182
        %v3195 = vpack.c.b16 %v3185, %v3184
        %v3196 = vpack.c.b16 %v3187, %v3186
        %v3197 = vpack.c.b16 %v3189, %v3188
        %3206 = vmatprep.subr.bf16.mxu0 0
        %3207 = vmatpush1.bf16.msra.mxu0 %v3190
        %3208 = vmatprep.subr.bf16.mxu0 0
        %3209 = vmatpush1.bf16.msra.mxu0 %v3191
        %3210 = vmatprep.subr.bf16.mxu0 0
        %3211 = vmatpush1.bf16.msra.mxu0 %v3192
        %3212 = vmatprep.subr.bf16.mxu0 0
        %3213 = vmatpush1.bf16.msra.mxu0 %v3193
        %3214 = vmatprep.subr.bf16.mxu0 0
        %3215 = vmatpush1.bf16.msra.mxu0 %v3194
        %3216 = vmatprep.subr.bf16.mxu0 0
        %3217 = vmatpush1.bf16.msra.mxu0 %v3195
        %3218 = vmatprep.subr.bf16.mxu0 0
        %3219 = vmatpush1.bf16.msra.mxu0 %v3196
        %3220 = vmatprep.subr.bf16.mxu0 0
        %3221 = vmatpush1.bf16.msra.mxu0 %v3197
        %3222 = vmatprep.subr.bf16.mxu0 0
        %3223 = vmatpush1.bf16.msra.mxu0 0
        %3224 = vmatprep.subr.bf16.mxu0 0
        %3225 = vmatpush1.bf16.msra.mxu0 0
        %3226 = vmatprep.subr.bf16.mxu0 0
        %3227 = vmatpush1.bf16.msra.mxu0 0
        %3228 = vmatprep.subr.bf16.mxu0 0
        %3229 = vmatpush1.bf16.msra.mxu0 0
        %3230 = vmatprep.subr.bf16.mxu0 0
        %3231 = vmatpush1.bf16.msra.mxu0 0
        %3232 = vmatprep.subr.bf16.mxu0 0
        %3233 = vmatpush1.bf16.msra.mxu0 0
        %3234 = vmatprep.subr.bf16.mxu0 0
        %3235 = vmatpush1.bf16.msra.mxu0 0
        %3236 = vmatprep.subr.bf16.mxu0 0
        %3237 = vmatpush1.bf16.msra.mxu0 0
        %3238 = vmatprep.mubr.bf16.mxu0 0
        %3239 = vmatmul.mubr.bf16.gmra.mrb[0].mxu0 %v3148
        %v3240 = vpop.f32.mrb[0].mxu0
        %v3241 = vadd.f32 0.0, %v3240
        %v3242 = vpop.f32.mrb[0].mxu0
        %v3243 = vpop.f32.mrb[0].mxu0
        %v3244 = vadd.f32 0.0, %v3243
        %v3245 = vpop.f32.mrb[0].mxu0
        %3246 = vmatprep.mubr.bf16.mxu0 0
        %3247 = vmatmul.mubr.bf16.gmra.mrb[0].mxu0 %v3149
        %v3248 = vpop.f32.mrb[0].mxu0
        %v3249 = vadd.f32 0.0, %v3248
        %v3250 = vpop.f32.mrb[0].mxu0
        %v3251 = vpop.f32.mrb[0].mxu0
        %v3252 = vadd.f32 0.0, %v3251
        %v3253 = vpop.f32.mrb[0].mxu0
        %3254 = vmatprep.mubr.bf16.mxu0 0
        %3255 = vmatmul.mubr.bf16.gmra.mrb[0].mxu0 %v3150
        %v3256 = vpop.f32.mrb[0].mxu0
        %v3257 = vadd.f32 0.0, %v3256
        %v3258 = vpop.f32.mrb[0].mxu0
        %v3259 = vpop.f32.mrb[0].mxu0
        %v3260 = vadd.f32 0.0, %v3259
        %v3261 = vpop.f32.mrb[0].mxu0
        %3262 = vmatprep.mubr.bf16.mxu0 0
        %3263 = vmatmul.mubr.bf16.gmra.mrb[0].mxu0 %v3151
        %v3264 = vpop.f32.mrb[0].mxu0
        %v3265 = vadd.f32 0.0, %v3264
        %v3266 = vpop.f32.mrb[0].mxu0
        %v3267 = vpop.f32.mrb[0].mxu0
        %v3268 = vadd.f32 0.0, %v3267
        %v3269 = vpop.f32.mrb[0].mxu0
        %3270 = vmatprep.mubr.bf16.mxu0 0
        %3271 = vmatmul.mubr.bf16.gmra.mrb[0].mxu0 %v3152
        %v3272 = vpop.f32.mrb[0].mxu0
        %v3273 = vadd.f32 0.0, %v3272
        %v3274 = vpop.f32.mrb[0].mxu0
        %v3275 = vpop.f32.mrb[0].mxu0
        %v3276 = vadd.f32 0.0, %v3275
        %v3277 = vpop.f32.mrb[0].mxu0
        %3278 = vdwg.mxu0
        %v3279 = vadd.f32 %v3041, %v3241
        %v3280 = vadd.f32 %v3042, %v3244
        %v3281 = vadd.f32 %v3043, %v3249
        %v3282 = vadd.f32 %v3044, %v3252
        %v3283 = vadd.f32 %v3045, %v3257
        %v3284 = vadd.f32 %v3046, %v3260
        %v3285 = vadd.f32 %v3047, %v3265
        %v3286 = vadd.f32 %v3048, %v3268
        %v3287 = vadd.f32 %v3049, %v3273
        %v3288 = vadd.f32 %v3050, %v3276
        %v3289 = vld [vmem:[%s4] sm:$0x1]
        %v3291 = vlaneseq
        %v3292 = vshrl.u32 %v3291, 7
        %v3293 = vsub.s32 0, %v3292
        %v3294 = vrot.slane %v3289, %v3293
        %v3296 = vmul.f32 %v3279, %v3294
        %v3297 = vmul.f32 %v3280, %v3294
        %v3298 = vmul.f32 %v3281, %v3294
        %v3299 = vmul.f32 %v3282, %v3294
        %v3300 = vmul.f32 %v3283, %v3294
        %v3301 = vmul.f32 %v3284, %v3294
        %v3302 = vmul.f32 %v3285, %v3294
        %v3303 = vmul.f32 %v3286, %v3294
        %v3304 = vmul.f32 %v3287, %v3294
        %v3305 = vmul.f32 %v3288, %v3294
        %v3306 = vld [vmem:[%s5] sm:$0x1]
        %v3308 = vlaneseq
        %v3309 = vshrl.u32 %v3308, 7
        %v3310 = vsub.s32 0, %v3309
        %v3311 = vrot.slane %v3306, %v3310
        %v3313 = vadd.f32 %v3296, %v3311
        %v3314 = vadd.f32 %v3297, %v3311
        %v3315 = vadd.f32 %v3298, %v3311
        %v3316 = vadd.f32 %v3299, %v3311
        %v3317 = vadd.f32 %v3300, %v3311
        %v3318 = vadd.f32 %v3301, %v3311
        %v3319 = vadd.f32 %v3302, %v3311
        %v3320 = vadd.f32 %v3303, %v3311
        %v3321 = vadd.f32 %v3304, %v3311
        %v3322 = vadd.f32 %v3305, %v3311
        %v3323 = vmax.f32 %v3313, 0.0
        %v3324 = vmax.f32 %v3314, 0.0
        %v3325 = vmax.f32 %v3315, 0.0
        %v3326 = vmax.f32 %v3316, 0.0
        %v3327 = vmax.f32 %v3317, 0.0
        %v3328 = vmax.f32 %v3318, 0.0
        %v3329 = vmax.f32 %v3319, 0.0
        %v3330 = vmax.f32 %v3320, 0.0
        %v3331 = vmax.f32 %v3321, 0.0
        %v3332 = vmax.f32 %v3322, 0.0
        %v3333 = vld [vmem:[#allocation3] sm:$0x1]
        %v3334 = vsel %vm745, 0, %v3333
        %3335 = vst [vmem:[#allocation3] sm:$0x1] %v3334
        %v3336 = vld [vmem:[#allocation3 + $0x8] sm:$0x1]
        %v3337 = vsel %vm745, 0, %v3336
        %3338 = vst [vmem:[#allocation3 + $0x8] sm:$0x1] %v3337
        %v3339 = vld [vmem:[#allocation3 + $0x10] sm:$0x1]
        %v3340 = vsel %vm745, 0, %v3339
        %3341 = vst [vmem:[#allocation3 + $0x10] sm:$0x1] %v3340
        %v3342 = vld [vmem:[#allocation3 + $0x18] sm:$0x1]
        %v3343 = vsel %vm745, 0, %v3342
        %3344 = vst [vmem:[#allocation3 + $0x18] sm:$0x1] %v3343
        %v3345 = vld [vmem:[#allocation3 + $0x20] sm:$0x1]
        %v3346 = vsel %vm745, 0, %v3345
        %3347 = vst [vmem:[#allocation3 + $0x20] sm:$0x1] %v3346
        %v3348 = vld [vmem:[#allocation3 + $0x28] sm:$0x1]
        %v3349 = vsel %vm745, 0, %v3348
        %3350 = vst [vmem:[#allocation3 + $0x28] sm:$0x1] %v3349
        %v3351 = vld [vmem:[#allocation3 + $0x30] sm:$0x1]
        %v3352 = vsel %vm745, 0, %v3351
        %3353 = vst [vmem:[#allocation3 + $0x30] sm:$0x1] %v3352
        %v3354 = vld [vmem:[#allocation3 + $0x38] sm:$0x1]
        %v3355 = vsel %vm745, 0, %v3354
        %3356 = vst [vmem:[#allocation3 + $0x38] sm:$0x1] %v3355
        %v3357 = vld [vmem:[#allocation3 + $0x40] sm:$0x1]
        %v3358 = vsel %vm745, 0, %v3357
        %3359 = vst [vmem:[#allocation3 + $0x40] sm:$0x1] %v3358
        %v3360 = vld [vmem:[#allocation3 + $0x48] sm:$0x1]
        %v3361 = vsel %vm745, 0, %v3360
        %3362 = vst [vmem:[#allocation3 + $0x48] sm:$0x1] %v3361
        %v3363 = vld [vmem:[#allocation3 + $0x4] sm:$0x1]
        %v3364 = vsel %vm783, 0, %v3363
        %3365 = vst [vmem:[#allocation3 + $0x4] sm:$0x1] %v3364
        %v3366 = vld [vmem:[#allocation3 + $0xc] sm:$0x1]
        %v3367 = vsel %vm783, 0, %v3366
        %3368 = vst [vmem:[#allocation3 + $0xc] sm:$0x1] %v3367
        %v3369 = vld [vmem:[#allocation3 + $0x14] sm:$0x1]
        %v3370 = vsel %vm783, 0, %v3369
        %3371 = vst [vmem:[#allocation3 + $0x14] sm:$0x1] %v3370
        %v3372 = vld [vmem:[#allocation3 + $0x1c] sm:$0x1]
        %v3373 = vsel %vm783, 0, %v3372
        %3374 = vst [vmem:[#allocation3 + $0x1c] sm:$0x1] %v3373
        %v3375 = vld [vmem:[#allocation3 + $0x24] sm:$0x1]
        %v3376 = vsel %vm783, 0, %v3375
        %3377 = vst [vmem:[#allocation3 + $0x24] sm:$0x1] %v3376
        %v3378 = vld [vmem:[#allocation3 + $0x2c] sm:$0x1]
        %v3379 = vsel %vm783, 0, %v3378
        %3380 = vst [vmem:[#allocation3 + $0x2c] sm:$0x1] %v3379
        %v3381 = vld [vmem:[#allocation3 + $0x34] sm:$0x1]
        %v3382 = vsel %vm783, 0, %v3381
        %3383 = vst [vmem:[#allocation3 + $0x34] sm:$0x1] %v3382
        %v3384 = vld [vmem:[#allocation3 + $0x3c] sm:$0x1]
        %v3385 = vsel %vm783, 0, %v3384
        %3386 = vst [vmem:[#allocation3 + $0x3c] sm:$0x1] %v3385
        %v3387 = vld [vmem:[#allocation3 + $0x44] sm:$0x1]
        %v3388 = vsel %vm783, 0, %v3387
        %3389 = vst [vmem:[#allocation3 + $0x44] sm:$0x1] %v3388
        %v3390 = vld [vmem:[#allocation3 + $0x4c] sm:$0x1]
        %v3391 = vsel %vm783, 0, %v3390
        %3392 = vst [vmem:[#allocation3 + $0x4c] sm:$0x1] %v3391
        %v3393 = vpack.c.bf16 %v3324, %v3323
        %v3394 = vpack.c.bf16 %v3326, %v3325
        %v3395 = vpack.c.bf16 %v3328, %v3327
        %v3396 = vpack.c.bf16 %v3330, %v3329
        %v3397 = vpack.c.bf16 %v3332, %v3331
        %v3403 = vunpack.c.l.b16 %v3393
        %v3404 = vunpack.c.h.b16 %v3393
        %v3405 = vunpack.c.l.b16 %v3394
        %v3406 = vunpack.c.h.b16 %v3394
        %v3407 = vunpack.c.l.b16 %v3395
        %v3408 = vunpack.c.h.b16 %v3395
        %v3409 = vunpack.c.l.b16 %v3396
        %v3410 = vunpack.c.h.b16 %v3396
        %v3411 = vunpack.c.l.b16 %v3397
        %v3412 = vunpack.c.h.b16 %v3397
        %v3413 = vpack.c.b16 %v3403, %v3403
        %v3414 = vpack.c.b16 %v3404, %v3404
        %v3415 = vpack.c.b16 %v3405, %v3405
        %v3416 = vpack.c.b16 %v3406, %v3406
        %v3417 = vpack.c.b16 %v3407, %v3407
        %v3418 = vpack.c.b16 %v3408, %v3408
        %v3419 = vpack.c.b16 %v3409, %v3409
        %v3420 = vpack.c.b16 %v3410, %v3410
        %v3421 = vpack.c.b16 %v3411, %v3411
        %v3422 = vpack.c.b16 %v3412, %v3412
        %v3424 = vshrl.u32 %v3413, 16
        %v3426 = vrot.slane %v3424, 7
        %v3427 = vshll.u32 %v3413, 16
        %v3429 = vor.u32 %v3426, %v3427
        %v3430 = vrot.slane %v3426, 4
        %v3432 = vshrl.u32 %v3414, 16
        %v3434 = vrot.slane %v3432, 7
        %v3435 = vshll.u32 %v3414, 16
        %v3437 = vor.u32 %v3434, %v3435
        %v3438 = vrot.slane %v3434, 4
        %v3440 = vshrl.u32 %v3415, 16
        %v3442 = vrot.slane %v3440, 7
        %v3443 = vshll.u32 %v3415, 16
        %v3445 = vor.u32 %v3442, %v3443
        %v3446 = vrot.slane %v3442, 4
        %v3448 = vshrl.u32 %v3416, 16
        %v3450 = vrot.slane %v3448, 7
        %v3451 = vshll.u32 %v3416, 16
        %v3453 = vor.u32 %v3450, %v3451
        %v3454 = vrot.slane %v3450, 4
        %v3456 = vshrl.u32 %v3417, 16
        %v3458 = vrot.slane %v3456, 7
        %v3459 = vshll.u32 %v3417, 16
        %v3461 = vor.u32 %v3458, %v3459
        %v3462 = vrot.slane %v3458, 4
        %v3464 = vshrl.u32 %v3418, 16
        %v3466 = vrot.slane %v3464, 7
        %v3467 = vshll.u32 %v3418, 16
        %v3469 = vor.u32 %v3466, %v3467
        %v3470 = vrot.slane %v3466, 4
        %v3472 = vshrl.u32 %v3419, 16
        %v3474 = vrot.slane %v3472, 7
        %v3475 = vshll.u32 %v3419, 16
        %v3477 = vor.u32 %v3474, %v3475
        %v3478 = vrot.slane %v3474, 4
        %v3480 = vshrl.u32 %v3420, 16
        %v3482 = vrot.slane %v3480, 7
        %v3483 = vshll.u32 %v3420, 16
        %v3485 = vor.u32 %v3482, %v3483
        %v3486 = vrot.slane %v3482, 4
        %v3488 = vshrl.u32 %v3421, 16
        %v3490 = vrot.slane %v3488, 7
        %v3491 = vshll.u32 %v3421, 16
        %v3493 = vor.u32 %v3490, %v3491
        %v3494 = vrot.slane %v3490, 4
        %v3496 = vshrl.u32 %v3422, 16
        %v3498 = vrot.slane %v3496, 7
        %v3499 = vshll.u32 %v3422, 16
        %v3501 = vor.u32 %v3498, %v3499
        %v3502 = vrot.slane %v3498, 4
        %v3523 = vld [vmem:[#allocation3] sm:$0xf]
        %v3524 = vsel %vm977, %v3429, %v3523
        %3525 = vst [vmem:[#allocation3] sm:$0xf] %v3524
        %v3526 = vld [vmem:[#allocation3 + $0x4] sm:$0x1]
        %v3527 = vsel %vm745, %v3430, %v3526
        %3528 = vst [vmem:[#allocation3 + $0x4] sm:$0x1] %v3527
        %v3529 = vld [vmem:[#allocation3 + $0x8] sm:$0xf]
        %v3530 = vsel %vm977, %v3437, %v3529
        %3531 = vst [vmem:[#allocation3 + $0x8] sm:$0xf] %v3530
        %v3532 = vld [vmem:[#allocation3 + $0xc] sm:$0x1]
        %v3533 = vsel %vm745, %v3438, %v3532
        %3534 = vst [vmem:[#allocation3 + $0xc] sm:$0x1] %v3533
        %v3535 = vld [vmem:[#allocation3 + $0x10] sm:$0xf]
        %v3536 = vsel %vm977, %v3445, %v3535
        %3537 = vst [vmem:[#allocation3 + $0x10] sm:$0xf] %v3536
        %v3538 = vld [vmem:[#allocation3 + $0x14] sm:$0x1]
        %v3539 = vsel %vm745, %v3446, %v3538
        %3540 = vst [vmem:[#allocation3 + $0x14] sm:$0x1] %v3539
        %v3541 = vld [vmem:[#allocation3 + $0x18] sm:$0xf]
        %v3542 = vsel %vm977, %v3453, %v3541
        %3543 = vst [vmem:[#allocation3 + $0x18] sm:$0xf] %v3542
        %v3544 = vld [vmem:[#allocation3 + $0x1c] sm:$0x1]
        %v3545 = vsel %vm745, %v3454, %v3544
        %3546 = vst [vmem:[#allocation3 + $0x1c] sm:$0x1] %v3545
        %v3547 = vld [vmem:[#allocation3 + $0x20] sm:$0xf]
        %v3548 = vsel %vm977, %v3461, %v3547
        %3549 = vst [vmem:[#allocation3 + $0x20] sm:$0xf] %v3548
        %v3550 = vld [vmem:[#allocation3 + $0x24] sm:$0x1]
        %v3551 = vsel %vm745, %v3462, %v3550
        %3552 = vst [vmem:[#allocation3 + $0x24] sm:$0x1] %v3551
        %v3553 = vld [vmem:[#allocation3 + $0x28] sm:$0xf]
        %v3554 = vsel %vm977, %v3469, %v3553
        %3555 = vst [vmem:[#allocation3 + $0x28] sm:$0xf] %v3554
        %v3556 = vld [vmem:[#allocation3 + $0x2c] sm:$0x1]
        %v3557 = vsel %vm745, %v3470, %v3556
        %3558 = vst [vmem:[#allocation3 + $0x2c] sm:$0x1] %v3557
        %v3559 = vld [vmem:[#allocation3 + $0x30] sm:$0xf]
        %v3560 = vsel %vm977, %v3477, %v3559
        %3561 = vst [vmem:[#allocation3 + $0x30] sm:$0xf] %v3560
        %v3562 = vld [vmem:[#allocation3 + $0x34] sm:$0x1]
        %v3563 = vsel %vm745, %v3478, %v3562
        %3564 = vst [vmem:[#allocation3 + $0x34] sm:$0x1] %v3563
        %v3565 = vld [vmem:[#allocation3 + $0x38] sm:$0xf]
        %v3566 = vsel %vm977, %v3485, %v3565
        %3567 = vst [vmem:[#allocation3 + $0x38] sm:$0xf] %v3566
        %v3568 = vld [vmem:[#allocation3 + $0x3c] sm:$0x1]
        %v3569 = vsel %vm745, %v3486, %v3568
        %3570 = vst [vmem:[#allocation3 + $0x3c] sm:$0x1] %v3569
        %v3571 = vld [vmem:[#allocation3 + $0x40] sm:$0xf]
        %v3572 = vsel %vm977, %v3493, %v3571
        %3573 = vst [vmem:[#allocation3 + $0x40] sm:$0xf] %v3572
        %v3574 = vld [vmem:[#allocation3 + $0x44] sm:$0x1]
        %v3575 = vsel %vm745, %v3494, %v3574
        %3576 = vst [vmem:[#allocation3 + $0x44] sm:$0x1] %v3575
        %v3577 = vld [vmem:[#allocation3 + $0x48] sm:$0xf]
        %v3578 = vsel %vm977, %v3501, %v3577
        %3579 = vst [vmem:[#allocation3 + $0x48] sm:$0xf] %v3578
        %v3580 = vld [vmem:[#allocation3 + $0x4c] sm:$0x1]
        %v3581 = vsel %vm745, %v3502, %v3580
        %3582 = vst [vmem:[#allocation3 + $0x4c] sm:$0x1] %v3581
        %p3583 = scmp.eq.s32.totalorder %s25, 0
        // Predicated region
        $region139: #{down_forward.1} parent=129 // pred_check
          %p3584 = pneg %p3583
        $region140: #{down_forward.1} parent=129 // pred_check_branch
          %3586 = sbr.rel (%p3584) target = $region142
        $region141: #{down_forward.1} parent=129 // pred_region
          %3587 = vst [vmem:[#allocation3] sm:$0xf] 0
          %3588 = vst [vmem:[#allocation3 + $0x4] sm:$0x1] 0
          %s3589 = scalar_lea.vmem [#allocation3], 72
          %3590 = vst [vmem:[%s3589] sm:$0xf] 0
          %3591 = vst [vmem:[%s3589 + $0x4] sm:$0x1] 0
        $region142: #{down_forward.1} parent=129 // pred_fallthru
          _
        %v3592 = vld [vmem:[#allocation3] sm:$0xf]
        %v3593 = vld [vmem:[#allocation3 + $0x8] sm:$0xf]
        %v3594 = vld [vmem:[#allocation3 + $0x10] sm:$0xf]
        %v3595 = vld [vmem:[#allocation3 + $0x18] sm:$0xf]
        %v3596 = vld [vmem:[#allocation3 + $0x20] sm:$0xf]
        %v3597 = vld [vmem:[#allocation3 + $0x28] sm:$0xf]
        %v3598 = vld [vmem:[#allocation3 + $0x30] sm:$0xf]
        %v3599 = vld [vmem:[#allocation3 + $0x38] sm:$0xf]
        %v3600 = vld [vmem:[%s6] sm:$0xf]
        %v3601 = vld [vmem:[%s6 + $0x4] sm:$0xf]
        %v3602 = vld [vmem:[%s6 + $0x8] sm:$0xf]
        %v3603 = vld [vmem:[%s6 + $0xc] sm:$0xf]
        %v3604 = vld [vmem:[%s6 + $0x10] sm:$0xf]
        %v3605 = vld [vmem:[%s6 + $0x14] sm:$0xf]
        %v3606 = vld [vmem:[%s6 + $0x18] sm:$0xf]
        %v3607 = vld [vmem:[%s6 + $0x1c] sm:$0xf]
        %v3608 = vld [vmem:[%s6 + $0x20] sm:$0xf]
        %v3609 = vld [vmem:[%s6 + $0x24] sm:$0xf]
        %v3610 = vld [vmem:[%s6 + $0x28] sm:$0xf]
        %v3611 = vld [vmem:[%s6 + $0x2c] sm:$0xf]
        %v3612 = vld [vmem:[%s6 + $0x30] sm:$0xf]
        %v3613 = vld [vmem:[%s6 + $0x34] sm:$0xf]
        %v3614 = vld [vmem:[%s6 + $0x38] sm:$0xf]
        %v3615 = vld [vmem:[%s6 + $0x3c] sm:$0xf]
        %v3616 = vld [vmem:[#allocation3 + $0x4] sm:$0x1]
        %v3617 = vld [vmem:[#allocation3 + $0xc] sm:$0x1]
        %v3618 = vld [vmem:[#allocation3 + $0x14] sm:$0x1]
        %v3619 = vld [vmem:[#allocation3 + $0x1c] sm:$0x1]
        %v3620 = vld [vmem:[#allocation3 + $0x24] sm:$0x1]
        %v3621 = vld [vmem:[#allocation3 + $0x2c] sm:$0x1]
        %v3622 = vld [vmem:[#allocation3 + $0x34] sm:$0x1]
        %v3623 = vld [vmem:[#allocation3 + $0x3c] sm:$0x1]
        %v3625 = vshrl.u32 %v3592, 16
        %v3627 = vrot.slane %v3625, 4
        %v3628 = vshll.u32 %v3592, 16
        %v3630 = vrot.slane %v3628, 5
        %v3631 = vor.u32 %v3627, %v3630
        %v3632 = vrot.slane %v3631, 4
        %v3634 = vshll.u32 %v3616, 16
        %v3636 = vrot.slane %v3634, 5
        %v3637 = vsel %vm1088, %v3632, %v3636
        %v3639 = vshrl.u32 %v3593, 16
        %v3641 = vrot.slane %v3639, 4
        %v3642 = vshll.u32 %v3593, 16
        %v3644 = vrot.slane %v3642, 5
        %v3645 = vor.u32 %v3641, %v3644
        %v3646 = vrot.slane %v3645, 4
        %v3648 = vshll.u32 %v3617, 16
        %v3650 = vrot.slane %v3648, 5
        %v3651 = vsel %vm1088, %v3646, %v3650
        %v3653 = vshrl.u32 %v3594, 16
        %v3655 = vrot.slane %v3653, 4
        %v3656 = vshll.u32 %v3594, 16
        %v3658 = vrot.slane %v3656, 5
        %v3659 = vor.u32 %v3655, %v3658
        %v3660 = vrot.slane %v3659, 4
        %v3662 = vshll.u32 %v3618, 16
        %v3664 = vrot.slane %v3662, 5
        %v3665 = vsel %vm1088, %v3660, %v3664
        %v3667 = vshrl.u32 %v3595, 16
        %v3669 = vrot.slane %v3667, 4
        %v3670 = vshll.u32 %v3595, 16
        %v3672 = vrot.slane %v3670, 5
        %v3673 = vor.u32 %v3669, %v3672
        %v3674 = vrot.slane %v3673, 4
        %v3676 = vshll.u32 %v3619, 16
        %v3678 = vrot.slane %v3676, 5
        %v3679 = vsel %vm1088, %v3674, %v3678
        %v3681 = vshrl.u32 %v3596, 16
        %v3683 = vrot.slane %v3681, 4
        %v3684 = vshll.u32 %v3596, 16
        %v3686 = vrot.slane %v3684, 5
        %v3687 = vor.u32 %v3683, %v3686
        %v3688 = vrot.slane %v3687, 4
        %v3690 = vshll.u32 %v3620, 16
        %v3692 = vrot.slane %v3690, 5
        %v3693 = vsel %vm1088, %v3688, %v3692
        %v3695 = vshrl.u32 %v3597, 16
        %v3697 = vrot.slane %v3695, 4
        %v3698 = vshll.u32 %v3597, 16
        %v3700 = vrot.slane %v3698, 5
        %v3701 = vor.u32 %v3697, %v3700
        %v3702 = vrot.slane %v3701, 4
        %v3704 = vshll.u32 %v3621, 16
        %v3706 = vrot.slane %v3704, 5
        %v3707 = vsel %vm1088, %v3702, %v3706
        %v3709 = vshrl.u32 %v3598, 16
        %v3711 = vrot.slane %v3709, 4
        %v3712 = vshll.u32 %v3598, 16
        %v3714 = vrot.slane %v3712, 5
        %v3715 = vor.u32 %v3711, %v3714
        %v3716 = vrot.slane %v3715, 4
        %v3718 = vshll.u32 %v3622, 16
        %v3720 = vrot.slane %v3718, 5
        %v3721 = vsel %vm1088, %v3716, %v3720
        %v3723 = vshrl.u32 %v3599, 16
        %v3725 = vrot.slane %v3723, 4
        %v3726 = vshll.u32 %v3599, 16
        %v3728 = vrot.slane %v3726, 5
        %v3729 = vor.u32 %v3725, %v3728
        %v3730 = vrot.slane %v3729, 4
        %v3732 = vshll.u32 %v3623, 16
        %v3734 = vrot.slane %v3732, 5
        %v3735 = vsel %vm1088, %v3730, %v3734
        %s3736 = scalar_lea.vmem %s6, 64
        %v3737 = vld [vmem:[%s3736] sm:$0xf]
        %v3738 = vld [vmem:[%s3736 + $0x4] sm:$0xf]
        %v3739 = vld [vmem:[%s3736 + $0x8] sm:$0xf]
        %v3740 = vld [vmem:[%s3736 + $0xc] sm:$0xf]
        %v3741 = vld [vmem:[%s3736 + $0x10] sm:$0xf]
        %v3742 = vld [vmem:[%s3736 + $0x14] sm:$0xf]
        %v3743 = vld [vmem:[%s3736 + $0x18] sm:$0xf]
        %v3744 = vld [vmem:[%s3736 + $0x1c] sm:$0xf]
        %v3745 = vld [vmem:[%s3736 + $0x20] sm:$0xf]
        %v3746 = vld [vmem:[%s3736 + $0x24] sm:$0xf]
        %v3747 = vld [vmem:[%s3736 + $0x28] sm:$0xf]
        %v3748 = vld [vmem:[%s3736 + $0x2c] sm:$0xf]
        %v3749 = vld [vmem:[%s3736 + $0x30] sm:$0xf]
        %v3750 = vld [vmem:[%s3736 + $0x34] sm:$0xf]
        %v3751 = vld [vmem:[%s3736 + $0x38] sm:$0xf]
        %v3752 = vld [vmem:[%s3736 + $0x3c] sm:$0xf]
        %v3753 = vunpack.c.l.b16 %v3637
        %v3754 = vunpack.c.l.b16 %v3651
        %v3755 = vunpack.c.l.b16 %v3665
        %v3756 = vunpack.c.l.b16 %v3679
        %v3757 = vunpack.c.l.b16 %v3693
        %v3758 = vunpack.c.l.b16 %v3707
        %v3759 = vunpack.c.l.b16 %v3721
        %v3760 = vunpack.c.l.b16 %v3735
        %v3761 = vpack.c.b16 %v3754, %v3753
        %v3762 = vpack.c.b16 %v3756, %v3755
        %v3763 = vpack.c.b16 %v3758, %v3757
        %v3764 = vpack.c.b16 %v3760, %v3759
        %v3785 = vunpack.c.l.b16 %v3737
        %v3786 = vunpack.c.l.b16 %v3738
        %v3787 = vunpack.c.l.b16 %v3739
        %v3788 = vunpack.c.l.b16 %v3740
        %v3789 = vunpack.c.l.b16 %v3741
        %v3790 = vunpack.c.l.b16 %v3742
        %v3791 = vunpack.c.l.b16 %v3743
        %v3792 = vunpack.c.l.b16 %v3744
        %v3793 = vunpack.c.l.b16 %v3745
        %v3794 = vunpack.c.l.b16 %v3746
        %v3795 = vunpack.c.l.b16 %v3747
        %v3796 = vunpack.c.l.b16 %v3748
        %v3797 = vunpack.c.l.b16 %v3749
        %v3798 = vunpack.c.l.b16 %v3750
        %v3799 = vunpack.c.l.b16 %v3751
        %v3800 = vunpack.c.l.b16 %v3752
        %v3801 = vpack.c.b16 %v3786, %v3785
        %v3802 = vpack.c.b16 %v3788, %v3787
        %v3803 = vpack.c.b16 %v3790, %v3789
        %v3804 = vpack.c.b16 %v3792, %v3791
        %v3805 = vpack.c.b16 %v3794, %v3793
        %v3806 = vpack.c.b16 %v3796, %v3795
        %v3807 = vpack.c.b16 %v3798, %v3797
        %v3808 = vpack.c.b16 %v3800, %v3799
        %3817 = vmatprep.subr.bf16.mxu0 0
        %3818 = vmatpush1.bf16.msra.mxu0 %v3801
        %3819 = vmatprep.subr.bf16.mxu0 0
        %3820 = vmatpush1.bf16.msra.mxu0 %v3802
        %3821 = vmatprep.subr.bf16.mxu0 0
        %3822 = vmatpush1.bf16.msra.mxu0 %v3803
        %3823 = vmatprep.subr.bf16.mxu0 0
        %3824 = vmatpush1.bf16.msra.mxu0 %v3804
        %3825 = vmatprep.subr.bf16.mxu0 0
        %3826 = vmatpush1.bf16.msra.mxu0 %v3805
        %3827 = vmatprep.subr.bf16.mxu0 0
        %3828 = vmatpush1.bf16.msra.mxu0 %v3806
        %3829 = vmatprep.subr.bf16.mxu0 0
        %3830 = vmatpush1.bf16.msra.mxu0 %v3807
        %3831 = vmatprep.subr.bf16.mxu0 0
        %3832 = vmatpush1.bf16.msra.mxu0 %v3808
        %3833 = vmatprep.subr.bf16.mxu0 0
        %3834 = vmatpush1.bf16.msra.mxu0 0
        %3835 = vmatprep.subr.bf16.mxu0 0
        %3836 = vmatpush1.bf16.msra.mxu0 0
        %3837 = vmatprep.subr.bf16.mxu0 0
        %3838 = vmatpush1.bf16.msra.mxu0 0
        %3839 = vmatprep.subr.bf16.mxu0 0
        %3840 = vmatpush1.bf16.msra.mxu0 0
        %3841 = vmatprep.subr.bf16.mxu0 0
        %3842 = vmatpush1.bf16.msra.mxu0 0
        %3843 = vmatprep.subr.bf16.mxu0 0
        %3844 = vmatpush1.bf16.msra.mxu0 0
        %3845 = vmatprep.subr.bf16.mxu0 0
        %3846 = vmatpush1.bf16.msra.mxu0 0
        %3847 = vmatprep.subr.bf16.mxu0 0
        %3848 = vmatpush1.bf16.msra.mxu0 0
        %3849 = vmatprep.mubr.bf16.mxu0 0
        %3850 = vmatmul.mubr.bf16.gmra.mrb[0].mxu0 %v3761
        %v3851 = vpop.f32.mrb[0].mxu0
        %v3852 = vadd.f32 0.0, %v3851
        %v3853 = vpop.f32.mrb[0].mxu0
        %v3854 = vpop.f32.mrb[0].mxu0
        %v3855 = vadd.f32 0.0, %v3854
        %v3856 = vpop.f32.mrb[0].mxu0
        %3857 = vmatprep.mubr.bf16.mxu0 0
        %3858 = vmatmul.mubr.bf16.gmra.mrb[0].mxu0 %v3762
        %v3859 = vpop.f32.mrb[0].mxu0
        %v3860 = vadd.f32 0.0, %v3859
        %v3861 = vpop.f32.mrb[0].mxu0
        %v3862 = vpop.f32.mrb[0].mxu0
        %v3863 = vadd.f32 0.0, %v3862
        %v3864 = vpop.f32.mrb[0].mxu0
        %3865 = vmatprep.mubr.bf16.mxu0 0
        %3866 = vmatmul.mubr.bf16.gmra.mrb[0].mxu0 %v3763
        %v3867 = vpop.f32.mrb[0].mxu0
        %v3868 = vadd.f32 0.0, %v3867
        %v3869 = vpop.f32.mrb[0].mxu0
        %v3870 = vpop.f32.mrb[0].mxu0
        %v3871 = vadd.f32 0.0, %v3870
        %v3872 = vpop.f32.mrb[0].mxu0
        %3873 = vmatprep.mubr.bf16.mxu0 0
        %3874 = vmatmul.mubr.bf16.gmra.mrb[0].mxu0 %v3764
        %v3875 = vpop.f32.mrb[0].mxu0
        %v3876 = vadd.f32 0.0, %v3875
        %v3877 = vpop.f32.mrb[0].mxu0
        %v3878 = vpop.f32.mrb[0].mxu0
        %v3879 = vadd.f32 0.0, %v3878
        %v3880 = vpop.f32.mrb[0].mxu0
        %3881 = vdwg.mxu0
        %v3890 = vunpack.c.l.b16 %v3592
        %v3891 = vunpack.c.l.b16 %v3593
        %v3892 = vunpack.c.l.b16 %v3594
        %v3893 = vunpack.c.l.b16 %v3595
        %v3894 = vunpack.c.l.b16 %v3596
        %v3895 = vunpack.c.l.b16 %v3597
        %v3896 = vunpack.c.l.b16 %v3598
        %v3897 = vunpack.c.l.b16 %v3599
        %v3898 = vpack.c.b16 %v3891, %v3890
        %v3899 = vpack.c.b16 %v3893, %v3892
        %v3900 = vpack.c.b16 %v3895, %v3894
        %v3901 = vpack.c.b16 %v3897, %v3896
        %v3922 = vunpack.c.l.b16 %v3600
        %v3923 = vunpack.c.l.b16 %v3601
        %v3924 = vunpack.c.l.b16 %v3602
        %v3925 = vunpack.c.l.b16 %v3603
        %v3926 = vunpack.c.l.b16 %v3604
        %v3927 = vunpack.c.l.b16 %v3605
        %v3928 = vunpack.c.l.b16 %v3606
        %v3929 = vunpack.c.l.b16 %v3607
        %v3930 = vunpack.c.l.b16 %v3608
        %v3931 = vunpack.c.l.b16 %v3609
        %v3932 = vunpack.c.l.b16 %v3610
        %v3933 = vunpack.c.l.b16 %v3611
        %v3934 = vunpack.c.l.b16 %v3612
        %v3935 = vunpack.c.l.b16 %v3613
        %v3936 = vunpack.c.l.b16 %v3614
        %v3937 = vunpack.c.l.b16 %v3615
        %v3938 = vpack.c.b16 %v3923, %v3922
        %v3939 = vpack.c.b16 %v3925, %v3924
        %v3940 = vpack.c.b16 %v3927, %v3926
        %v3941 = vpack.c.b16 %v3929, %v3928
        %v3942 = vpack.c.b16 %v3931, %v3930
        %v3943 = vpack.c.b16 %v3933, %v3932
        %v3944 = vpack.c.b16 %v3935, %v3934
        %v3945 = vpack.c.b16 %v3937, %v3936
        %3954 = vmatprep.subr.bf16.mxu0 0
        %3955 = vmatpush1.bf16.msra.mxu0 %v3938
        %3956 = vmatprep.subr.bf16.mxu0 0
        %3957 = vmatpush1.bf16.msra.mxu0 %v3939
        %3958 = vmatprep.subr.bf16.mxu0 0
        %3959 = vmatpush1.bf16.msra.mxu0 %v3940
        %3960 = vmatprep.subr.bf16.mxu0 0
        %3961 = vmatpush1.bf16.msra.mxu0 %v3941
        %3962 = vmatprep.subr.bf16.mxu0 0
        %3963 = vmatpush1.bf16.msra.mxu0 %v3942
        %3964 = vmatprep.subr.bf16.mxu0 0
        %3965 = vmatpush1.bf16.msra.mxu0 %v3943
        %3966 = vmatprep.subr.bf16.mxu0 0
        %3967 = vmatpush1.bf16.msra.mxu0 %v3944
        %3968 = vmatprep.subr.bf16.mxu0 0
        %3969 = vmatpush1.bf16.msra.mxu0 %v3945
        %3970 = vmatprep.subr.bf16.mxu0 0
        %3971 = vmatpush1.bf16.msra.mxu0 0
        %3972 = vmatprep.subr.bf16.mxu0 0
        %3973 = vmatpush1.bf16.msra.mxu0 0
        %3974 = vmatprep.subr.bf16.mxu0 0
        %3975 = vmatpush1.bf16.msra.mxu0 0
        %3976 = vmatprep.subr.bf16.mxu0 0
        %3977 = vmatpush1.bf16.msra.mxu0 0
        %3978 = vmatprep.subr.bf16.mxu0 0
        %3979 = vmatpush1.bf16.msra.mxu0 0
        %3980 = vmatprep.subr.bf16.mxu0 0
        %3981 = vmatpush1.bf16.msra.mxu0 0
        %3982 = vmatprep.subr.bf16.mxu0 0
        %3983 = vmatpush1.bf16.msra.mxu0 0
        %3984 = vmatprep.subr.bf16.mxu0 0
        %3985 = vmatpush1.bf16.msra.mxu0 0
        %3986 = vmatprep.mubr.bf16.mxu0 0
        %3987 = vmatmul.mubr.bf16.gmra.mrb[0].mxu0 %v3898
        %v3988 = vpop.f32.mrb[0].mxu0
        %v3989 = vadd.f32 %v3852, %v3988
        %v3990 = vpop.f32.mrb[0].mxu0
        %v3991 = vpop.f32.mrb[0].mxu0
        %v3992 = vadd.f32 %v3855, %v3991
        %v3993 = vpop.f32.mrb[0].mxu0
        %3994 = vmatprep.mubr.bf16.mxu0 0
        %3995 = vmatmul.mubr.bf16.gmra.mrb[0].mxu0 %v3899
        %v3996 = vpop.f32.mrb[0].mxu0
        %v3997 = vadd.f32 %v3860, %v3996
        %v3998 = vpop.f32.mrb[0].mxu0
        %v3999 = vpop.f32.mrb[0].mxu0
        %v4000 = vadd.f32 %v3863, %v3999
        %v4001 = vpop.f32.mrb[0].mxu0
        %4002 = vmatprep.mubr.bf16.mxu0 0
        %4003 = vmatmul.mubr.bf16.gmra.mrb[0].mxu0 %v3900
        %v4004 = vpop.f32.mrb[0].mxu0
        %v4005 = vadd.f32 %v3868, %v4004
        %v4006 = vpop.f32.mrb[0].mxu0
        %v4007 = vpop.f32.mrb[0].mxu0
        %v4008 = vadd.f32 %v3871, %v4007
        %v4009 = vpop.f32.mrb[0].mxu0
        %4010 = vmatprep.mubr.bf16.mxu0 0
        %4011 = vmatmul.mubr.bf16.gmra.mrb[0].mxu0 %v3901
        %v4012 = vpop.f32.mrb[0].mxu0
        %v4013 = vadd.f32 %v3876, %v4012
        %v4014 = vpop.f32.mrb[0].mxu0
        %v4015 = vpop.f32.mrb[0].mxu0
        %v4016 = vadd.f32 %v3879, %v4015
        %v4017 = vpop.f32.mrb[0].mxu0
        %4018 = vdwg.mxu0
        %v4019 = vld [vmem:[#allocation3] sm:$0xe]
        %v4020 = vld [vmem:[#allocation3 + $0x8] sm:$0xe]
        %v4021 = vld [vmem:[#allocation3 + $0x10] sm:$0xe]
        %v4022 = vld [vmem:[#allocation3 + $0x18] sm:$0xe]
        %v4023 = vld [vmem:[#allocation3 + $0x20] sm:$0xe]
        %v4024 = vld [vmem:[#allocation3 + $0x28] sm:$0xe]
        %v4025 = vld [vmem:[#allocation3 + $0x30] sm:$0xe]
        %v4026 = vld [vmem:[#allocation3 + $0x38] sm:$0xe]
        %v4043 = vrot.slane %v4019, 5
        %v4044 = vrot.slane %v4043, 4
        %v4045 = vrot.slane %v3616, 5
        %v4046 = vsel %vm1570, %v4044, %v4045
        %v4047 = vrot.slane %v4020, 5
        %v4048 = vrot.slane %v4047, 4
        %v4049 = vrot.slane %v3617, 5
        %v4050 = vsel %vm1570, %v4048, %v4049
        %v4051 = vrot.slane %v4021, 5
        %v4052 = vrot.slane %v4051, 4
        %v4053 = vrot.slane %v3618, 5
        %v4054 = vsel %vm1570, %v4052, %v4053
        %v4055 = vrot.slane %v4022, 5
        %v4056 = vrot.slane %v4055, 4
        %v4057 = vrot.slane %v3619, 5
        %v4058 = vsel %vm1570, %v4056, %v4057
        %v4059 = vrot.slane %v4023, 5
        %v4060 = vrot.slane %v4059, 4
        %v4061 = vrot.slane %v3620, 5
        %v4062 = vsel %vm1570, %v4060, %v4061
        %v4063 = vrot.slane %v4024, 5
        %v4064 = vrot.slane %v4063, 4
        %v4065 = vrot.slane %v3621, 5
        %v4066 = vsel %vm1570, %v4064, %v4065
        %v4067 = vrot.slane %v4025, 5
        %v4068 = vrot.slane %v4067, 4
        %v4069 = vrot.slane %v3622, 5
        %v4070 = vsel %vm1570, %v4068, %v4069
        %v4071 = vrot.slane %v4026, 5
        %v4072 = vrot.slane %v4071, 4
        %v4073 = vrot.slane %v3623, 5
        %v4074 = vsel %vm1570, %v4072, %v4073
        %s4075 = scalar_lea.vmem %s6, 128
        %v4076 = vld [vmem:[%s4075] sm:$0xf]
        %v4077 = vld [vmem:[%s4075 + $0x4] sm:$0xf]
        %v4078 = vld [vmem:[%s4075 + $0x8] sm:$0xf]
        %v4079 = vld [vmem:[%s4075 + $0xc] sm:$0xf]
        %v4080 = vld [vmem:[%s4075 + $0x10] sm:$0xf]
        %v4081 = vld [vmem:[%s4075 + $0x14] sm:$0xf]
        %v4082 = vld [vmem:[%s4075 + $0x18] sm:$0xf]
        %v4083 = vld [vmem:[%s4075 + $0x1c] sm:$0xf]
        %v4084 = vld [vmem:[%s4075 + $0x20] sm:$0xf]
        %v4085 = vld [vmem:[%s4075 + $0x24] sm:$0xf]
        %v4086 = vld [vmem:[%s4075 + $0x28] sm:$0xf]
        %v4087 = vld [vmem:[%s4075 + $0x2c] sm:$0xf]
        %v4088 = vld [vmem:[%s4075 + $0x30] sm:$0xf]
        %v4089 = vld [vmem:[%s4075 + $0x34] sm:$0xf]
        %v4090 = vld [vmem:[%s4075 + $0x38] sm:$0xf]
        %v4091 = vld [vmem:[%s4075 + $0x3c] sm:$0xf]
        %v4092 = vunpack.c.l.b16 %v4046
        %v4093 = vunpack.c.l.b16 %v4050
        %v4094 = vunpack.c.l.b16 %v4054
        %v4095 = vunpack.c.l.b16 %v4058
        %v4096 = vunpack.c.l.b16 %v4062
        %v4097 = vunpack.c.l.b16 %v4066
        %v4098 = vunpack.c.l.b16 %v4070
        %v4099 = vunpack.c.l.b16 %v4074
        %v4100 = vpack.c.b16 %v4093, %v4092
        %v4101 = vpack.c.b16 %v4095, %v4094
        %v4102 = vpack.c.b16 %v4097, %v4096
        %v4103 = vpack.c.b16 %v4099, %v4098
        %v4124 = vunpack.c.l.b16 %v4076
        %v4125 = vunpack.c.l.b16 %v4077
        %v4126 = vunpack.c.l.b16 %v4078
        %v4127 = vunpack.c.l.b16 %v4079
        %v4128 = vunpack.c.l.b16 %v4080
        %v4129 = vunpack.c.l.b16 %v4081
        %v4130 = vunpack.c.l.b16 %v4082
        %v4131 = vunpack.c.l.b16 %v4083
        %v4132 = vunpack.c.l.b16 %v4084
        %v4133 = vunpack.c.l.b16 %v4085
        %v4134 = vunpack.c.l.b16 %v4086
        %v4135 = vunpack.c.l.b16 %v4087
        %v4136 = vunpack.c.l.b16 %v4088
        %v4137 = vunpack.c.l.b16 %v4089
        %v4138 = vunpack.c.l.b16 %v4090
        %v4139 = vunpack.c.l.b16 %v4091
        %v4140 = vpack.c.b16 %v4125, %v4124
        %v4141 = vpack.c.b16 %v4127, %v4126
        %v4142 = vpack.c.b16 %v4129, %v4128
        %v4143 = vpack.c.b16 %v4131, %v4130
        %v4144 = vpack.c.b16 %v4133, %v4132
        %v4145 = vpack.c.b16 %v4135, %v4134
        %v4146 = vpack.c.b16 %v4137, %v4136
        %v4147 = vpack.c.b16 %v4139, %v4138
        %4156 = vmatprep.subr.bf16.mxu0 0
        %4157 = vmatpush1.bf16.msra.mxu0 %v4140
        %4158 = vmatprep.subr.bf16.mxu0 0
        %4159 = vmatpush1.bf16.msra.mxu0 %v4141
        %4160 = vmatprep.subr.bf16.mxu0 0
        %4161 = vmatpush1.bf16.msra.mxu0 %v4142
        %4162 = vmatprep.subr.bf16.mxu0 0
        %4163 = vmatpush1.bf16.msra.mxu0 %v4143
        %4164 = vmatprep.subr.bf16.mxu0 0
        %4165 = vmatpush1.bf16.msra.mxu0 %v4144
        %4166 = vmatprep.subr.bf16.mxu0 0
        %4167 = vmatpush1.bf16.msra.mxu0 %v4145
        %4168 = vmatprep.subr.bf16.mxu0 0
        %4169 = vmatpush1.bf16.msra.mxu0 %v4146
        %4170 = vmatprep.subr.bf16.mxu0 0
        %4171 = vmatpush1.bf16.msra.mxu0 %v4147
        %4172 = vmatprep.subr.bf16.mxu0 0
        %4173 = vmatpush1.bf16.msra.mxu0 0
        %4174 = vmatprep.subr.bf16.mxu0 0
        %4175 = vmatpush1.bf16.msra.mxu0 0
        %4176 = vmatprep.subr.bf16.mxu0 0
        %4177 = vmatpush1.bf16.msra.mxu0 0
        %4178 = vmatprep.subr.bf16.mxu0 0
        %4179 = vmatpush1.bf16.msra.mxu0 0
        %4180 = vmatprep.subr.bf16.mxu0 0
        %4181 = vmatpush1.bf16.msra.mxu0 0
        %4182 = vmatprep.subr.bf16.mxu0 0
        %4183 = vmatpush1.bf16.msra.mxu0 0
        %4184 = vmatprep.subr.bf16.mxu0 0
        %4185 = vmatpush1.bf16.msra.mxu0 0
        %4186 = vmatprep.subr.bf16.mxu0 0
        %4187 = vmatpush1.bf16.msra.mxu0 0
        %4188 = vmatprep.mubr.bf16.mxu0 0
        %4189 = vmatmul.mubr.bf16.gmra.mrb[0].mxu0 %v4100
        %v4190 = vpop.f32.mrb[0].mxu0
        %v4191 = vadd.f32 0.0, %v4190
        %v4192 = vpop.f32.mrb[0].mxu0
        %v4193 = vpop.f32.mrb[0].mxu0
        %v4194 = vadd.f32 0.0, %v4193
        %v4195 = vpop.f32.mrb[0].mxu0
        %4196 = vmatprep.mubr.bf16.mxu0 0
        %4197 = vmatmul.mubr.bf16.gmra.mrb[0].mxu0 %v4101
        %v4198 = vpop.f32.mrb[0].mxu0
        %v4199 = vadd.f32 0.0, %v4198
        %v4200 = vpop.f32.mrb[0].mxu0
        %v4201 = vpop.f32.mrb[0].mxu0
        %v4202 = vadd.f32 0.0, %v4201
        %v4203 = vpop.f32.mrb[0].mxu0
        %4204 = vmatprep.mubr.bf16.mxu0 0
        %4205 = vmatmul.mubr.bf16.gmra.mrb[0].mxu0 %v4102
        %v4206 = vpop.f32.mrb[0].mxu0
        %v4207 = vadd.f32 0.0, %v4206
        %v4208 = vpop.f32.mrb[0].mxu0
        %v4209 = vpop.f32.mrb[0].mxu0
        %v4210 = vadd.f32 0.0, %v4209
        %v4211 = vpop.f32.mrb[0].mxu0
        %4212 = vmatprep.mubr.bf16.mxu0 0
        %4213 = vmatmul.mubr.bf16.gmra.mrb[0].mxu0 %v4103
        %v4214 = vpop.f32.mrb[0].mxu0
        %v4215 = vadd.f32 0.0, %v4214
        %v4216 = vpop.f32.mrb[0].mxu0
        %v4217 = vpop.f32.mrb[0].mxu0
        %v4218 = vadd.f32 0.0, %v4217
        %v4219 = vpop.f32.mrb[0].mxu0
        %4220 = vdwg.mxu0
        %v4221 = vadd.f32 %v3989, %v4191
        %v4222 = vadd.f32 %v3992, %v4194
        %v4223 = vadd.f32 %v3997, %v4199
        %v4224 = vadd.f32 %v4000, %v4202
        %v4225 = vadd.f32 %v4005, %v4207
        %v4226 = vadd.f32 %v4008, %v4210
        %v4227 = vadd.f32 %v4013, %v4215
        %v4228 = vadd.f32 %v4016, %v4218
        %s4229 = scalar_lea.vmem [#allocation3], 8
        %v4230 = vld [vmem:[%s4229] sm:$0xf]
        %v4231 = vld [vmem:[%s4229 + $0x8] sm:$0xf]
        %v4232 = vld [vmem:[%s4229 + $0x10] sm:$0xf]
        %v4233 = vld [vmem:[%s4229 + $0x18] sm:$0xf]
        %v4234 = vld [vmem:[%s4229 + $0x20] sm:$0xf]
        %v4235 = vld [vmem:[%s4229 + $0x28] sm:$0xf]
        %v4236 = vld [vmem:[%s4229 + $0x30] sm:$0xf]
        %v4237 = vld [vmem:[%s4229 + $0x38] sm:$0xf]
        %s4238 = scalar_lea.vmem %s6, 192
        %v4239 = vld [vmem:[%s4238] sm:$0xf]
        %v4240 = vld [vmem:[%s4238 + $0x4] sm:$0xf]
        %v4241 = vld [vmem:[%s4238 + $0x8] sm:$0xf]
        %v4242 = vld [vmem:[%s4238 + $0xc] sm:$0xf]
        %v4243 = vld [vmem:[%s4238 + $0x10] sm:$0xf]
        %v4244 = vld [vmem:[%s4238 + $0x14] sm:$0xf]
        %v4245 = vld [vmem:[%s4238 + $0x18] sm:$0xf]
        %v4246 = vld [vmem:[%s4238 + $0x1c] sm:$0xf]
        %v4247 = vld [vmem:[%s4238 + $0x20] sm:$0xf]
        %v4248 = vld [vmem:[%s4238 + $0x24] sm:$0xf]
        %v4249 = vld [vmem:[%s4238 + $0x28] sm:$0xf]
        %v4250 = vld [vmem:[%s4238 + $0x2c] sm:$0xf]
        %v4251 = vld [vmem:[%s4238 + $0x30] sm:$0xf]
        %v4252 = vld [vmem:[%s4238 + $0x34] sm:$0xf]
        %v4253 = vld [vmem:[%s4238 + $0x38] sm:$0xf]
        %v4254 = vld [vmem:[%s4238 + $0x3c] sm:$0xf]
        %v4263 = vunpack.c.l.b16 %v4230
        %v4264 = vunpack.c.l.b16 %v4231
        %v4265 = vunpack.c.l.b16 %v4232
        %v4266 = vunpack.c.l.b16 %v4233
        %v4267 = vunpack.c.l.b16 %v4234
        %v4268 = vunpack.c.l.b16 %v4235
        %v4269 = vunpack.c.l.b16 %v4236
        %v4270 = vunpack.c.l.b16 %v4237
        %v4271 = vpack.c.b16 %v4264, %v4263
        %v4272 = vpack.c.b16 %v4266, %v4265
        %v4273 = vpack.c.b16 %v4268, %v4267
        %v4274 = vpack.c.b16 %v4270, %v4269
        %v4295 = vunpack.c.l.b16 %v4239
        %v4296 = vunpack.c.l.b16 %v4240
        %v4297 = vunpack.c.l.b16 %v4241
        %v4298 = vunpack.c.l.b16 %v4242
        %v4299 = vunpack.c.l.b16 %v4243
        %v4300 = vunpack.c.l.b16 %v4244
        %v4301 = vunpack.c.l.b16 %v4245
        %v4302 = vunpack.c.l.b16 %v4246
        %v4303 = vunpack.c.l.b16 %v4247
        %v4304 = vunpack.c.l.b16 %v4248
        %v4305 = vunpack.c.l.b16 %v4249
        %v4306 = vunpack.c.l.b16 %v4250
        %v4307 = vunpack.c.l.b16 %v4251
        %v4308 = vunpack.c.l.b16 %v4252
        %v4309 = vunpack.c.l.b16 %v4253
        %v4310 = vunpack.c.l.b16 %v4254
        %v4311 = vpack.c.b16 %v4296, %v4295
        %v4312 = vpack.c.b16 %v4298, %v4297
        %v4313 = vpack.c.b16 %v4300, %v4299
        %v4314 = vpack.c.b16 %v4302, %v4301
        %v4315 = vpack.c.b16 %v4304, %v4303
        %v4316 = vpack.c.b16 %v4306, %v4305
        %v4317 = vpack.c.b16 %v4308, %v4307
        %v4318 = vpack.c.b16 %v4310, %v4309
        %4327 = vmatprep.subr.bf16.mxu0 0
        %4328 = vmatpush1.bf16.msra.mxu0 %v4311
        %4329 = vmatprep.subr.bf16.mxu0 0
        %4330 = vmatpush1.bf16.msra.mxu0 %v4312
        %4331 = vmatprep.subr.bf16.mxu0 0
        %4332 = vmatpush1.bf16.msra.mxu0 %v4313
        %4333 = vmatprep.subr.bf16.mxu0 0
        %4334 = vmatpush1.bf16.msra.mxu0 %v4314
        %4335 = vmatprep.subr.bf16.mxu0 0
        %4336 = vmatpush1.bf16.msra.mxu0 %v4315
        %4337 = vmatprep.subr.bf16.mxu0 0
        %4338 = vmatpush1.bf16.msra.mxu0 %v4316
        %4339 = vmatprep.subr.bf16.mxu0 0
        %4340 = vmatpush1.bf16.msra.mxu0 %v4317
        %4341 = vmatprep.subr.bf16.mxu0 0
        %4342 = vmatpush1.bf16.msra.mxu0 %v4318
        %4343 = vmatprep.subr.bf16.mxu0 0
        %4344 = vmatpush1.bf16.msra.mxu0 0
        %4345 = vmatprep.subr.bf16.mxu0 0
        %4346 = vmatpush1.bf16.msra.mxu0 0
        %4347 = vmatprep.subr.bf16.mxu0 0
        %4348 = vmatpush1.bf16.msra.mxu0 0
        %4349 = vmatprep.subr.bf16.mxu0 0
        %4350 = vmatpush1.bf16.msra.mxu0 0
        %4351 = vmatprep.subr.bf16.mxu0 0
        %4352 = vmatpush1.bf16.msra.mxu0 0
        %4353 = vmatprep.subr.bf16.mxu0 0
        %4354 = vmatpush1.bf16.msra.mxu0 0
        %4355 = vmatprep.subr.bf16.mxu0 0
        %4356 = vmatpush1.bf16.msra.mxu0 0
        %4357 = vmatprep.subr.bf16.mxu0 0
        %4358 = vmatpush1.bf16.msra.mxu0 0
        %4359 = vmatprep.mubr.bf16.mxu0 0
        %4360 = vmatmul.mubr.bf16.gmra.mrb[0].mxu0 %v4271
        %v4361 = vpop.f32.mrb[0].mxu0
        %v4362 = vadd.f32 0.0, %v4361
        %v4363 = vpop.f32.mrb[0].mxu0
        %v4364 = vpop.f32.mrb[0].mxu0
        %v4365 = vadd.f32 0.0, %v4364
        %v4366 = vpop.f32.mrb[0].mxu0
        %4367 = vmatprep.mubr.bf16.mxu0 0
        %4368 = vmatmul.mubr.bf16.gmra.mrb[0].mxu0 %v4272
        %v4369 = vpop.f32.mrb[0].mxu0
        %v4370 = vadd.f32 0.0, %v4369
        %v4371 = vpop.f32.mrb[0].mxu0
        %v4372 = vpop.f32.mrb[0].mxu0
        %v4373 = vadd.f32 0.0, %v4372
        %v4374 = vpop.f32.mrb[0].mxu0
        %4375 = vmatprep.mubr.bf16.mxu0 0
        %4376 = vmatmul.mubr.bf16.gmra.mrb[0].mxu0 %v4273
        %v4377 = vpop.f32.mrb[0].mxu0
        %v4378 = vadd.f32 0.0, %v4377
        %v4379 = vpop.f32.mrb[0].mxu0
        %v4380 = vpop.f32.mrb[0].mxu0
        %v4381 = vadd.f32 0.0, %v4380
        %v4382 = vpop.f32.mrb[0].mxu0
        %4383 = vmatprep.mubr.bf16.mxu0 0
        %4384 = vmatmul.mubr.bf16.gmra.mrb[0].mxu0 %v4274
        %v4385 = vpop.f32.mrb[0].mxu0
        %v4386 = vadd.f32 0.0, %v4385
        %v4387 = vpop.f32.mrb[0].mxu0
        %v4388 = vpop.f32.mrb[0].mxu0
        %v4389 = vadd.f32 0.0, %v4388
        %v4390 = vpop.f32.mrb[0].mxu0
        %4391 = vdwg.mxu0
        %v4392 = vadd.f32 %v4221, %v4362
        %v4393 = vadd.f32 %v4222, %v4365
        %v4394 = vadd.f32 %v4223, %v4370
        %v4395 = vadd.f32 %v4224, %v4373
        %v4396 = vadd.f32 %v4225, %v4378
        %v4397 = vadd.f32 %v4226, %v4381
        %v4398 = vadd.f32 %v4227, %v4386
        %v4399 = vadd.f32 %v4228, %v4389
        %v4400 = vld [vmem:[%s4229] sm:$0xf]
        %v4401 = vld [vmem:[%s4229 + $0x4] sm:$0x1]
        %v4402 = vld [vmem:[%s4229 + $0x8] sm:$0xf]
        %v4403 = vld [vmem:[%s4229 + $0xc] sm:$0x1]
        %v4404 = vld [vmem:[%s4229 + $0x10] sm:$0xf]
        %v4405 = vld [vmem:[%s4229 + $0x14] sm:$0x1]
        %v4406 = vld [vmem:[%s4229 + $0x18] sm:$0xf]
        %v4407 = vld [vmem:[%s4229 + $0x1c] sm:$0x1]
        %v4408 = vld [vmem:[%s4229 + $0x20] sm:$0xf]
        %v4409 = vld [vmem:[%s4229 + $0x24] sm:$0x1]
        %v4410 = vld [vmem:[%s4229 + $0x28] sm:$0xf]
        %v4411 = vld [vmem:[%s4229 + $0x2c] sm:$0x1]
        %v4412 = vld [vmem:[%s4229 + $0x30] sm:$0xf]
        %v4413 = vld [vmem:[%s4229 + $0x34] sm:$0x1]
        %v4414 = vld [vmem:[%s4229 + $0x38] sm:$0xf]
        %v4415 = vld [vmem:[%s4229 + $0x3c] sm:$0x1]
        %v4417 = vshrl.u32 %v4400, 16
        %v4419 = vrot.slane %v4417, 4
        %v4420 = vshll.u32 %v4400, 16
        %v4422 = vrot.slane %v4420, 5
        %v4423 = vor.u32 %v4419, %v4422
        %v4424 = vrot.slane %v4423, 4
        %v4426 = vshll.u32 %v4401, 16
        %v4428 = vrot.slane %v4426, 5
        %v4429 = vsel %vm1088, %v4424, %v4428
        %v4431 = vshrl.u32 %v4402, 16
        %v4433 = vrot.slane %v4431, 4
        %v4434 = vshll.u32 %v4402, 16
        %v4436 = vrot.slane %v4434, 5
        %v4437 = vor.u32 %v4433, %v4436
        %v4438 = vrot.slane %v4437, 4
        %v4440 = vshll.u32 %v4403, 16
        %v4442 = vrot.slane %v4440, 5
        %v4443 = vsel %vm1088, %v4438, %v4442
        %v4445 = vshrl.u32 %v4404, 16
        %v4447 = vrot.slane %v4445, 4
        %v4448 = vshll.u32 %v4404, 16
        %v4450 = vrot.slane %v4448, 5
        %v4451 = vor.u32 %v4447, %v4450
        %v4452 = vrot.slane %v4451, 4
        %v4454 = vshll.u32 %v4405, 16
        %v4456 = vrot.slane %v4454, 5
        %v4457 = vsel %vm1088, %v4452, %v4456
        %v4459 = vshrl.u32 %v4406, 16
        %v4461 = vrot.slane %v4459, 4
        %v4462 = vshll.u32 %v4406, 16
        %v4464 = vrot.slane %v4462, 5
        %v4465 = vor.u32 %v4461, %v4464
        %v4466 = vrot.slane %v4465, 4
        %v4468 = vshll.u32 %v4407, 16
        %v4470 = vrot.slane %v4468, 5
        %v4471 = vsel %vm1088, %v4466, %v4470
        %v4473 = vshrl.u32 %v4408, 16
        %v4475 = vrot.slane %v4473, 4
        %v4476 = vshll.u32 %v4408, 16
        %v4478 = vrot.slane %v4476, 5
        %v4479 = vor.u32 %v4475, %v4478
        %v4480 = vrot.slane %v4479, 4
        %v4482 = vshll.u32 %v4409, 16
        %v4484 = vrot.slane %v4482, 5
        %v4485 = vsel %vm1088, %v4480, %v4484
        %v4487 = vshrl.u32 %v4410, 16
        %v4489 = vrot.slane %v4487, 4
        %v4490 = vshll.u32 %v4410, 16
        %v4492 = vrot.slane %v4490, 5
        %v4493 = vor.u32 %v4489, %v4492
        %v4494 = vrot.slane %v4493, 4
        %v4496 = vshll.u32 %v4411, 16
        %v4498 = vrot.slane %v4496, 5
        %v4499 = vsel %vm1088, %v4494, %v4498
        %v4501 = vshrl.u32 %v4412, 16
        %v4503 = vrot.slane %v4501, 4
        %v4504 = vshll.u32 %v4412, 16
        %v4506 = vrot.slane %v4504, 5
        %v4507 = vor.u32 %v4503, %v4506
        %v4508 = vrot.slane %v4507, 4
        %v4510 = vshll.u32 %v4413, 16
        %v4512 = vrot.slane %v4510, 5
        %v4513 = vsel %vm1088, %v4508, %v4512
        %v4515 = vshrl.u32 %v4414, 16
        %v4517 = vrot.slane %v4515, 4
        %v4518 = vshll.u32 %v4414, 16
        %v4520 = vrot.slane %v4518, 5
        %v4521 = vor.u32 %v4517, %v4520
        %v4522 = vrot.slane %v4521, 4
        %v4524 = vshll.u32 %v4415, 16
        %v4526 = vrot.slane %v4524, 5
        %v4527 = vsel %vm1088, %v4522, %v4526
        %s4528 = scalar_lea.vmem %s6, 256
        %v4529 = vld [vmem:[%s4528] sm:$0xf]
        %v4530 = vld [vmem:[%s4528 + $0x4] sm:$0xf]
        %v4531 = vld [vmem:[%s4528 + $0x8] sm:$0xf]
        %v4532 = vld [vmem:[%s4528 + $0xc] sm:$0xf]
        %v4533 = vld [vmem:[%s4528 + $0x10] sm:$0xf]
        %v4534 = vld [vmem:[%s4528 + $0x14] sm:$0xf]
        %v4535 = vld [vmem:[%s4528 + $0x18] sm:$0xf]
        %v4536 = vld [vmem:[%s4528 + $0x1c] sm:$0xf]
        %v4537 = vld [vmem:[%s4528 + $0x20] sm:$0xf]
        %v4538 = vld [vmem:[%s4528 + $0x24] sm:$0xf]
        %v4539 = vld [vmem:[%s4528 + $0x28] sm:$0xf]
        %v4540 = vld [vmem:[%s4528 + $0x2c] sm:$0xf]
        %v4541 = vld [vmem:[%s4528 + $0x30] sm:$0xf]
        %v4542 = vld [vmem:[%s4528 + $0x34] sm:$0xf]
        %v4543 = vld [vmem:[%s4528 + $0x38] sm:$0xf]
        %v4544 = vld [vmem:[%s4528 + $0x3c] sm:$0xf]
        %v4545 = vunpack.c.l.b16 %v4429
        %v4546 = vunpack.c.l.b16 %v4443
        %v4547 = vunpack.c.l.b16 %v4457
        %v4548 = vunpack.c.l.b16 %v4471
        %v4549 = vunpack.c.l.b16 %v4485
        %v4550 = vunpack.c.l.b16 %v4499
        %v4551 = vunpack.c.l.b16 %v4513
        %v4552 = vunpack.c.l.b16 %v4527
        %v4553 = vpack.c.b16 %v4546, %v4545
        %v4554 = vpack.c.b16 %v4548, %v4547
        %v4555 = vpack.c.b16 %v4550, %v4549
        %v4556 = vpack.c.b16 %v4552, %v4551
        %v4577 = vunpack.c.l.b16 %v4529
        %v4578 = vunpack.c.l.b16 %v4530
        %v4579 = vunpack.c.l.b16 %v4531
        %v4580 = vunpack.c.l.b16 %v4532
        %v4581 = vunpack.c.l.b16 %v4533
        %v4582 = vunpack.c.l.b16 %v4534
        %v4583 = vunpack.c.l.b16 %v4535
        %v4584 = vunpack.c.l.b16 %v4536
        %v4585 = vunpack.c.l.b16 %v4537
        %v4586 = vunpack.c.l.b16 %v4538
        %v4587 = vunpack.c.l.b16 %v4539
        %v4588 = vunpack.c.l.b16 %v4540
        %v4589 = vunpack.c.l.b16 %v4541
        %v4590 = vunpack.c.l.b16 %v4542
        %v4591 = vunpack.c.l.b16 %v4543
        %v4592 = vunpack.c.l.b16 %v4544
        %v4593 = vpack.c.b16 %v4578, %v4577
        %v4594 = vpack.c.b16 %v4580, %v4579
        %v4595 = vpack.c.b16 %v4582, %v4581
        %v4596 = vpack.c.b16 %v4584, %v4583
        %v4597 = vpack.c.b16 %v4586, %v4585
        %v4598 = vpack.c.b16 %v4588, %v4587
        %v4599 = vpack.c.b16 %v4590, %v4589
        %v4600 = vpack.c.b16 %v4592, %v4591
        %4609 = vmatprep.subr.bf16.mxu0 0
        %4610 = vmatpush1.bf16.msra.mxu0 %v4593
        %4611 = vmatprep.subr.bf16.mxu0 0
        %4612 = vmatpush1.bf16.msra.mxu0 %v4594
        %4613 = vmatprep.subr.bf16.mxu0 0
        %4614 = vmatpush1.bf16.msra.mxu0 %v4595
        %4615 = vmatprep.subr.bf16.mxu0 0
        %4616 = vmatpush1.bf16.msra.mxu0 %v4596
        %4617 = vmatprep.subr.bf16.mxu0 0
        %4618 = vmatpush1.bf16.msra.mxu0 %v4597
        %4619 = vmatprep.subr.bf16.mxu0 0
        %4620 = vmatpush1.bf16.msra.mxu0 %v4598
        %4621 = vmatprep.subr.bf16.mxu0 0
        %4622 = vmatpush1.bf16.msra.mxu0 %v4599
        %4623 = vmatprep.subr.bf16.mxu0 0
        %4624 = vmatpush1.bf16.msra.mxu0 %v4600
        %4625 = vmatprep.subr.bf16.mxu0 0
        %4626 = vmatpush1.bf16.msra.mxu0 0
        %4627 = vmatprep.subr.bf16.mxu0 0
        %4628 = vmatpush1.bf16.msra.mxu0 0
        %4629 = vmatprep.subr.bf16.mxu0 0
        %4630 = vmatpush1.bf16.msra.mxu0 0
        %4631 = vmatprep.subr.bf16.mxu0 0
        %4632 = vmatpush1.bf16.msra.mxu0 0
        %4633 = vmatprep.subr.bf16.mxu0 0
        %4634 = vmatpush1.bf16.msra.mxu0 0
        %4635 = vmatprep.subr.bf16.mxu0 0
        %4636 = vmatpush1.bf16.msra.mxu0 0
        %4637 = vmatprep.subr.bf16.mxu0 0
        %4638 = vmatpush1.bf16.msra.mxu0 0
        %4639 = vmatprep.subr.bf16.mxu0 0
        %4640 = vmatpush1.bf16.msra.mxu0 0
        %4641 = vmatprep.mubr.bf16.mxu0 0
        %4642 = vmatmul.mubr.bf16.gmra.mrb[0].mxu0 %v4553
        %v4643 = vpop.f32.mrb[0].mxu0
        %v4644 = vadd.f32 0.0, %v4643
        %v4645 = vpop.f32.mrb[0].mxu0
        %v4646 = vpop.f32.mrb[0].mxu0
        %v4647 = vadd.f32 0.0, %v4646
        %v4648 = vpop.f32.mrb[0].mxu0
        %4649 = vmatprep.mubr.bf16.mxu0 0
        %4650 = vmatmul.mubr.bf16.gmra.mrb[0].mxu0 %v4554
        %v4651 = vpop.f32.mrb[0].mxu0
        %v4652 = vadd.f32 0.0, %v4651
        %v4653 = vpop.f32.mrb[0].mxu0
        %v4654 = vpop.f32.mrb[0].mxu0
        %v4655 = vadd.f32 0.0, %v4654
        %v4656 = vpop.f32.mrb[0].mxu0
        %4657 = vmatprep.mubr.bf16.mxu0 0
        %4658 = vmatmul.mubr.bf16.gmra.mrb[0].mxu0 %v4555
        %v4659 = vpop.f32.mrb[0].mxu0
        %v4660 = vadd.f32 0.0, %v4659
        %v4661 = vpop.f32.mrb[0].mxu0
        %v4662 = vpop.f32.mrb[0].mxu0
        %v4663 = vadd.f32 0.0, %v4662
        %v4664 = vpop.f32.mrb[0].mxu0
        %4665 = vmatprep.mubr.bf16.mxu0 0
        %4666 = vmatmul.mubr.bf16.gmra.mrb[0].mxu0 %v4556
        %v4667 = vpop.f32.mrb[0].mxu0
        %v4668 = vadd.f32 0.0, %v4667
        %v4669 = vpop.f32.mrb[0].mxu0
        %v4670 = vpop.f32.mrb[0].mxu0
        %v4671 = vadd.f32 0.0, %v4670
        %v4672 = vpop.f32.mrb[0].mxu0
        %4673 = vdwg.mxu0
        %v4674 = vadd.f32 %v4392, %v4644
        %v4675 = vadd.f32 %v4393, %v4647
        %v4676 = vadd.f32 %v4394, %v4652
        %v4677 = vadd.f32 %v4395, %v4655
        %v4678 = vadd.f32 %v4396, %v4660
        %v4679 = vadd.f32 %v4397, %v4663
        %v4680 = vadd.f32 %v4398, %v4668
        %v4681 = vadd.f32 %v4399, %v4671
        %v4682 = vld [vmem:[%s4229] sm:$0xe]
        %v4683 = vld [vmem:[%s4229 + $0x8] sm:$0xe]
        %v4684 = vld [vmem:[%s4229 + $0x10] sm:$0xe]
        %v4685 = vld [vmem:[%s4229 + $0x18] sm:$0xe]
        %v4686 = vld [vmem:[%s4229 + $0x20] sm:$0xe]
        %v4687 = vld [vmem:[%s4229 + $0x28] sm:$0xe]
        %v4688 = vld [vmem:[%s4229 + $0x30] sm:$0xe]
        %v4689 = vld [vmem:[%s4229 + $0x38] sm:$0xe]
        %v4706 = vrot.slane %v4682, 5
        %v4707 = vrot.slane %v4706, 4
        %v4708 = vrot.slane %v4401, 5
        %v4709 = vsel %vm1570, %v4707, %v4708
        %v4710 = vrot.slane %v4683, 5
        %v4711 = vrot.slane %v4710, 4
        %v4712 = vrot.slane %v4403, 5
        %v4713 = vsel %vm1570, %v4711, %v4712
        %v4714 = vrot.slane %v4684, 5
        %v4715 = vrot.slane %v4714, 4
        %v4716 = vrot.slane %v4405, 5
        %v4717 = vsel %vm1570, %v4715, %v4716
        %v4718 = vrot.slane %v4685, 5
        %v4719 = vrot.slane %v4718, 4
        %v4720 = vrot.slane %v4407, 5
        %v4721 = vsel %vm1570, %v4719, %v4720
        %v4722 = vrot.slane %v4686, 5
        %v4723 = vrot.slane %v4722, 4
        %v4724 = vrot.slane %v4409, 5
        %v4725 = vsel %vm1570, %v4723, %v4724
        %v4726 = vrot.slane %v4687, 5
        %v4727 = vrot.slane %v4726, 4
        %v4728 = vrot.slane %v4411, 5
        %v4729 = vsel %vm1570, %v4727, %v4728
        %v4730 = vrot.slane %v4688, 5
        %v4731 = vrot.slane %v4730, 4
        %v4732 = vrot.slane %v4413, 5
        %v4733 = vsel %vm1570, %v4731, %v4732
        %v4734 = vrot.slane %v4689, 5
        %v4735 = vrot.slane %v4734, 4
        %v4736 = vrot.slane %v4415, 5
        %v4737 = vsel %vm1570, %v4735, %v4736
        %s4738 = scalar_lea.vmem %s6, 320
        %v4739 = vld [vmem:[%s4738] sm:$0xf]
        %v4740 = vld [vmem:[%s4738 + $0x4] sm:$0xf]
        %v4741 = vld [vmem:[%s4738 + $0x8] sm:$0xf]
        %v4742 = vld [vmem:[%s4738 + $0xc] sm:$0xf]
        %v4743 = vld [vmem:[%s4738 + $0x10] sm:$0xf]
        %v4744 = vld [vmem:[%s4738 + $0x14] sm:$0xf]
        %v4745 = vld [vmem:[%s4738 + $0x18] sm:$0xf]
        %v4746 = vld [vmem:[%s4738 + $0x1c] sm:$0xf]
        %v4747 = vld [vmem:[%s4738 + $0x20] sm:$0xf]
        %v4748 = vld [vmem:[%s4738 + $0x24] sm:$0xf]
        %v4749 = vld [vmem:[%s4738 + $0x28] sm:$0xf]
        %v4750 = vld [vmem:[%s4738 + $0x2c] sm:$0xf]
        %v4751 = vld [vmem:[%s4738 + $0x30] sm:$0xf]
        %v4752 = vld [vmem:[%s4738 + $0x34] sm:$0xf]
        %v4753 = vld [vmem:[%s4738 + $0x38] sm:$0xf]
        %v4754 = vld [vmem:[%s4738 + $0x3c] sm:$0xf]
        %v4755 = vunpack.c.l.b16 %v4709
        %v4756 = vunpack.c.l.b16 %v4713
        %v4757 = vunpack.c.l.b16 %v4717
        %v4758 = vunpack.c.l.b16 %v4721
        %v4759 = vunpack.c.l.b16 %v4725
        %v4760 = vunpack.c.l.b16 %v4729
        %v4761 = vunpack.c.l.b16 %v4733
        %v4762 = vunpack.c.l.b16 %v4737
        %v4763 = vpack.c.b16 %v4756, %v4755
        %v4764 = vpack.c.b16 %v4758, %v4757
        %v4765 = vpack.c.b16 %v4760, %v4759
        %v4766 = vpack.c.b16 %v4762, %v4761
        %v4787 = vunpack.c.l.b16 %v4739
        %v4788 = vunpack.c.l.b16 %v4740
        %v4789 = vunpack.c.l.b16 %v4741
        %v4790 = vunpack.c.l.b16 %v4742
        %v4791 = vunpack.c.l.b16 %v4743
        %v4792 = vunpack.c.l.b16 %v4744
        %v4793 = vunpack.c.l.b16 %v4745
        %v4794 = vunpack.c.l.b16 %v4746
        %v4795 = vunpack.c.l.b16 %v4747
        %v4796 = vunpack.c.l.b16 %v4748
        %v4797 = vunpack.c.l.b16 %v4749
        %v4798 = vunpack.c.l.b16 %v4750
        %v4799 = vunpack.c.l.b16 %v4751
        %v4800 = vunpack.c.l.b16 %v4752
        %v4801 = vunpack.c.l.b16 %v4753
        %v4802 = vunpack.c.l.b16 %v4754
        %v4803 = vpack.c.b16 %v4788, %v4787
        %v4804 = vpack.c.b16 %v4790, %v4789
        %v4805 = vpack.c.b16 %v4792, %v4791
        %v4806 = vpack.c.b16 %v4794, %v4793
        %v4807 = vpack.c.b16 %v4796, %v4795
        %v4808 = vpack.c.b16 %v4798, %v4797
        %v4809 = vpack.c.b16 %v4800, %v4799
        %v4810 = vpack.c.b16 %v4802, %v4801
        %4819 = vmatprep.subr.bf16.mxu0 0
        %4820 = vmatpush1.bf16.msra.mxu0 %v4803
        %4821 = vmatprep.subr.bf16.mxu0 0
        %4822 = vmatpush1.bf16.msra.mxu0 %v4804
        %4823 = vmatprep.subr.bf16.mxu0 0
        %4824 = vmatpush1.bf16.msra.mxu0 %v4805
        %4825 = vmatprep.subr.bf16.mxu0 0
        %4826 = vmatpush1.bf16.msra.mxu0 %v4806
        %4827 = vmatprep.subr.bf16.mxu0 0
        %4828 = vmatpush1.bf16.msra.mxu0 %v4807
        %4829 = vmatprep.subr.bf16.mxu0 0
        %4830 = vmatpush1.bf16.msra.mxu0 %v4808
        %4831 = vmatprep.subr.bf16.mxu0 0
        %4832 = vmatpush1.bf16.msra.mxu0 %v4809
        %4833 = vmatprep.subr.bf16.mxu0 0
        %4834 = vmatpush1.bf16.msra.mxu0 %v4810
        %4835 = vmatprep.subr.bf16.mxu0 0
        %4836 = vmatpush1.bf16.msra.mxu0 0
        %4837 = vmatprep.subr.bf16.mxu0 0
        %4838 = vmatpush1.bf16.msra.mxu0 0
        %4839 = vmatprep.subr.bf16.mxu0 0
        %4840 = vmatpush1.bf16.msra.mxu0 0
        %4841 = vmatprep.subr.bf16.mxu0 0
        %4842 = vmatpush1.bf16.msra.mxu0 0
        %4843 = vmatprep.subr.bf16.mxu0 0
        %4844 = vmatpush1.bf16.msra.mxu0 0
        %4845 = vmatprep.subr.bf16.mxu0 0
        %4846 = vmatpush1.bf16.msra.mxu0 0
        %4847 = vmatprep.subr.bf16.mxu0 0
        %4848 = vmatpush1.bf16.msra.mxu0 0
        %4849 = vmatprep.subr.bf16.mxu0 0
        %4850 = vmatpush1.bf16.msra.mxu0 0
        %4851 = vmatprep.mubr.bf16.mxu0 0
        %4852 = vmatmul.mubr.bf16.gmra.mrb[0].mxu0 %v4763
        %v4853 = vpop.f32.mrb[0].mxu0
        %v4854 = vadd.f32 0.0, %v4853
        %v4855 = vpop.f32.mrb[0].mxu0
        %v4856 = vpop.f32.mrb[0].mxu0
        %v4857 = vadd.f32 0.0, %v4856
        %v4858 = vpop.f32.mrb[0].mxu0
        %4859 = vmatprep.mubr.bf16.mxu0 0
        %4860 = vmatmul.mubr.bf16.gmra.mrb[0].mxu0 %v4764
        %v4861 = vpop.f32.mrb[0].mxu0
        %v4862 = vadd.f32 0.0, %v4861
        %v4863 = vpop.f32.mrb[0].mxu0
        %v4864 = vpop.f32.mrb[0].mxu0
        %v4865 = vadd.f32 0.0, %v4864
        %v4866 = vpop.f32.mrb[0].mxu0
        %4867 = vmatprep.mubr.bf16.mxu0 0
        %4868 = vmatmul.mubr.bf16.gmra.mrb[0].mxu0 %v4765
        %v4869 = vpop.f32.mrb[0].mxu0
        %v4870 = vadd.f32 0.0, %v4869
        %v4871 = vpop.f32.mrb[0].mxu0
        %v4872 = vpop.f32.mrb[0].mxu0
        %v4873 = vadd.f32 0.0, %v4872
        %v4874 = vpop.f32.mrb[0].mxu0
        %4875 = vmatprep.mubr.bf16.mxu0 0
        %4876 = vmatmul.mubr.bf16.gmra.mrb[0].mxu0 %v4766
        %v4877 = vpop.f32.mrb[0].mxu0
        %v4878 = vadd.f32 0.0, %v4877
        %v4879 = vpop.f32.mrb[0].mxu0
        %v4880 = vpop.f32.mrb[0].mxu0
        %v4881 = vadd.f32 0.0, %v4880
        %v4882 = vpop.f32.mrb[0].mxu0
        %4883 = vdwg.mxu0
        %v4884 = vadd.f32 %v4674, %v4854
        %v4885 = vadd.f32 %v4675, %v4857
        %v4886 = vadd.f32 %v4676, %v4862
        %v4887 = vadd.f32 %v4677, %v4865
        %v4888 = vadd.f32 %v4678, %v4870
        %v4889 = vadd.f32 %v4679, %v4873
        %v4890 = vadd.f32 %v4680, %v4878
        %v4891 = vadd.f32 %v4681, %v4881
        %s4892 = scalar_lea.vmem [#allocation3], 16
        %v4893 = vld [vmem:[%s4892] sm:$0xf]
        %v4894 = vld [vmem:[%s4892 + $0x8] sm:$0xf]
        %v4895 = vld [vmem:[%s4892 + $0x10] sm:$0xf]
        %v4896 = vld [vmem:[%s4892 + $0x18] sm:$0xf]
        %v4897 = vld [vmem:[%s4892 + $0x20] sm:$0xf]
        %v4898 = vld [vmem:[%s4892 + $0x28] sm:$0xf]
        %v4899 = vld [vmem:[%s4892 + $0x30] sm:$0xf]
        %v4900 = vld [vmem:[%s4892 + $0x38] sm:$0xf]
        %s4901 = scalar_lea.vmem %s6, 384
        %v4902 = vld [vmem:[%s4901] sm:$0xf]
        %v4903 = vld [vmem:[%s4901 + $0x4] sm:$0xf]
        %v4904 = vld [vmem:[%s4901 + $0x8] sm:$0xf]
        %v4905 = vld [vmem:[%s4901 + $0xc] sm:$0xf]
        %v4906 = vld [vmem:[%s4901 + $0x10] sm:$0xf]
        %v4907 = vld [vmem:[%s4901 + $0x14] sm:$0xf]
        %v4908 = vld [vmem:[%s4901 + $0x18] sm:$0xf]
        %v4909 = vld [vmem:[%s4901 + $0x1c] sm:$0xf]
        %v4910 = vld [vmem:[%s4901 + $0x20] sm:$0xf]
        %v4911 = vld [vmem:[%s4901 + $0x24] sm:$0xf]
        %v4912 = vld [vmem:[%s4901 + $0x28] sm:$0xf]
        %v4913 = vld [vmem:[%s4901 + $0x2c] sm:$0xf]
        %v4914 = vld [vmem:[%s4901 + $0x30] sm:$0xf]
        %v4915 = vld [vmem:[%s4901 + $0x34] sm:$0xf]
        %v4916 = vld [vmem:[%s4901 + $0x38] sm:$0xf]
        %v4917 = vld [vmem:[%s4901 + $0x3c] sm:$0xf]
        %v4926 = vunpack.c.l.b16 %v4893
        %v4927 = vunpack.c.l.b16 %v4894
        %v4928 = vunpack.c.l.b16 %v4895
        %v4929 = vunpack.c.l.b16 %v4896
        %v4930 = vunpack.c.l.b16 %v4897
        %v4931 = vunpack.c.l.b16 %v4898
        %v4932 = vunpack.c.l.b16 %v4899
        %v4933 = vunpack.c.l.b16 %v4900
        %v4934 = vpack.c.b16 %v4927, %v4926
        %v4935 = vpack.c.b16 %v4929, %v4928
        %v4936 = vpack.c.b16 %v4931, %v4930
        %v4937 = vpack.c.b16 %v4933, %v4932
        %v4958 = vunpack.c.l.b16 %v4902
        %v4959 = vunpack.c.l.b16 %v4903
        %v4960 = vunpack.c.l.b16 %v4904
        %v4961 = vunpack.c.l.b16 %v4905
        %v4962 = vunpack.c.l.b16 %v4906
        %v4963 = vunpack.c.l.b16 %v4907
        %v4964 = vunpack.c.l.b16 %v4908
        %v4965 = vunpack.c.l.b16 %v4909
        %v4966 = vunpack.c.l.b16 %v4910
        %v4967 = vunpack.c.l.b16 %v4911
        %v4968 = vunpack.c.l.b16 %v4912
        %v4969 = vunpack.c.l.b16 %v4913
        %v4970 = vunpack.c.l.b16 %v4914
        %v4971 = vunpack.c.l.b16 %v4915
        %v4972 = vunpack.c.l.b16 %v4916
        %v4973 = vunpack.c.l.b16 %v4917
        %v4974 = vpack.c.b16 %v4959, %v4958
        %v4975 = vpack.c.b16 %v4961, %v4960
        %v4976 = vpack.c.b16 %v4963, %v4962
        %v4977 = vpack.c.b16 %v4965, %v4964
        %v4978 = vpack.c.b16 %v4967, %v4966
        %v4979 = vpack.c.b16 %v4969, %v4968
        %v4980 = vpack.c.b16 %v4971, %v4970
        %v4981 = vpack.c.b16 %v4973, %v4972
        %4990 = vmatprep.subr.bf16.mxu0 0
        %4991 = vmatpush1.bf16.msra.mxu0 %v4974
        %4992 = vmatprep.subr.bf16.mxu0 0
        %4993 = vmatpush1.bf16.msra.mxu0 %v4975
        %4994 = vmatprep.subr.bf16.mxu0 0
        %4995 = vmatpush1.bf16.msra.mxu0 %v4976
        %4996 = vmatprep.subr.bf16.mxu0 0
        %4997 = vmatpush1.bf16.msra.mxu0 %v4977
        %4998 = vmatprep.subr.bf16.mxu0 0
        %4999 = vmatpush1.bf16.msra.mxu0 %v4978
        %5000 = vmatprep.subr.bf16.mxu0 0
        %5001 = vmatpush1.bf16.msra.mxu0 %v4979
        %5002 = vmatprep.subr.bf16.mxu0 0
        %5003 = vmatpush1.bf16.msra.mxu0 %v4980
        %5004 = vmatprep.subr.bf16.mxu0 0
        %5005 = vmatpush1.bf16.msra.mxu0 %v4981
        %5006 = vmatprep.subr.bf16.mxu0 0
        %5007 = vmatpush1.bf16.msra.mxu0 0
        %5008 = vmatprep.subr.bf16.mxu0 0
        %5009 = vmatpush1.bf16.msra.mxu0 0
        %5010 = vmatprep.subr.bf16.mxu0 0
        %5011 = vmatpush1.bf16.msra.mxu0 0
        %5012 = vmatprep.subr.bf16.mxu0 0
        %5013 = vmatpush1.bf16.msra.mxu0 0
        %5014 = vmatprep.subr.bf16.mxu0 0
        %5015 = vmatpush1.bf16.msra.mxu0 0
        %5016 = vmatprep.subr.bf16.mxu0 0
        %5017 = vmatpush1.bf16.msra.mxu0 0
        %5018 = vmatprep.subr.bf16.mxu0 0
        %5019 = vmatpush1.bf16.msra.mxu0 0
        %5020 = vmatprep.subr.bf16.mxu0 0
        %5021 = vmatpush1.bf16.msra.mxu0 0
        %5022 = vmatprep.mubr.bf16.mxu0 0
        %5023 = vmatmul.mubr.bf16.gmra.mrb[0].mxu0 %v4934
        %v5024 = vpop.f32.mrb[0].mxu0
        %v5025 = vadd.f32 0.0, %v5024
        %v5026 = vpop.f32.mrb[0].mxu0
        %v5027 = vpop.f32.mrb[0].mxu0
        %v5028 = vadd.f32 0.0, %v5027
        %v5029 = vpop.f32.mrb[0].mxu0
        %5030 = vmatprep.mubr.bf16.mxu0 0
        %5031 = vmatmul.mubr.bf16.gmra.mrb[0].mxu0 %v4935
        %v5032 = vpop.f32.mrb[0].mxu0
        %v5033 = vadd.f32 0.0, %v5032
        %v5034 = vpop.f32.mrb[0].mxu0
        %v5035 = vpop.f32.mrb[0].mxu0
        %v5036 = vadd.f32 0.0, %v5035
        %v5037 = vpop.f32.mrb[0].mxu0
        %5038 = vmatprep.mubr.bf16.mxu0 0
        %5039 = vmatmul.mubr.bf16.gmra.mrb[0].mxu0 %v4936
        %v5040 = vpop.f32.mrb[0].mxu0
        %v5041 = vadd.f32 0.0, %v5040
        %v5042 = vpop.f32.mrb[0].mxu0
        %v5043 = vpop.f32.mrb[0].mxu0
        %v5044 = vadd.f32 0.0, %v5043
        %v5045 = vpop.f32.mrb[0].mxu0
        %5046 = vmatprep.mubr.bf16.mxu0 0
        %5047 = vmatmul.mubr.bf16.gmra.mrb[0].mxu0 %v4937
        %v5048 = vpop.f32.mrb[0].mxu0
        %v5049 = vadd.f32 0.0, %v5048
        %v5050 = vpop.f32.mrb[0].mxu0
        %v5051 = vpop.f32.mrb[0].mxu0
        %v5052 = vadd.f32 0.0, %v5051
        %v5053 = vpop.f32.mrb[0].mxu0
        %5054 = vdwg.mxu0
        %v5055 = vadd.f32 %v4884, %v5025
        %v5056 = vadd.f32 %v4885, %v5028
        %v5057 = vadd.f32 %v4886, %v5033
        %v5058 = vadd.f32 %v4887, %v5036
        %v5059 = vadd.f32 %v4888, %v5041
        %v5060 = vadd.f32 %v4889, %v5044
        %v5061 = vadd.f32 %v4890, %v5049
        %v5062 = vadd.f32 %v4891, %v5052
        %v5063 = vld [vmem:[%s4892] sm:$0xf]
        %v5064 = vld [vmem:[%s4892 + $0x4] sm:$0x1]
        %v5065 = vld [vmem:[%s4892 + $0x8] sm:$0xf]
        %v5066 = vld [vmem:[%s4892 + $0xc] sm:$0x1]
        %v5067 = vld [vmem:[%s4892 + $0x10] sm:$0xf]
        %v5068 = vld [vmem:[%s4892 + $0x14] sm:$0x1]
        %v5069 = vld [vmem:[%s4892 + $0x18] sm:$0xf]
        %v5070 = vld [vmem:[%s4892 + $0x1c] sm:$0x1]
        %v5071 = vld [vmem:[%s4892 + $0x20] sm:$0xf]
        %v5072 = vld [vmem:[%s4892 + $0x24] sm:$0x1]
        %v5073 = vld [vmem:[%s4892 + $0x28] sm:$0xf]
        %v5074 = vld [vmem:[%s4892 + $0x2c] sm:$0x1]
        %v5075 = vld [vmem:[%s4892 + $0x30] sm:$0xf]
        %v5076 = vld [vmem:[%s4892 + $0x34] sm:$0x1]
        %v5077 = vld [vmem:[%s4892 + $0x38] sm:$0xf]
        %v5078 = vld [vmem:[%s4892 + $0x3c] sm:$0x1]
        %v5080 = vshrl.u32 %v5063, 16
        %v5082 = vrot.slane %v5080, 4
        %v5083 = vshll.u32 %v5063, 16
        %v5085 = vrot.slane %v5083, 5
        %v5086 = vor.u32 %v5082, %v5085
        %v5087 = vrot.slane %v5086, 4
        %v5089 = vshll.u32 %v5064, 16
        %v5091 = vrot.slane %v5089, 5
        %v5092 = vsel %vm1088, %v5087, %v5091
        %v5094 = vshrl.u32 %v5065, 16
        %v5096 = vrot.slane %v5094, 4
        %v5097 = vshll.u32 %v5065, 16
        %v5099 = vrot.slane %v5097, 5
        %v5100 = vor.u32 %v5096, %v5099
        %v5101 = vrot.slane %v5100, 4
        %v5103 = vshll.u32 %v5066, 16
        %v5105 = vrot.slane %v5103, 5
        %v5106 = vsel %vm1088, %v5101, %v5105
        %v5108 = vshrl.u32 %v5067, 16
        %v5110 = vrot.slane %v5108, 4
        %v5111 = vshll.u32 %v5067, 16
        %v5113 = vrot.slane %v5111, 5
        %v5114 = vor.u32 %v5110, %v5113
        %v5115 = vrot.slane %v5114, 4
        %v5117 = vshll.u32 %v5068, 16
        %v5119 = vrot.slane %v5117, 5
        %v5120 = vsel %vm1088, %v5115, %v5119
        %v5122 = vshrl.u32 %v5069, 16
        %v5124 = vrot.slane %v5122, 4
        %v5125 = vshll.u32 %v5069, 16
        %v5127 = vrot.slane %v5125, 5
        %v5128 = vor.u32 %v5124, %v5127
        %v5129 = vrot.slane %v5128, 4
        %v5131 = vshll.u32 %v5070, 16
        %v5133 = vrot.slane %v5131, 5
        %v5134 = vsel %vm1088, %v5129, %v5133
        %v5136 = vshrl.u32 %v5071, 16
        %v5138 = vrot.slane %v5136, 4
        %v5139 = vshll.u32 %v5071, 16
        %v5141 = vrot.slane %v5139, 5
        %v5142 = vor.u32 %v5138, %v5141
        %v5143 = vrot.slane %v5142, 4
        %v5145 = vshll.u32 %v5072, 16
        %v5147 = vrot.slane %v5145, 5
        %v5148 = vsel %vm1088, %v5143, %v5147
        %v5150 = vshrl.u32 %v5073, 16
        %v5152 = vrot.slane %v5150, 4
        %v5153 = vshll.u32 %v5073, 16
        %v5155 = vrot.slane %v5153, 5
        %v5156 = vor.u32 %v5152, %v5155
        %v5157 = vrot.slane %v5156, 4
        %v5159 = vshll.u32 %v5074, 16
        %v5161 = vrot.slane %v5159, 5
        %v5162 = vsel %vm1088, %v5157, %v5161
        %v5164 = vshrl.u32 %v5075, 16
        %v5166 = vrot.slane %v5164, 4
        %v5167 = vshll.u32 %v5075, 16
        %v5169 = vrot.slane %v5167, 5
        %v5170 = vor.u32 %v5166, %v5169
        %v5171 = vrot.slane %v5170, 4
        %v5173 = vshll.u32 %v5076, 16
        %v5175 = vrot.slane %v5173, 5
        %v5176 = vsel %vm1088, %v5171, %v5175
        %v5178 = vshrl.u32 %v5077, 16
        %v5180 = vrot.slane %v5178, 4
        %v5181 = vshll.u32 %v5077, 16
        %v5183 = vrot.slane %v5181, 5
        %v5184 = vor.u32 %v5180, %v5183
        %v5185 = vrot.slane %v5184, 4
        %v5187 = vshll.u32 %v5078, 16
        %v5189 = vrot.slane %v5187, 5
        %v5190 = vsel %vm1088, %v5185, %v5189
        %s5191 = scalar_lea.vmem %s6, 448
        %v5192 = vld [vmem:[%s5191] sm:$0xf]
        %v5193 = vld [vmem:[%s5191 + $0x4] sm:$0xf]
        %v5194 = vld [vmem:[%s5191 + $0x8] sm:$0xf]
        %v5195 = vld [vmem:[%s5191 + $0xc] sm:$0xf]
        %v5196 = vld [vmem:[%s5191 + $0x10] sm:$0xf]
        %v5197 = vld [vmem:[%s5191 + $0x14] sm:$0xf]
        %v5198 = vld [vmem:[%s5191 + $0x18] sm:$0xf]
        %v5199 = vld [vmem:[%s5191 + $0x1c] sm:$0xf]
        %v5200 = vld [vmem:[%s5191 + $0x20] sm:$0xf]
        %v5201 = vld [vmem:[%s5191 + $0x24] sm:$0xf]
        %v5202 = vld [vmem:[%s5191 + $0x28] sm:$0xf]
        %v5203 = vld [vmem:[%s5191 + $0x2c] sm:$0xf]
        %v5204 = vld [vmem:[%s5191 + $0x30] sm:$0xf]
        %v5205 = vld [vmem:[%s5191 + $0x34] sm:$0xf]
        %v5206 = vld [vmem:[%s5191 + $0x38] sm:$0xf]
        %v5207 = vld [vmem:[%s5191 + $0x3c] sm:$0xf]
        %v5208 = vunpack.c.l.b16 %v5092
        %v5209 = vunpack.c.l.b16 %v5106
        %v5210 = vunpack.c.l.b16 %v5120
        %v5211 = vunpack.c.l.b16 %v5134
        %v5212 = vunpack.c.l.b16 %v5148
        %v5213 = vunpack.c.l.b16 %v5162
        %v5214 = vunpack.c.l.b16 %v5176
        %v5215 = vunpack.c.l.b16 %v5190
        %v5216 = vpack.c.b16 %v5209, %v5208
        %v5217 = vpack.c.b16 %v5211, %v5210
        %v5218 = vpack.c.b16 %v5213, %v5212
        %v5219 = vpack.c.b16 %v5215, %v5214
        %v5240 = vunpack.c.l.b16 %v5192
        %v5241 = vunpack.c.l.b16 %v5193
        %v5242 = vunpack.c.l.b16 %v5194
        %v5243 = vunpack.c.l.b16 %v5195
        %v5244 = vunpack.c.l.b16 %v5196
        %v5245 = vunpack.c.l.b16 %v5197
        %v5246 = vunpack.c.l.b16 %v5198
        %v5247 = vunpack.c.l.b16 %v5199
        %v5248 = vunpack.c.l.b16 %v5200
        %v5249 = vunpack.c.l.b16 %v5201
        %v5250 = vunpack.c.l.b16 %v5202
        %v5251 = vunpack.c.l.b16 %v5203
        %v5252 = vunpack.c.l.b16 %v5204
        %v5253 = vunpack.c.l.b16 %v5205
        %v5254 = vunpack.c.l.b16 %v5206
        %v5255 = vunpack.c.l.b16 %v5207
        %v5256 = vpack.c.b16 %v5241, %v5240
        %v5257 = vpack.c.b16 %v5243, %v5242
        %v5258 = vpack.c.b16 %v5245, %v5244
        %v5259 = vpack.c.b16 %v5247, %v5246
        %v5260 = vpack.c.b16 %v5249, %v5248
        %v5261 = vpack.c.b16 %v5251, %v5250
        %v5262 = vpack.c.b16 %v5253, %v5252
        %v5263 = vpack.c.b16 %v5255, %v5254
        %5272 = vmatprep.subr.bf16.mxu0 0
        %5273 = vmatpush1.bf16.msra.mxu0 %v5256
        %5274 = vmatprep.subr.bf16.mxu0 0
        %5275 = vmatpush1.bf16.msra.mxu0 %v5257
        %5276 = vmatprep.subr.bf16.mxu0 0
        %5277 = vmatpush1.bf16.msra.mxu0 %v5258
        %5278 = vmatprep.subr.bf16.mxu0 0
        %5279 = vmatpush1.bf16.msra.mxu0 %v5259
        %5280 = vmatprep.subr.bf16.mxu0 0
        %5281 = vmatpush1.bf16.msra.mxu0 %v5260
        %5282 = vmatprep.subr.bf16.mxu0 0
        %5283 = vmatpush1.bf16.msra.mxu0 %v5261
        %5284 = vmatprep.subr.bf16.mxu0 0
        %5285 = vmatpush1.bf16.msra.mxu0 %v5262
        %5286 = vmatprep.subr.bf16.mxu0 0
        %5287 = vmatpush1.bf16.msra.mxu0 %v5263
        %5288 = vmatprep.subr.bf16.mxu0 0
        %5289 = vmatpush1.bf16.msra.mxu0 0
        %5290 = vmatprep.subr.bf16.mxu0 0
        %5291 = vmatpush1.bf16.msra.mxu0 0
        %5292 = vmatprep.subr.bf16.mxu0 0
        %5293 = vmatpush1.bf16.msra.mxu0 0
        %5294 = vmatprep.subr.bf16.mxu0 0
        %5295 = vmatpush1.bf16.msra.mxu0 0
        %5296 = vmatprep.subr.bf16.mxu0 0
        %5297 = vmatpush1.bf16.msra.mxu0 0
        %5298 = vmatprep.subr.bf16.mxu0 0
        %5299 = vmatpush1.bf16.msra.mxu0 0
        %5300 = vmatprep.subr.bf16.mxu0 0
        %5301 = vmatpush1.bf16.msra.mxu0 0
        %5302 = vmatprep.subr.bf16.mxu0 0
        %5303 = vmatpush1.bf16.msra.mxu0 0
        %5304 = vmatprep.mubr.bf16.mxu0 0
        %5305 = vmatmul.mubr.bf16.gmra.mrb[0].mxu0 %v5216
        %v5306 = vpop.f32.mrb[0].mxu0
        %v5307 = vadd.f32 0.0, %v5306
        %v5308 = vpop.f32.mrb[0].mxu0
        %v5309 = vpop.f32.mrb[0].mxu0
        %v5310 = vadd.f32 0.0, %v5309
        %v5311 = vpop.f32.mrb[0].mxu0
        %5312 = vmatprep.mubr.bf16.mxu0 0
        %5313 = vmatmul.mubr.bf16.gmra.mrb[0].mxu0 %v5217
        %v5314 = vpop.f32.mrb[0].mxu0
        %v5315 = vadd.f32 0.0, %v5314
        %v5316 = vpop.f32.mrb[0].mxu0
        %v5317 = vpop.f32.mrb[0].mxu0
        %v5318 = vadd.f32 0.0, %v5317
        %v5319 = vpop.f32.mrb[0].mxu0
        %5320 = vmatprep.mubr.bf16.mxu0 0
        %5321 = vmatmul.mubr.bf16.gmra.mrb[0].mxu0 %v5218
        %v5322 = vpop.f32.mrb[0].mxu0
        %v5323 = vadd.f32 0.0, %v5322
        %v5324 = vpop.f32.mrb[0].mxu0
        %v5325 = vpop.f32.mrb[0].mxu0
        %v5326 = vadd.f32 0.0, %v5325
        %v5327 = vpop.f32.mrb[0].mxu0
        %5328 = vmatprep.mubr.bf16.mxu0 0
        %5329 = vmatmul.mubr.bf16.gmra.mrb[0].mxu0 %v5219
        %v5330 = vpop.f32.mrb[0].mxu0
        %v5331 = vadd.f32 0.0, %v5330
        %v5332 = vpop.f32.mrb[0].mxu0
        %v5333 = vpop.f32.mrb[0].mxu0
        %v5334 = vadd.f32 0.0, %v5333
        %v5335 = vpop.f32.mrb[0].mxu0
        %5336 = vdwg.mxu0
        %v5337 = vadd.f32 %v5055, %v5307
        %v5338 = vadd.f32 %v5056, %v5310
        %v5339 = vadd.f32 %v5057, %v5315
        %v5340 = vadd.f32 %v5058, %v5318
        %v5341 = vadd.f32 %v5059, %v5323
        %v5342 = vadd.f32 %v5060, %v5326
        %v5343 = vadd.f32 %v5061, %v5331
        %v5344 = vadd.f32 %v5062, %v5334
        %v5345 = vld [vmem:[%s4892] sm:$0xe]
        %v5346 = vld [vmem:[%s4892 + $0x8] sm:$0xe]
        %v5347 = vld [vmem:[%s4892 + $0x10] sm:$0xe]
        %v5348 = vld [vmem:[%s4892 + $0x18] sm:$0xe]
        %v5349 = vld [vmem:[%s4892 + $0x20] sm:$0xe]
        %v5350 = vld [vmem:[%s4892 + $0x28] sm:$0xe]
        %v5351 = vld [vmem:[%s4892 + $0x30] sm:$0xe]
        %v5352 = vld [vmem:[%s4892 + $0x38] sm:$0xe]
        %v5369 = vrot.slane %v5345, 5
        %v5370 = vrot.slane %v5369, 4
        %v5371 = vrot.slane %v5064, 5
        %v5372 = vsel %vm1570, %v5370, %v5371
        %v5373 = vrot.slane %v5346, 5
        %v5374 = vrot.slane %v5373, 4
        %v5375 = vrot.slane %v5066, 5
        %v5376 = vsel %vm1570, %v5374, %v5375
        %v5377 = vrot.slane %v5347, 5
        %v5378 = vrot.slane %v5377, 4
        %v5379 = vrot.slane %v5068, 5
        %v5380 = vsel %vm1570, %v5378, %v5379
        %v5381 = vrot.slane %v5348, 5
        %v5382 = vrot.slane %v5381, 4
        %v5383 = vrot.slane %v5070, 5
        %v5384 = vsel %vm1570, %v5382, %v5383
        %v5385 = vrot.slane %v5349, 5
        %v5386 = vrot.slane %v5385, 4
        %v5387 = vrot.slane %v5072, 5
        %v5388 = vsel %vm1570, %v5386, %v5387
        %v5389 = vrot.slane %v5350, 5
        %v5390 = vrot.slane %v5389, 4
        %v5391 = vrot.slane %v5074, 5
        %v5392 = vsel %vm1570, %v5390, %v5391
        %v5393 = vrot.slane %v5351, 5
        %v5394 = vrot.slane %v5393, 4
        %v5395 = vrot.slane %v5076, 5
        %v5396 = vsel %vm1570, %v5394, %v5395
        %v5397 = vrot.slane %v5352, 5
        %v5398 = vrot.slane %v5397, 4
        %v5399 = vrot.slane %v5078, 5
        %v5400 = vsel %vm1570, %v5398, %v5399
        %s5401 = scalar_lea.vmem %s6, 512
        %v5402 = vld [vmem:[%s5401] sm:$0xf]
        %v5403 = vld [vmem:[%s5401 + $0x4] sm:$0xf]
        %v5404 = vld [vmem:[%s5401 + $0x8] sm:$0xf]
        %v5405 = vld [vmem:[%s5401 + $0xc] sm:$0xf]
        %v5406 = vld [vmem:[%s5401 + $0x10] sm:$0xf]
        %v5407 = vld [vmem:[%s5401 + $0x14] sm:$0xf]
        %v5408 = vld [vmem:[%s5401 + $0x18] sm:$0xf]
        %v5409 = vld [vmem:[%s5401 + $0x1c] sm:$0xf]
        %v5410 = vld [vmem:[%s5401 + $0x20] sm:$0xf]
        %v5411 = vld [vmem:[%s5401 + $0x24] sm:$0xf]
        %v5412 = vld [vmem:[%s5401 + $0x28] sm:$0xf]
        %v5413 = vld [vmem:[%s5401 + $0x2c] sm:$0xf]
        %v5414 = vld [vmem:[%s5401 + $0x30] sm:$0xf]
        %v5415 = vld [vmem:[%s5401 + $0x34] sm:$0xf]
        %v5416 = vld [vmem:[%s5401 + $0x38] sm:$0xf]
        %v5417 = vld [vmem:[%s5401 + $0x3c] sm:$0xf]
        %v5418 = vunpack.c.l.b16 %v5372
        %v5419 = vunpack.c.l.b16 %v5376
        %v5420 = vunpack.c.l.b16 %v5380
        %v5421 = vunpack.c.l.b16 %v5384
        %v5422 = vunpack.c.l.b16 %v5388
        %v5423 = vunpack.c.l.b16 %v5392
        %v5424 = vunpack.c.l.b16 %v5396
        %v5425 = vunpack.c.l.b16 %v5400
        %v5426 = vpack.c.b16 %v5419, %v5418
        %v5427 = vpack.c.b16 %v5421, %v5420
        %v5428 = vpack.c.b16 %v5423, %v5422
        %v5429 = vpack.c.b16 %v5425, %v5424
        %v5450 = vunpack.c.l.b16 %v5402
        %v5451 = vunpack.c.l.b16 %v5403
        %v5452 = vunpack.c.l.b16 %v5404
        %v5453 = vunpack.c.l.b16 %v5405
        %v5454 = vunpack.c.l.b16 %v5406
        %v5455 = vunpack.c.l.b16 %v5407
        %v5456 = vunpack.c.l.b16 %v5408
        %v5457 = vunpack.c.l.b16 %v5409
        %v5458 = vunpack.c.l.b16 %v5410
        %v5459 = vunpack.c.l.b16 %v5411
        %v5460 = vunpack.c.l.b16 %v5412
        %v5461 = vunpack.c.l.b16 %v5413
        %v5462 = vunpack.c.l.b16 %v5414
        %v5463 = vunpack.c.l.b16 %v5415
        %v5464 = vunpack.c.l.b16 %v5416
        %v5465 = vunpack.c.l.b16 %v5417
        %v5466 = vpack.c.b16 %v5451, %v5450
        %v5467 = vpack.c.b16 %v5453, %v5452
        %v5468 = vpack.c.b16 %v5455, %v5454
        %v5469 = vpack.c.b16 %v5457, %v5456
        %v5470 = vpack.c.b16 %v5459, %v5458
        %v5471 = vpack.c.b16 %v5461, %v5460
        %v5472 = vpack.c.b16 %v5463, %v5462
        %v5473 = vpack.c.b16 %v5465, %v5464
        %5482 = vmatprep.subr.bf16.mxu0 0
        %5483 = vmatpush1.bf16.msra.mxu0 %v5466
        %5484 = vmatprep.subr.bf16.mxu0 0
        %5485 = vmatpush1.bf16.msra.mxu0 %v5467
        %5486 = vmatprep.subr.bf16.mxu0 0
        %5487 = vmatpush1.bf16.msra.mxu0 %v5468
        %5488 = vmatprep.subr.bf16.mxu0 0
        %5489 = vmatpush1.bf16.msra.mxu0 %v5469
        %5490 = vmatprep.subr.bf16.mxu0 0
        %5491 = vmatpush1.bf16.msra.mxu0 %v5470
        %5492 = vmatprep.subr.bf16.mxu0 0
        %5493 = vmatpush1.bf16.msra.mxu0 %v5471
        %5494 = vmatprep.subr.bf16.mxu0 0
        %5495 = vmatpush1.bf16.msra.mxu0 %v5472
        %5496 = vmatprep.subr.bf16.mxu0 0
        %5497 = vmatpush1.bf16.msra.mxu0 %v5473
        %5498 = vmatprep.subr.bf16.mxu0 0
        %5499 = vmatpush1.bf16.msra.mxu0 0
        %5500 = vmatprep.subr.bf16.mxu0 0
        %5501 = vmatpush1.bf16.msra.mxu0 0
        %5502 = vmatprep.subr.bf16.mxu0 0
        %5503 = vmatpush1.bf16.msra.mxu0 0
        %5504 = vmatprep.subr.bf16.mxu0 0
        %5505 = vmatpush1.bf16.msra.mxu0 0
        %5506 = vmatprep.subr.bf16.mxu0 0
        %5507 = vmatpush1.bf16.msra.mxu0 0
        %5508 = vmatprep.subr.bf16.mxu0 0
        %5509 = vmatpush1.bf16.msra.mxu0 0
        %5510 = vmatprep.subr.bf16.mxu0 0
        %5511 = vmatpush1.bf16.msra.mxu0 0
        %5512 = vmatprep.subr.bf16.mxu0 0
        %5513 = vmatpush1.bf16.msra.mxu0 0
        %5514 = vmatprep.mubr.bf16.mxu0 0
        %5515 = vmatmul.mubr.bf16.gmra.mrb[0].mxu0 %v5426
        %v5516 = vpop.f32.mrb[0].mxu0
        %v5517 = vadd.f32 0.0, %v5516
        %v5518 = vpop.f32.mrb[0].mxu0
        %v5519 = vpop.f32.mrb[0].mxu0
        %v5520 = vadd.f32 0.0, %v5519
        %v5521 = vpop.f32.mrb[0].mxu0
        %5522 = vmatprep.mubr.bf16.mxu0 0
        %5523 = vmatmul.mubr.bf16.gmra.mrb[0].mxu0 %v5427
        %v5524 = vpop.f32.mrb[0].mxu0
        %v5525 = vadd.f32 0.0, %v5524
        %v5526 = vpop.f32.mrb[0].mxu0
        %v5527 = vpop.f32.mrb[0].mxu0
        %v5528 = vadd.f32 0.0, %v5527
        %v5529 = vpop.f32.mrb[0].mxu0
        %5530 = vmatprep.mubr.bf16.mxu0 0
        %5531 = vmatmul.mubr.bf16.gmra.mrb[0].mxu0 %v5428
        %v5532 = vpop.f32.mrb[0].mxu0
        %v5533 = vadd.f32 0.0, %v5532
        %v5534 = vpop.f32.mrb[0].mxu0
        %v5535 = vpop.f32.mrb[0].mxu0
        %v5536 = vadd.f32 0.0, %v5535
        %v5537 = vpop.f32.mrb[0].mxu0
        %5538 = vmatprep.mubr.bf16.mxu0 0
        %5539 = vmatmul.mubr.bf16.gmra.mrb[0].mxu0 %v5429
        %v5540 = vpop.f32.mrb[0].mxu0
        %v5541 = vadd.f32 0.0, %v5540
        %v5542 = vpop.f32.mrb[0].mxu0
        %v5543 = vpop.f32.mrb[0].mxu0
        %v5544 = vadd.f32 0.0, %v5543
        %v5545 = vpop.f32.mrb[0].mxu0
        %5546 = vdwg.mxu0
        %v5547 = vadd.f32 %v5337, %v5517
        %v5548 = vadd.f32 %v5338, %v5520
        %v5549 = vadd.f32 %v5339, %v5525
        %v5550 = vadd.f32 %v5340, %v5528
        %v5551 = vadd.f32 %v5341, %v5533
        %v5552 = vadd.f32 %v5342, %v5536
        %v5553 = vadd.f32 %v5343, %v5541
        %v5554 = vadd.f32 %v5344, %v5544
        %v5555 = vld [vmem:[%s7] sm:$0x1]
        %v5557 = vlaneseq
        %v5558 = vshrl.u32 %v5557, 7
        %v5559 = vsub.s32 0, %v5558
        %v5560 = vrot.slane %v5555, %v5559
        %v5562 = vmul.f32 %v5547, %v5560
        %v5563 = vmul.f32 %v5548, %v5560
        %v5564 = vmul.f32 %v5549, %v5560
        %v5565 = vmul.f32 %v5550, %v5560
        %v5566 = vmul.f32 %v5551, %v5560
        %v5567 = vmul.f32 %v5552, %v5560
        %v5568 = vmul.f32 %v5553, %v5560
        %v5569 = vmul.f32 %v5554, %v5560
        %v5570 = vld [vmem:[%s8] sm:$0x1]
        %v5572 = vlaneseq
        %v5573 = vshrl.u32 %v5572, 7
        %v5574 = vsub.s32 0, %v5573
        %v5575 = vrot.slane %v5570, %v5574
        %v5577 = vadd.f32 %v5562, %v5575
        %v5578 = vadd.f32 %v5563, %v5575
        %v5579 = vadd.f32 %v5564, %v5575
        %v5580 = vadd.f32 %v5565, %v5575
        %v5581 = vadd.f32 %v5566, %v5575
        %v5582 = vadd.f32 %v5567, %v5575
        %v5583 = vadd.f32 %v5568, %v5575
        %v5584 = vadd.f32 %v5569, %v5575
        %v5585 = vmax.f32 %v5577, 0.0
        %v5586 = vmax.f32 %v5578, 0.0
        %v5587 = vmax.f32 %v5579, 0.0
        %v5588 = vmax.f32 %v5580, 0.0
        %v5589 = vmax.f32 %v5581, 0.0
        %v5590 = vmax.f32 %v5582, 0.0
        %v5591 = vmax.f32 %v5583, 0.0
        %v5592 = vmax.f32 %v5584, 0.0
        %v5593 = vpack.c.bf16 %v5586, %v5585
        %v5594 = vpack.c.bf16 %v5588, %v5587
        %v5595 = vpack.c.bf16 %v5590, %v5589
        %v5596 = vpack.c.bf16 %v5592, %v5591
        %v5601 = vunpack.c.l.b16 %v5593
        %v5602 = vunpack.c.h.b16 %v5593
        %v5603 = vunpack.c.l.b16 %v5594
        %v5604 = vunpack.c.h.b16 %v5594
        %v5605 = vunpack.c.l.b16 %v5595
        %v5606 = vunpack.c.h.b16 %v5595
        %v5607 = vunpack.c.l.b16 %v5596
        %v5608 = vunpack.c.h.b16 %v5596
        %v5609 = vpack.c.b16 %v5601, %v5601
        %v5610 = vpack.c.b16 %v5602, %v5602
        %v5611 = vpack.c.b16 %v5603, %v5603
        %v5612 = vpack.c.b16 %v5604, %v5604
        %v5613 = vpack.c.b16 %v5605, %v5605
        %v5614 = vpack.c.b16 %v5606, %v5606
        %v5615 = vpack.c.b16 %v5607, %v5607
        %v5616 = vpack.c.b16 %v5608, %v5608
        %5625 = vst [vmem:[%s592] sm:$0xf] %v5609
        %5626 = vst [vmem:[%s592 + $0x4] sm:$0xf] %v5610
        %5627 = vst [vmem:[%s592 + $0x8] sm:$0xf] %v5611
        %5628 = vst [vmem:[%s592 + $0xc] sm:$0xf] %v5612
        %5629 = vst [vmem:[%s592 + $0x10] sm:$0xf] %v5613
        %5630 = vst [vmem:[%s592 + $0x14] sm:$0xf] %v5614
        %5631 = vst [vmem:[%s592 + $0x18] sm:$0xf] %v5615
        %5632 = vst [vmem:[%s592 + $0x1c] sm:$0xf] %v5616
        %s5633 = smul.u32 8, %s25
        %p5634 = scmp.lt.s32.totalorder %s24, 1
        %s5635 = scalar_select %p5634, %s24, 1
        %p5636 = scmp.lt.s32.totalorder %s5633, 7
        %s5637 = scalar_select %p5636, %s5633, 7
        %s5638 = smul.addr %s5635, 8
        %s5639 = sadd.s32 %s5637, %s5638
        %s5640 = smul.addr %s5639, 4
        %s5641 = scalar_lea.vmem %s9, %s5640
        // Predicated region
        $region143: #{down_forward.1} parent=129 // pred_check
          %p5642 = pneg %p278
        $region144: #{down_forward.1} parent=129 // pred_check_branch
          %5644 = sbr.rel (%p5642) target = $region146
        $region145: #{down_forward.1} parent=129 // pred_region
          %s5645 = smul.u32 8, %s25
        $region146: #{down_forward.1} parent=129 // pred_fallthru
          _
      $region130: #{down_forward.1} parent=5 // pred_fallthru
        _
      %p5646 = scmp.le.s32.totalorder 2, %s15
      // Predicated region
      $region147: #{down_forward.1} parent=5 // pred_check
        %p5647 = pneg %p5646
      $region148: #{down_forward.1} parent=5 // pred_check_branch
        %5649 = sbr.rel (%p5647) target = $region150
      $region149: #{down_forward.1} parent=5 // pred_region
        %s5650 = ssub.s32 %s15, 2
        // Predicated region
        $region151: #{down_forward.1} parent=149 // pred_check
          %p5651 = pneg %p284
        $region152: #{down_forward.1} parent=149 // pred_check_branch
          %5653 = sbr.rel (%p5651) target = $region154
        $region153: #{down_forward.1} parent=149 // pred_region
          %s5654 = smul.u32 8, %s27
          %p5655 = scmp.lt.s32.totalorder %s26, 1
          %s5656 = scalar_select %p5655, %s26, 1
          %p5657 = scmp.lt.s32.totalorder %s5654, 7
          %s5658 = scalar_select %p5657, %s5654, 7
          %s5659 = smul.addr %s5656, 8
          %s5660 = sadd.s32 %s5658, %s5659
          %s5661 = smul.addr %s5660, 4
          %s5662 = scalar_lea.vmem %s9, %s5661
        $region154: #{down_forward.1} parent=149 // pred_fallthru
          _
      $region150: #{down_forward.1} parent=5 // pred_fallthru
        _
    $region6: #{down_forward.1} parent=1 // loop_footer
      %s19 = sadd.s32 1, %s15
    $region7: #{down_forward.1} parent=1 // loop_footer_branch
      %14 = sbr.rel target = $region3
    $region8: #{down_forward.1} parent=1 // loop_exit
      _

</llo_original>
